<compile_context>
chip_gen: v7x
topology: tpu7x:2x2x1
jax: 0.10.0
libtpu: 0.0.40
codegen_flags: <defaults>
</compile_context>

<pallas_src>
import functools

import jax
import jax.numpy as jnp
from jax import lax
from jax.experimental import pallas as pl
from jax.experimental.pallas import tpu as pltpu

# ---- module constants (from bigram.py) ----
N_EMBD = 384          # n_embd
BLOCK_SIZE = 256      # max sequence length for the causal mask (T <= BLOCK_SIZE)
NUM_HEADS = 6
HEAD_SIZE = N_EMBD // NUM_HEADS   # 64


def mha_kernel(x_ref, wqkv_ref, wproj_ref, bias_ref, out_ref, *,
               num_heads, head_size, key_tile):
    """One batch-block (BB batch elements) per grid step.

    x_ref:     (BB, T, C)       bf16  input block
    wqkv_ref:  (C, 3*H*HS)      bf16  fused [Q*scale | K | V] weights (resident)
    wproj_ref: (H*HS, E)        bf16  fused output-projection weights (resident)
    bias_ref:  (1, E)           f32   output-projection bias (resident)
    out_ref:   (BB, T, E)       f32   output block
    """
    BB, T, C = x_ref.shape
    hhs = num_heads * head_size
    n_kt = T // key_tile

    # Fused QKV projection: one wide MXU matmul (M = BB*T, K = C, N = 3*H*HS).
    x = x_ref[...].reshape(BB * T, C)
    qkv = jnp.dot(x, wqkv_ref[...], preferred_element_type=jnp.float32)
    qkv = qkv.astype(jnp.bfloat16)   # cast once; q/k/v sliced from the bf16 array

    # Causal masks, one per key tile, shared by all (batch, head) pairs.
    masks = []
    for kt in range(n_kt):
        row = lax.broadcasted_iota(jnp.int32, (T, key_tile), 0)           # query idx
        col = kt * key_tile + lax.broadcasted_iota(jnp.int32, (T, key_tile), 1)  # key idx
        masks.append(col <= row)

    blocks = []
    for b in range(BB):                       # static unroll over batch block
        qkv_b = qkv[b * T:(b + 1) * T]
        head_outs = []
        for h in range(num_heads):            # static unroll over heads
            q = qkv_b[:, h * head_size:(h + 1) * head_size]                       # (T, HS), pre-scaled
            k = qkv_b[:, hhs + h * head_size: hhs + (h + 1) * head_size]          # (T, HS)
            v = qkv_b[:, 2 * hhs + h * head_size: 2 * hhs + (h + 1) * head_size]  # (T, HS)

            acc = jnp.zeros((T, head_size), jnp.float32)
            for kt in range(n_kt):            # key-axis tiling caps live score state
                k_t = k[kt * key_tile:(kt + 1) * key_tile]   # (KT, HS)
                v_t = v[kt * key_tile:(kt + 1) * key_tile]   # (KT, HS)

                # q @ k_t^T -> (T, KT) f32 accumulate (scale already folded into wq).
                scores = lax.dot_general(
                    q, k_t, dimension_numbers=(((1,), (1,)), ((), ())),
                    preferred_element_type=jnp.float32)

                # masked_fill(tril == 0, -inf); large finite constant gives
                # exp() == 0 identically while avoiding NaN risk.
                scores = jnp.where(masks[kt], scores, -1e30)

                # Faithful to the PyTorch quirk: F.softmax(wei, dim=1) == softmax
                # over the *query* axis (axis 0 here).  Each key column's softmax
                # is complete within the tile (full query extent), so tiles are
                # independent and simply summed into acc.  f32 math (v5e-safe).
                m = jnp.max(scores, axis=0, keepdims=True)
                e = jnp.exp(scores - m)
                denom = jnp.sum(e, axis=0, keepdims=True)
                p = (e * pl.reciprocal(denom, approx=True)).astype(jnp.bfloat16)
                # dropout(p) -> identity (eval mode)

                acc = acc + jnp.dot(p, v_t, preferred_element_type=jnp.float32)

            head_outs.append(acc.astype(jnp.bfloat16))
        # Lane-dense concat of head outputs -> (T, H*HS); no 64-lane masked stores.
        blocks.append(jnp.concatenate(head_outs, axis=1))

    heads = jnp.concatenate(blocks, axis=0) if BB > 1 else blocks[0]   # (BB*T, H*HS)

    # Fused output projection: one (BB*T, H*HS) @ (H*HS, E) MXU matmul + bias.
    out = jnp.dot(heads, wproj_ref[...], preferred_element_type=jnp.float32)
    out = out + bias_ref[...]
    out_ref[...] = out.reshape(BB, T, out_ref.shape[-1])
    # dropout(proj(out)) -> identity (eval mode)


def fuse_mha_params(wq, wk, wv, wp, bias):
    """One-time (init) weight fusion — NOT per forward call.

    wq/wk/wv: (H, C, HS) f32; wp: (H, HS, E) f32; bias: (1, E) f32.
    Returns bf16 fused (C, 3*H*HS) QKV weights with the attention scale folded
    into the Q third, bf16 (H*HS, E) projection weights, and the f32 bias.
    """
    H, C, HS = wq.shape
    E = wp.shape[-1]
    HHS = H * HS
    scale = float(HS) ** -0.5   # 1/8 for HS=64 -> exact power of 2
    wq2 = jnp.transpose(wq, (1, 0, 2)).reshape(C, HHS) * scale
    wk2 = jnp.transpose(wk, (1, 0, 2)).reshape(C, HHS)
    wv2 = jnp.transpose(wv, (1, 0, 2)).reshape(C, HHS)
    wqkv = jnp.concatenate([wq2, wk2, wv2], axis=1).astype(jnp.bfloat16)  # (C, 3*HHS)
    wproj = wp.reshape(HHS, E).astype(jnp.bfloat16)                       # (HHS, E)
    return wqkv, wproj, bias.astype(jnp.float32)


def multi_head_attention(x, wqkv, wproj, bias, *, num_heads=NUM_HEADS,
                         batch_block=None):
    """x: (B, T, C) f32/bf16; wqkv: (C, 3*H*HS) bf16; wproj: (H*HS, E) bf16."""
    B, T, C = x.shape
    HHS3 = wqkv.shape[1]
    HHS = HHS3 // 3
    HS = HHS // num_heads
    E = wproj.shape[1]

    # Batch blocking: fill the MXU M dim (target ~128 rows) but keep >= 4 grid
    # steps when B allows so each v7x TensorCore has >= 2 pipelined steps.
    if batch_block is None:
        bb_rows = max(1, 128 // T)
        bb_pipe = max(1, B // 4)
        batch_block = max(1, min(B, bb_rows, bb_pipe))
    while B % batch_block:
        batch_block -= 1
    grid_b = B // batch_block

    # Key-axis tile: 128 lanes when possible, else the full (small) T.
    key_tile = 128 if T % 128 == 0 else T

    kernel = functools.partial(mha_kernel, num_heads=num_heads,
                               head_size=HS, key_tile=key_tile)

    # x is only an MXU operand -> stream it as bf16 (halves input HBM bytes).
    x_bf = x.astype(jnp.bfloat16)

    return pl.pallas_call(
        kernel,
        out_shape=jax.ShapeDtypeStruct((B, T, E), jnp.float32),
        grid=(grid_b,),
        in_specs=[
            pl.BlockSpec((batch_block, T, C), lambda i: (i, 0, 0)),  # x block per step
            pl.BlockSpec((C, HHS3), lambda i: (0, 0)),               # fused QKV weights (resident)
            pl.BlockSpec((HHS, E), lambda i: (0, 0)),                # fused proj weights (resident)
            pl.BlockSpec((1, E), lambda i: (0, 0)),                  # proj bias (resident)
        ],
        out_specs=pl.BlockSpec((batch_block, T, E), lambda i: (i, 0, 0)),
        compiler_params=pltpu.CompilerParams(
            dimension_semantics=("parallel",),        # megacore split over batch blocks
            vmem_limit_bytes=32 * 1024 * 1024,        # headroom above v5e's 16 MiB default
        ),
    )(x_bf, wqkv, wproj, bias)


def mha_reference(x, wq, wk, wv, wp, bias):
    """Pure-JAX f32 reference mirroring the PyTorch forward (dropout = identity)."""
    q = jnp.einsum('btc,hcs->bhts', x, wq)
    k = jnp.einsum('btc,hcs->bhts', x, wk)
    v = jnp.einsum('btc,hcs->bhts', x, wv)
    wei = jnp.einsum('bhts,bhus->bhtu', q, k) * (HEAD_SIZE ** -0.5)
    T = x.shape[1]
    mask = jnp.tril(jnp.ones((T, T), dtype=bool))
    wei = jnp.where(mask[None, None], wei, -jnp.inf)
    wei = jax.nn.softmax(wei, axis=2)   # F.softmax(wei, dim=1) per head == query axis
    out_h = jnp.einsum('bhtu,bhus->bhts', wei, v)
    out = jnp.einsum('bhts,hse->bte', out_h, wp) + bias[0]
    return out


if __name__ == "__main__":
    B, T = 8, 16   # small sequence (T <= block_size = 256), C = n_embd = 384

    key = jax.random.PRNGKey(0)
    kx, kq, kk, kv, kp, kb = jax.random.split(key, 6)

    x = jax.random.normal(kx, (B, T, N_EMBD), dtype=jnp.float32)

    # per-head weights: (H, C, HS). PyTorch Linear stores (HS, C); kept
    # pre-transposed so the kernel does x @ W directly.
    wq = jax.random.normal(kq, (NUM_HEADS, N_EMBD, HEAD_SIZE), jnp.float32) * 0.02
    wk = jax.random.normal(kk, (NUM_HEADS, N_EMBD, HEAD_SIZE), jnp.float32) * 0.02
    wv = jax.random.normal(kv, (NUM_HEADS, N_EMBD, HEAD_SIZE), jnp.float32) * 0.02
    # output projection: torch Linear(H*HS, E) weight (E, H*HS); kept as
    # per-head slices (H, HS, E) so concat+matmul == sum over heads.
    wp = jax.random.normal(kp, (NUM_HEADS, HEAD_SIZE, N_EMBD), jnp.float32) * 0.02
    bias = jax.random.normal(kb, (1, N_EMBD), jnp.float32) * 0.02

    # One-time weight fusion (init-time, not per call).
    wqkv, wproj, bias_f = fuse_mha_params(wq, wk, wv, wp, bias)

    out = multi_head_attention(x, wqkv, wproj, bias_f)
    out = jax.block_until_ready(out)

    ref = mha_reference(x, wq, wk, wv, wp, bias)
    assert out.shape == (B, T, N_EMBD)
    # Tolerance relaxed vs pure f32: MXU operands are bf16 (f32 accumulation)
    # and the softmax denominator uses the approx EUP reciprocal.
    assert jnp.allclose(out, ref, atol=2e-2, rtol=2e-2), (
        f"max abs err {jnp.max(jnp.abs(out - ref))}")

    print("KERNEL_OK")
</pallas_src>

<mosaic_0001>
module attributes {stable_mosaic.version = 11 : i64} {
  func.func @mha_kernel(%arg0: i32, %arg1: memref<2x16x384xbf16, #tpu.memory_space<vmem>>, %arg2: memref<384x1152xbf16, #tpu.memory_space<vmem>>, %arg3: memref<384x384xbf16, #tpu.memory_space<vmem>>, %arg4: memref<1x384xf32, #tpu.memory_space<vmem>>, %arg5: memref<2x16x384xf32, #tpu.memory_space<vmem>>) attributes {dimension_semantics = [#tpu.dimension_semantics<parallel>], iteration_bounds = array<i64: 4>, scalar_prefetch = 0 : i64, scratch_operands = 0 : i64, tpu.core_type = #tpu.core_type<tc>, window_params = [{transform_indices = @transform_0, window_bounds = array<i64: 2, 16, 384>}, {pipeline_mode = #tpu.pipeline_mode<synchronous>, transform_indices = @transform_1, window_bounds = array<i64: 384, 1152>}, {pipeline_mode = #tpu.pipeline_mode<synchronous>, transform_indices = @transform_2, window_bounds = array<i64: 384, 384>}, {pipeline_mode = #tpu.pipeline_mode<synchronous>, transform_indices = @transform_3, window_bounds = array<i64: 1, 384>}, {transform_indices = @transform_4, window_bounds = array<i64: 2, 16, 384>}]} {
    %c0 = arith.constant 0 : index
    %c0_0 = arith.constant 0 : index
    %c0_1 = arith.constant 0 : index
    %0 = vector.load %arg1[%c0, %c0_0, %c0_1] : memref<2x16x384xbf16, #tpu.memory_space<vmem>>, vector<2x16x384xbf16>
    %1 = vector.shape_cast %0 : vector<2x16x384xbf16> to vector<32x384xbf16>
    %c0_2 = arith.constant 0 : index
    %c0_3 = arith.constant 0 : index
    %2 = vector.load %arg2[%c0_2, %c0_3] : memref<384x1152xbf16, #tpu.memory_space<vmem>>, vector<384x1152xbf16>
    %cst = arith.constant dense<0.000000e+00> : vector<32x1152xf32>
    %3 = tpu.matmul %1, %2, %cst {dimension_numbers = #tpu.dot_dimension_numbers<[1], [0], [0], [1], [0, 0, 1, 1], [], []>} : vector<32x384xbf16>, vector<384x1152xbf16>, vector<32x1152xf32> -> vector<32x1152xf32>
    %4 = arith.truncf %3 : vector<32x1152xf32> to vector<32x1152xbf16>
    %5 = tpu.iota {dimensions = array<i32: 0>} : vector<16x16xi32>
    %6 = tpu.iota {dimensions = array<i32: 1>} : vector<16x16xi32>
    %c0_i32 = arith.constant 0 : i32
    %7 = vector.broadcast %c0_i32 : i32 to vector<16x16xi32>
    %8 = arith.addi %7, %6 : vector<16x16xi32>
    %9 = arith.cmpi sle, %8, %5 : vector<16x16xi32>
    %10 = vector.extract_strided_slice %4 {offsets = [0, 0], sizes = [16, 1152], strides = [1, 1]} : vector<32x1152xbf16> to vector<16x1152xbf16>
    %11 = vector.extract_strided_slice %10 {offsets = [0, 0], sizes = [16, 64], strides = [1, 1]} : vector<16x1152xbf16> to vector<16x64xbf16>
    %12 = vector.extract_strided_slice %10 {offsets = [0, 384], sizes = [16, 64], strides = [1, 1]} : vector<16x1152xbf16> to vector<16x64xbf16>
    %13 = vector.extract_strided_slice %10 {offsets = [0, 768], sizes = [16, 64], strides = [1, 1]} : vector<16x1152xbf16> to vector<16x64xbf16>
    %cst_4 = arith.constant 0.000000e+00 : f32
    %14 = vector.broadcast %cst_4 : f32 to vector<16x64xf32>
    %cst_5 = arith.constant dense<0.000000e+00> : vector<16x16xf32>
    %15 = tpu.matmul %11, %12, %cst_5 {dimension_numbers = #tpu.dot_dimension_numbers<[1], [1], [0], [0], [0, 0, 1, 0], [], []>} : vector<16x64xbf16>, vector<16x64xbf16>, vector<16x16xf32> -> vector<16x16xf32>
    %cst_6 = arith.constant -1.000000e+30 : f32
    %16 = vector.broadcast %cst_6 : f32 to vector<16x16xf32>
    %17 = arith.select %9, %15, %16 : vector<16x16xi1>, vector<16x16xf32>
    %cst_7 = arith.constant dense<0xFF800000> : vector<16xf32>
    %18 = vector.multi_reduction <maximumf>, %17, %cst_7 [0] : vector<16x16xf32> to vector<16xf32>
    %19 = vector.shape_cast %18 : vector<16xf32> to vector<1x16xf32>
    %20 = vector.broadcast %19 : vector<1x16xf32> to vector<16x16xf32>
    %21 = arith.subf %17, %20 : vector<16x16xf32>
    %22 = math.exp %21 : vector<16x16xf32>
    %cst_8 = arith.constant dense<0.000000e+00> : vector<16xf32>
    %23 = vector.multi_reduction <add>, %22, %cst_8 [0] : vector<16x16xf32> to vector<16xf32>
    %24 = vector.shape_cast %23 : vector<16xf32> to vector<1x16xf32>
    %25 = tpu.reciprocal %24 {approx = true} : vector<1x16xf32> -> vector<1x16xf32>
    %26 = vector.broadcast %25 : vector<1x16xf32> to vector<16x16xf32>
    %27 = arith.mulf %22, %26 : vector<16x16xf32>
    %28 = arith.truncf %27 : vector<16x16xf32> to vector<16x16xbf16>
    %cst_9 = arith.constant dense<0.000000e+00> : vector<16x64xf32>
    %29 = tpu.matmul %28, %13, %cst_9 {dimension_numbers = #tpu.dot_dimension_numbers<[1], [0], [0], [1], [0, 0, 1, 1], [], []>} : vector<16x16xbf16>, vector<16x64xbf16>, vector<16x64xf32> -> vector<16x64xf32>
    %30 = arith.addf %14, %29 : vector<16x64xf32>
    %31 = arith.truncf %30 : vector<16x64xf32> to vector<16x64xbf16>
    %32 = vector.extract_strided_slice %10 {offsets = [0, 64], sizes = [16, 64], strides = [1, 1]} : vector<16x1152xbf16> to vector<16x64xbf16>
    %33 = vector.extract_strided_slice %10 {offsets = [0, 448], sizes = [16, 64], strides = [1, 1]} : vector<16x1152xbf16> to vector<16x64xbf16>
    %34 = vector.extract_strided_slice %10 {offsets = [0, 832], sizes = [16, 64], strides = [1, 1]} : vector<16x1152xbf16> to vector<16x64xbf16>
    %cst_10 = arith.constant 0.000000e+00 : f32
    %35 = vector.broadcast %cst_10 : f32 to vector<16x64xf32>
    %cst_11 = arith.constant dense<0.000000e+00> : vector<16x16xf32>
    %36 = tpu.matmul %32, %33, %cst_11 {dimension_numbers = #tpu.dot_dimension_numbers<[1], [1], [0], [0], [0, 0, 1, 0], [], []>} : vector<16x64xbf16>, vector<16x64xbf16>, vector<16x16xf32> -> vector<16x16xf32>
    %cst_12 = arith.constant -1.000000e+30 : f32
    %37 = vector.broadcast %cst_12 : f32 to vector<16x16xf32>
    %38 = arith.select %9, %36, %37 : vector<16x16xi1>, vector<16x16xf32>
    %cst_13 = arith.constant dense<0xFF800000> : vector<16xf32>
    %39 = vector.multi_reduction <maximumf>, %38, %cst_13 [0] : vector<16x16xf32> to vector<16xf32>
    %40 = vector.shape_cast %39 : vector<16xf32> to vector<1x16xf32>
    %41 = vector.broadcast %40 : vector<1x16xf32> to vector<16x16xf32>
    %42 = arith.subf %38, %41 : vector<16x16xf32>
    %43 = math.exp %42 : vector<16x16xf32>
    %cst_14 = arith.constant dense<0.000000e+00> : vector<16xf32>
    %44 = vector.multi_reduction <add>, %43, %cst_14 [0] : vector<16x16xf32> to vector<16xf32>
    %45 = vector.shape_cast %44 : vector<16xf32> to vector<1x16xf32>
    %46 = tpu.reciprocal %45 {approx = true} : vector<1x16xf32> -> vector<1x16xf32>
    %47 = vector.broadcast %46 : vector<1x16xf32> to vector<16x16xf32>
    %48 = arith.mulf %43, %47 : vector<16x16xf32>
    %49 = arith.truncf %48 : vector<16x16xf32> to vector<16x16xbf16>
    %cst_15 = arith.constant dense<0.000000e+00> : vector<16x64xf32>
    %50 = tpu.matmul %49, %34, %cst_15 {dimension_numbers = #tpu.dot_dimension_numbers<[1], [0], [0], [1], [0, 0, 1, 1], [], []>} : vector<16x16xbf16>, vector<16x64xbf16>, vector<16x64xf32> -> vector<16x64xf32>
    %51 = arith.addf %35, %50 : vector<16x64xf32>
    %52 = arith.truncf %51 : vector<16x64xf32> to vector<16x64xbf16>
    %53 = vector.extract_strided_slice %10 {offsets = [0, 128], sizes = [16, 64], strides = [1, 1]} : vector<16x1152xbf16> to vector<16x64xbf16>
    %54 = vector.extract_strided_slice %10 {offsets = [0, 512], sizes = [16, 64], strides = [1, 1]} : vector<16x1152xbf16> to vector<16x64xbf16>
    %55 = vector.extract_strided_slice %10 {offsets = [0, 896], sizes = [16, 64], strides = [1, 1]} : vector<16x1152xbf16> to vector<16x64xbf16>
    %cst_16 = arith.constant 0.000000e+00 : f32
    %56 = vector.broadcast %cst_16 : f32 to vector<16x64xf32>
    %cst_17 = arith.constant dense<0.000000e+00> : vector<16x16xf32>
    %57 = tpu.matmul %53, %54, %cst_17 {dimension_numbers = #tpu.dot_dimension_numbers<[1], [1], [0], [0], [0, 0, 1, 0], [], []>} : vector<16x64xbf16>, vector<16x64xbf16>, vector<16x16xf32> -> vector<16x16xf32>
    %cst_18 = arith.constant -1.000000e+30 : f32
    %58 = vector.broadcast %cst_18 : f32 to vector<16x16xf32>
    %59 = arith.select %9, %57, %58 : vector<16x16xi1>, vector<16x16xf32>
    %cst_19 = arith.constant dense<0xFF800000> : vector<16xf32>
    %60 = vector.multi_reduction <maximumf>, %59, %cst_19 [0] : vector<16x16xf32> to vector<16xf32>
    %61 = vector.shape_cast %60 : vector<16xf32> to vector<1x16xf32>
    %62 = vector.broadcast %61 : vector<1x16xf32> to vector<16x16xf32>
    %63 = arith.subf %59, %62 : vector<16x16xf32>
    %64 = math.exp %63 : vector<16x16xf32>
    %cst_20 = arith.constant dense<0.000000e+00> : vector<16xf32>
    %65 = vector.multi_reduction <add>, %64, %cst_20 [0] : vector<16x16xf32> to vector<16xf32>
    %66 = vector.shape_cast %65 : vector<16xf32> to vector<1x16xf32>
    %67 = tpu.reciprocal %66 {approx = true} : vector<1x16xf32> -> vector<1x16xf32>
    %68 = vector.broadcast %67 : vector<1x16xf32> to vector<16x16xf32>
    %69 = arith.mulf %64, %68 : vector<16x16xf32>
    %70 = arith.truncf %69 : vector<16x16xf32> to vector<16x16xbf16>
    %cst_21 = arith.constant dense<0.000000e+00> : vector<16x64xf32>
    %71 = tpu.matmul %70, %55, %cst_21 {dimension_numbers = #tpu.dot_dimension_numbers<[1], [0], [0], [1], [0, 0, 1, 1], [], []>} : vector<16x16xbf16>, vector<16x64xbf16>, vector<16x64xf32> -> vector<16x64xf32>
    %72 = arith.addf %56, %71 : vector<16x64xf32>
    %73 = arith.truncf %72 : vector<16x64xf32> to vector<16x64xbf16>
    %74 = vector.extract_strided_slice %10 {offsets = [0, 192], sizes = [16, 64], strides = [1, 1]} : vector<16x1152xbf16> to vector<16x64xbf16>
    %75 = vector.extract_strided_slice %10 {offsets = [0, 576], sizes = [16, 64], strides = [1, 1]} : vector<16x1152xbf16> to vector<16x64xbf16>
    %76 = vector.extract_strided_slice %10 {offsets = [0, 960], sizes = [16, 64], strides = [1, 1]} : vector<16x1152xbf16> to vector<16x64xbf16>
    %cst_22 = arith.constant 0.000000e+00 : f32
    %77 = vector.broadcast %cst_22 : f32 to vector<16x64xf32>
    %cst_23 = arith.constant dense<0.000000e+00> : vector<16x16xf32>
    %78 = tpu.matmul %74, %75, %cst_23 {dimension_numbers = #tpu.dot_dimension_numbers<[1], [1], [0], [0], [0, 0, 1, 0], [], []>} : vector<16x64xbf16>, vector<16x64xbf16>, vector<16x16xf32> -> vector<16x16xf32>
    %cst_24 = arith.constant -1.000000e+30 : f32
    %79 = vector.broadcast %cst_24 : f32 to vector<16x16xf32>
    %80 = arith.select %9, %78, %79 : vector<16x16xi1>, vector<16x16xf32>
    %cst_25 = arith.constant dense<0xFF800000> : vector<16xf32>
    %81 = vector.multi_reduction <maximumf>, %80, %cst_25 [0] : vector<16x16xf32> to vector<16xf32>
    %82 = vector.shape_cast %81 : vector<16xf32> to vector<1x16xf32>
    %83 = vector.broadcast %82 : vector<1x16xf32> to vector<16x16xf32>
    %84 = arith.subf %80, %83 : vector<16x16xf32>
    %85 = math.exp %84 : vector<16x16xf32>
    %cst_26 = arith.constant dense<0.000000e+00> : vector<16xf32>
    %86 = vector.multi_reduction <add>, %85, %cst_26 [0] : vector<16x16xf32> to vector<16xf32>
    %87 = vector.shape_cast %86 : vector<16xf32> to vector<1x16xf32>
    %88 = tpu.reciprocal %87 {approx = true} : vector<1x16xf32> -> vector<1x16xf32>
    %89 = vector.broadcast %88 : vector<1x16xf32> to vector<16x16xf32>
    %90 = arith.mulf %85, %89 : vector<16x16xf32>
    %91 = arith.truncf %90 : vector<16x16xf32> to vector<16x16xbf16>
    %cst_27 = arith.constant dense<0.000000e+00> : vector<16x64xf32>
    %92 = tpu.matmul %91, %76, %cst_27 {dimension_numbers = #tpu.dot_dimension_numbers<[1], [0], [0], [1], [0, 0, 1, 1], [], []>} : vector<16x16xbf16>, vector<16x64xbf16>, vector<16x64xf32> -> vector<16x64xf32>
    %93 = arith.addf %77, %92 : vector<16x64xf32>
    %94 = arith.truncf %93 : vector<16x64xf32> to vector<16x64xbf16>
    %95 = vector.extract_strided_slice %10 {offsets = [0, 256], sizes = [16, 64], strides = [1, 1]} : vector<16x1152xbf16> to vector<16x64xbf16>
    %96 = vector.extract_strided_slice %10 {offsets = [0, 640], sizes = [16, 64], strides = [1, 1]} : vector<16x1152xbf16> to vector<16x64xbf16>
    %97 = vector.extract_strided_slice %10 {offsets = [0, 1024], sizes = [16, 64], strides = [1, 1]} : vector<16x1152xbf16> to vector<16x64xbf16>
    %cst_28 = arith.constant 0.000000e+00 : f32
    %98 = vector.broadcast %cst_28 : f32 to vector<16x64xf32>
    %cst_29 = arith.constant dense<0.000000e+00> : vector<16x16xf32>
    %99 = tpu.matmul %95, %96, %cst_29 {dimension_numbers = #tpu.dot_dimension_numbers<[1], [1], [0], [0], [0, 0, 1, 0], [], []>} : vector<16x64xbf16>, vector<16x64xbf16>, vector<16x16xf32> -> vector<16x16xf32>
    %cst_30 = arith.constant -1.000000e+30 : f32
    %100 = vector.broadcast %cst_30 : f32 to vector<16x16xf32>
    %101 = arith.select %9, %99, %100 : vector<16x16xi1>, vector<16x16xf32>
    %cst_31 = arith.constant dense<0xFF800000> : vector<16xf32>
    %102 = vector.multi_reduction <maximumf>, %101, %cst_31 [0] : vector<16x16xf32> to vector<16xf32>
    %103 = vector.shape_cast %102 : vector<16xf32> to vector<1x16xf32>
    %104 = vector.broadcast %103 : vector<1x16xf32> to vector<16x16xf32>
    %105 = arith.subf %101, %104 : vector<16x16xf32>
    %106 = math.exp %105 : vector<16x16xf32>
    %cst_32 = arith.constant dense<0.000000e+00> : vector<16xf32>
    %107 = vector.multi_reduction <add>, %106, %cst_32 [0] : vector<16x16xf32> to vector<16xf32>
    %108 = vector.shape_cast %107 : vector<16xf32> to vector<1x16xf32>
    %109 = tpu.reciprocal %108 {approx = true} : vector<1x16xf32> -> vector<1x16xf32>
    %110 = vector.broadcast %109 : vector<1x16xf32> to vector<16x16xf32>
    %111 = arith.mulf %106, %110 : vector<16x16xf32>
    %112 = arith.truncf %111 : vector<16x16xf32> to vector<16x16xbf16>
    %cst_33 = arith.constant dense<0.000000e+00> : vector<16x64xf32>
    %113 = tpu.matmul %112, %97, %cst_33 {dimension_numbers = #tpu.dot_dimension_numbers<[1], [0], [0], [1], [0, 0, 1, 1], [], []>} : vector<16x16xbf16>, vector<16x64xbf16>, vector<16x64xf32> -> vector<16x64xf32>
    %114 = arith.addf %98, %113 : vector<16x64xf32>
    %115 = arith.truncf %114 : vector<16x64xf32> to vector<16x64xbf16>
    %116 = vector.extract_strided_slice %10 {offsets = [0, 320], sizes = [16, 64], strides = [1, 1]} : vector<16x1152xbf16> to vector<16x64xbf16>
    %117 = vector.extract_strided_slice %10 {offsets = [0, 704], sizes = [16, 64], strides = [1, 1]} : vector<16x1152xbf16> to vector<16x64xbf16>
    %118 = vector.extract_strided_slice %10 {offsets = [0, 1088], sizes = [16, 64], strides = [1, 1]} : vector<16x1152xbf16> to vector<16x64xbf16>
    %cst_34 = arith.constant 0.000000e+00 : f32
    %119 = vector.broadcast %cst_34 : f32 to vector<16x64xf32>
    %cst_35 = arith.constant dense<0.000000e+00> : vector<16x16xf32>
    %120 = tpu.matmul %116, %117, %cst_35 {dimension_numbers = #tpu.dot_dimension_numbers<[1], [1], [0], [0], [0, 0, 1, 0], [], []>} : vector<16x64xbf16>, vector<16x64xbf16>, vector<16x16xf32> -> vector<16x16xf32>
    %cst_36 = arith.constant -1.000000e+30 : f32
    %121 = vector.broadcast %cst_36 : f32 to vector<16x16xf32>
    %122 = arith.select %9, %120, %121 : vector<16x16xi1>, vector<16x16xf32>
    %cst_37 = arith.constant dense<0xFF800000> : vector<16xf32>
    %123 = vector.multi_reduction <maximumf>, %122, %cst_37 [0] : vector<16x16xf32> to vector<16xf32>
    %124 = vector.shape_cast %123 : vector<16xf32> to vector<1x16xf32>
    %125 = vector.broadcast %124 : vector<1x16xf32> to vector<16x16xf32>
    %126 = arith.subf %122, %125 : vector<16x16xf32>
    %127 = math.exp %126 : vector<16x16xf32>
    %cst_38 = arith.constant dense<0.000000e+00> : vector<16xf32>
    %128 = vector.multi_reduction <add>, %127, %cst_38 [0] : vector<16x16xf32> to vector<16xf32>
    %129 = vector.shape_cast %128 : vector<16xf32> to vector<1x16xf32>
    %130 = tpu.reciprocal %129 {approx = true} : vector<1x16xf32> -> vector<1x16xf32>
    %131 = vector.broadcast %130 : vector<1x16xf32> to vector<16x16xf32>
    %132 = arith.mulf %127, %131 : vector<16x16xf32>
    %133 = arith.truncf %132 : vector<16x16xf32> to vector<16x16xbf16>
    %cst_39 = arith.constant dense<0.000000e+00> : vector<16x64xf32>
    %134 = tpu.matmul %133, %118, %cst_39 {dimension_numbers = #tpu.dot_dimension_numbers<[1], [0], [0], [1], [0, 0, 1, 1], [], []>} : vector<16x16xbf16>, vector<16x64xbf16>, vector<16x64xf32> -> vector<16x64xf32>
    %135 = arith.addf %119, %134 : vector<16x64xf32>
    %136 = arith.truncf %135 : vector<16x64xf32> to vector<16x64xbf16>
    %137 = tpu.concatenate %31, %52, %73, %94, %115, %136 in 1 : vector<16x64xbf16>, vector<16x64xbf16>, vector<16x64xbf16>, vector<16x64xbf16>, vector<16x64xbf16>, vector<16x64xbf16> -> vector<16x384xbf16>
    %138 = vector.extract_strided_slice %4 {offsets = [16, 0], sizes = [16, 1152], strides = [1, 1]} : vector<32x1152xbf16> to vector<16x1152xbf16>
    %139 = vector.extract_strided_slice %138 {offsets = [0, 0], sizes = [16, 64], strides = [1, 1]} : vector<16x1152xbf16> to vector<16x64xbf16>
    %140 = vector.extract_strided_slice %138 {offsets = [0, 384], sizes = [16, 64], strides = [1, 1]} : vector<16x1152xbf16> to vector<16x64xbf16>
    %141 = vector.extract_strided_slice %138 {offsets = [0, 768], sizes = [16, 64], strides = [1, 1]} : vector<16x1152xbf16> to vector<16x64xbf16>
    %cst_40 = arith.constant 0.000000e+00 : f32
    %142 = vector.broadcast %cst_40 : f32 to vector<16x64xf32>
    %cst_41 = arith.constant dense<0.000000e+00> : vector<16x16xf32>
    %143 = tpu.matmul %139, %140, %cst_41 {dimension_numbers = #tpu.dot_dimension_numbers<[1], [1], [0], [0], [0, 0, 1, 0], [], []>} : vector<16x64xbf16>, vector<16x64xbf16>, vector<16x16xf32> -> vector<16x16xf32>
    %cst_42 = arith.constant -1.000000e+30 : f32
    %144 = vector.broadcast %cst_42 : f32 to vector<16x16xf32>
    %145 = arith.select %9, %143, %144 : vector<16x16xi1>, vector<16x16xf32>
    %cst_43 = arith.constant dense<0xFF800000> : vector<16xf32>
    %146 = vector.multi_reduction <maximumf>, %145, %cst_43 [0] : vector<16x16xf32> to vector<16xf32>
    %147 = vector.shape_cast %146 : vector<16xf32> to vector<1x16xf32>
    %148 = vector.broadcast %147 : vector<1x16xf32> to vector<16x16xf32>
    %149 = arith.subf %145, %148 : vector<16x16xf32>
    %150 = math.exp %149 : vector<16x16xf32>
    %cst_44 = arith.constant dense<0.000000e+00> : vector<16xf32>
    %151 = vector.multi_reduction <add>, %150, %cst_44 [0] : vector<16x16xf32> to vector<16xf32>
    %152 = vector.shape_cast %151 : vector<16xf32> to vector<1x16xf32>
    %153 = tpu.reciprocal %152 {approx = true} : vector<1x16xf32> -> vector<1x16xf32>
    %154 = vector.broadcast %153 : vector<1x16xf32> to vector<16x16xf32>
    %155 = arith.mulf %150, %154 : vector<16x16xf32>
    %156 = arith.truncf %155 : vector<16x16xf32> to vector<16x16xbf16>
    %cst_45 = arith.constant dense<0.000000e+00> : vector<16x64xf32>
    %157 = tpu.matmul %156, %141, %cst_45 {dimension_numbers = #tpu.dot_dimension_numbers<[1], [0], [0], [1], [0, 0, 1, 1], [], []>} : vector<16x16xbf16>, vector<16x64xbf16>, vector<16x64xf32> -> vector<16x64xf32>
    %158 = arith.addf %142, %157 : vector<16x64xf32>
    %159 = arith.truncf %158 : vector<16x64xf32> to vector<16x64xbf16>
    %160 = vector.extract_strided_slice %138 {offsets = [0, 64], sizes = [16, 64], strides = [1, 1]} : vector<16x1152xbf16> to vector<16x64xbf16>
    %161 = vector.extract_strided_slice %138 {offsets = [0, 448], sizes = [16, 64], strides = [1, 1]} : vector<16x1152xbf16> to vector<16x64xbf16>
    %162 = vector.extract_strided_slice %138 {offsets = [0, 832], sizes = [16, 64], strides = [1, 1]} : vector<16x1152xbf16> to vector<16x64xbf16>
    %cst_46 = arith.constant 0.000000e+00 : f32
    %163 = vector.broadcast %cst_46 : f32 to vector<16x64xf32>
    %cst_47 = arith.constant dense<0.000000e+00> : vector<16x16xf32>
    %164 = tpu.matmul %160, %161, %cst_47 {dimension_numbers = #tpu.dot_dimension_numbers<[1], [1], [0], [0], [0, 0, 1, 0], [], []>} : vector<16x64xbf16>, vector<16x64xbf16>, vector<16x16xf32> -> vector<16x16xf32>
    %cst_48 = arith.constant -1.000000e+30 : f32
    %165 = vector.broadcast %cst_48 : f32 to vector<16x16xf32>
    %166 = arith.select %9, %164, %165 : vector<16x16xi1>, vector<16x16xf32>
    %cst_49 = arith.constant dense<0xFF800000> : vector<16xf32>
    %167 = vector.multi_reduction <maximumf>, %166, %cst_49 [0] : vector<16x16xf32> to vector<16xf32>
    %168 = vector.shape_cast %167 : vector<16xf32> to vector<1x16xf32>
    %169 = vector.broadcast %168 : vector<1x16xf32> to vector<16x16xf32>
    %170 = arith.subf %166, %169 : vector<16x16xf32>
    %171 = math.exp %170 : vector<16x16xf32>
    %cst_50 = arith.constant dense<0.000000e+00> : vector<16xf32>
    %172 = vector.multi_reduction <add>, %171, %cst_50 [0] : vector<16x16xf32> to vector<16xf32>
    %173 = vector.shape_cast %172 : vector<16xf32> to vector<1x16xf32>
    %174 = tpu.reciprocal %173 {approx = true} : vector<1x16xf32> -> vector<1x16xf32>
    %175 = vector.broadcast %174 : vector<1x16xf32> to vector<16x16xf32>
    %176 = arith.mulf %171, %175 : vector<16x16xf32>
    %177 = arith.truncf %176 : vector<16x16xf32> to vector<16x16xbf16>
    %cst_51 = arith.constant dense<0.000000e+00> : vector<16x64xf32>
    %178 = tpu.matmul %177, %162, %cst_51 {dimension_numbers = #tpu.dot_dimension_numbers<[1], [0], [0], [1], [0, 0, 1, 1], [], []>} : vector<16x16xbf16>, vector<16x64xbf16>, vector<16x64xf32> -> vector<16x64xf32>
    %179 = arith.addf %163, %178 : vector<16x64xf32>
    %180 = arith.truncf %179 : vector<16x64xf32> to vector<16x64xbf16>
    %181 = vector.extract_strided_slice %138 {offsets = [0, 128], sizes = [16, 64], strides = [1, 1]} : vector<16x1152xbf16> to vector<16x64xbf16>
    %182 = vector.extract_strided_slice %138 {offsets = [0, 512], sizes = [16, 64], strides = [1, 1]} : vector<16x1152xbf16> to vector<16x64xbf16>
    %183 = vector.extract_strided_slice %138 {offsets = [0, 896], sizes = [16, 64], strides = [1, 1]} : vector<16x1152xbf16> to vector<16x64xbf16>
    %cst_52 = arith.constant 0.000000e+00 : f32
    %184 = vector.broadcast %cst_52 : f32 to vector<16x64xf32>
    %cst_53 = arith.constant dense<0.000000e+00> : vector<16x16xf32>
    %185 = tpu.matmul %181, %182, %cst_53 {dimension_numbers = #tpu.dot_dimension_numbers<[1], [1], [0], [0], [0, 0, 1, 0], [], []>} : vector<16x64xbf16>, vector<16x64xbf16>, vector<16x16xf32> -> vector<16x16xf32>
    %cst_54 = arith.constant -1.000000e+30 : f32
    %186 = vector.broadcast %cst_54 : f32 to vector<16x16xf32>
    %187 = arith.select %9, %185, %186 : vector<16x16xi1>, vector<16x16xf32>
    %cst_55 = arith.constant dense<0xFF800000> : vector<16xf32>
    %188 = vector.multi_reduction <maximumf>, %187, %cst_55 [0] : vector<16x16xf32> to vector<16xf32>
    %189 = vector.shape_cast %188 : vector<16xf32> to vector<1x16xf32>
    %190 = vector.broadcast %189 : vector<1x16xf32> to vector<16x16xf32>
    %191 = arith.subf %187, %190 : vector<16x16xf32>
    %192 = math.exp %191 : vector<16x16xf32>
    %cst_56 = arith.constant dense<0.000000e+00> : vector<16xf32>
    %193 = vector.multi_reduction <add>, %192, %cst_56 [0] : vector<16x16xf32> to vector<16xf32>
    %194 = vector.shape_cast %193 : vector<16xf32> to vector<1x16xf32>
    %195 = tpu.reciprocal %194 {approx = true} : vector<1x16xf32> -> vector<1x16xf32>
    %196 = vector.broadcast %195 : vector<1x16xf32> to vector<16x16xf32>
    %197 = arith.mulf %192, %196 : vector<16x16xf32>
    %198 = arith.truncf %197 : vector<16x16xf32> to vector<16x16xbf16>
    %cst_57 = arith.constant dense<0.000000e+00> : vector<16x64xf32>
    %199 = tpu.matmul %198, %183, %cst_57 {dimension_numbers = #tpu.dot_dimension_numbers<[1], [0], [0], [1], [0, 0, 1, 1], [], []>} : vector<16x16xbf16>, vector<16x64xbf16>, vector<16x64xf32> -> vector<16x64xf32>
    %200 = arith.addf %184, %199 : vector<16x64xf32>
    %201 = arith.truncf %200 : vector<16x64xf32> to vector<16x64xbf16>
    %202 = vector.extract_strided_slice %138 {offsets = [0, 192], sizes = [16, 64], strides = [1, 1]} : vector<16x1152xbf16> to vector<16x64xbf16>
    %203 = vector.extract_strided_slice %138 {offsets = [0, 576], sizes = [16, 64], strides = [1, 1]} : vector<16x1152xbf16> to vector<16x64xbf16>
    %204 = vector.extract_strided_slice %138 {offsets = [0, 960], sizes = [16, 64], strides = [1, 1]} : vector<16x1152xbf16> to vector<16x64xbf16>
    %cst_58 = arith.constant 0.000000e+00 : f32
    %205 = vector.broadcast %cst_58 : f32 to vector<16x64xf32>
    %cst_59 = arith.constant dense<0.000000e+00> : vector<16x16xf32>
    %206 = tpu.matmul %202, %203, %cst_59 {dimension_numbers = #tpu.dot_dimension_numbers<[1], [1], [0], [0], [0, 0, 1, 0], [], []>} : vector<16x64xbf16>, vector<16x64xbf16>, vector<16x16xf32> -> vector<16x16xf32>
    %cst_60 = arith.constant -1.000000e+30 : f32
    %207 = vector.broadcast %cst_60 : f32 to vector<16x16xf32>
    %208 = arith.select %9, %206, %207 : vector<16x16xi1>, vector<16x16xf32>
    %cst_61 = arith.constant dense<0xFF800000> : vector<16xf32>
    %209 = vector.multi_reduction <maximumf>, %208, %cst_61 [0] : vector<16x16xf32> to vector<16xf32>
    %210 = vector.shape_cast %209 : vector<16xf32> to vector<1x16xf32>
    %211 = vector.broadcast %210 : vector<1x16xf32> to vector<16x16xf32>
    %212 = arith.subf %208, %211 : vector<16x16xf32>
    %213 = math.exp %212 : vector<16x16xf32>
    %cst_62 = arith.constant dense<0.000000e+00> : vector<16xf32>
    %214 = vector.multi_reduction <add>, %213, %cst_62 [0] : vector<16x16xf32> to vector<16xf32>
    %215 = vector.shape_cast %214 : vector<16xf32> to vector<1x16xf32>
    %216 = tpu.reciprocal %215 {approx = true} : vector<1x16xf32> -> vector<1x16xf32>
    %217 = vector.broadcast %216 : vector<1x16xf32> to vector<16x16xf32>
    %218 = arith.mulf %213, %217 : vector<16x16xf32>
    %219 = arith.truncf %218 : vector<16x16xf32> to vector<16x16xbf16>
    %cst_63 = arith.constant dense<0.000000e+00> : vector<16x64xf32>
    %220 = tpu.matmul %219, %204, %cst_63 {dimension_numbers = #tpu.dot_dimension_numbers<[1], [0], [0], [1], [0, 0, 1, 1], [], []>} : vector<16x16xbf16>, vector<16x64xbf16>, vector<16x64xf32> -> vector<16x64xf32>
    %221 = arith.addf %205, %220 : vector<16x64xf32>
    %222 = arith.truncf %221 : vector<16x64xf32> to vector<16x64xbf16>
    %223 = vector.extract_strided_slice %138 {offsets = [0, 256], sizes = [16, 64], strides = [1, 1]} : vector<16x1152xbf16> to vector<16x64xbf16>
    %224 = vector.extract_strided_slice %138 {offsets = [0, 640], sizes = [16, 64], strides = [1, 1]} : vector<16x1152xbf16> to vector<16x64xbf16>
    %225 = vector.extract_strided_slice %138 {offsets = [0, 1024], sizes = [16, 64], strides = [1, 1]} : vector<16x1152xbf16> to vector<16x64xbf16>
    %cst_64 = arith.constant 0.000000e+00 : f32
    %226 = vector.broadcast %cst_64 : f32 to vector<16x64xf32>
    %cst_65 = arith.constant dense<0.000000e+00> : vector<16x16xf32>
    %227 = tpu.matmul %223, %224, %cst_65 {dimension_numbers = #tpu.dot_dimension_numbers<[1], [1], [0], [0], [0, 0, 1, 0], [], []>} : vector<16x64xbf16>, vector<16x64xbf16>, vector<16x16xf32> -> vector<16x16xf32>
    %cst_66 = arith.constant -1.000000e+30 : f32
    %228 = vector.broadcast %cst_66 : f32 to vector<16x16xf32>
    %229 = arith.select %9, %227, %228 : vector<16x16xi1>, vector<16x16xf32>
    %cst_67 = arith.constant dense<0xFF800000> : vector<16xf32>
    %230 = vector.multi_reduction <maximumf>, %229, %cst_67 [0] : vector<16x16xf32> to vector<16xf32>
    %231 = vector.shape_cast %230 : vector<16xf32> to vector<1x16xf32>
    %232 = vector.broadcast %231 : vector<1x16xf32> to vector<16x16xf32>
    %233 = arith.subf %229, %232 : vector<16x16xf32>
    %234 = math.exp %233 : vector<16x16xf32>
    %cst_68 = arith.constant dense<0.000000e+00> : vector<16xf32>
    %235 = vector.multi_reduction <add>, %234, %cst_68 [0] : vector<16x16xf32> to vector<16xf32>
    %236 = vector.shape_cast %235 : vector<16xf32> to vector<1x16xf32>
    %237 = tpu.reciprocal %236 {approx = true} : vector<1x16xf32> -> vector<1x16xf32>
    %238 = vector.broadcast %237 : vector<1x16xf32> to vector<16x16xf32>
    %239 = arith.mulf %234, %238 : vector<16x16xf32>
    %240 = arith.truncf %239 : vector<16x16xf32> to vector<16x16xbf16>
    %cst_69 = arith.constant dense<0.000000e+00> : vector<16x64xf32>
    %241 = tpu.matmul %240, %225, %cst_69 {dimension_numbers = #tpu.dot_dimension_numbers<[1], [0], [0], [1], [0, 0, 1, 1], [], []>} : vector<16x16xbf16>, vector<16x64xbf16>, vector<16x64xf32> -> vector<16x64xf32>
    %242 = arith.addf %226, %241 : vector<16x64xf32>
    %243 = arith.truncf %242 : vector<16x64xf32> to vector<16x64xbf16>
    %244 = vector.extract_strided_slice %138 {offsets = [0, 320], sizes = [16, 64], strides = [1, 1]} : vector<16x1152xbf16> to vector<16x64xbf16>
    %245 = vector.extract_strided_slice %138 {offsets = [0, 704], sizes = [16, 64], strides = [1, 1]} : vector<16x1152xbf16> to vector<16x64xbf16>
    %246 = vector.extract_strided_slice %138 {offsets = [0, 1088], sizes = [16, 64], strides = [1, 1]} : vector<16x1152xbf16> to vector<16x64xbf16>
    %cst_70 = arith.constant 0.000000e+00 : f32
    %247 = vector.broadcast %cst_70 : f32 to vector<16x64xf32>
    %cst_71 = arith.constant dense<0.000000e+00> : vector<16x16xf32>
    %248 = tpu.matmul %244, %245, %cst_71 {dimension_numbers = #tpu.dot_dimension_numbers<[1], [1], [0], [0], [0, 0, 1, 0], [], []>} : vector<16x64xbf16>, vector<16x64xbf16>, vector<16x16xf32> -> vector<16x16xf32>
    %cst_72 = arith.constant -1.000000e+30 : f32
    %249 = vector.broadcast %cst_72 : f32 to vector<16x16xf32>
    %250 = arith.select %9, %248, %249 : vector<16x16xi1>, vector<16x16xf32>
    %cst_73 = arith.constant dense<0xFF800000> : vector<16xf32>
    %251 = vector.multi_reduction <maximumf>, %250, %cst_73 [0] : vector<16x16xf32> to vector<16xf32>
    %252 = vector.shape_cast %251 : vector<16xf32> to vector<1x16xf32>
    %253 = vector.broadcast %252 : vector<1x16xf32> to vector<16x16xf32>
    %254 = arith.subf %250, %253 : vector<16x16xf32>
    %255 = math.exp %254 : vector<16x16xf32>
    %cst_74 = arith.constant dense<0.000000e+00> : vector<16xf32>
    %256 = vector.multi_reduction <add>, %255, %cst_74 [0] : vector<16x16xf32> to vector<16xf32>
    %257 = vector.shape_cast %256 : vector<16xf32> to vector<1x16xf32>
    %258 = tpu.reciprocal %257 {approx = true} : vector<1x16xf32> -> vector<1x16xf32>
    %259 = vector.broadcast %258 : vector<1x16xf32> to vector<16x16xf32>
    %260 = arith.mulf %255, %259 : vector<16x16xf32>
    %261 = arith.truncf %260 : vector<16x16xf32> to vector<16x16xbf16>
    %cst_75 = arith.constant dense<0.000000e+00> : vector<16x64xf32>
    %262 = tpu.matmul %261, %246, %cst_75 {dimension_numbers = #tpu.dot_dimension_numbers<[1], [0], [0], [1], [0, 0, 1, 1], [], []>} : vector<16x16xbf16>, vector<16x64xbf16>, vector<16x64xf32> -> vector<16x64xf32>
    %263 = arith.addf %247, %262 : vector<16x64xf32>
    %264 = arith.truncf %263 : vector<16x64xf32> to vector<16x64xbf16>
    %265 = tpu.concatenate %159, %180, %201, %222, %243, %264 in 1 : vector<16x64xbf16>, vector<16x64xbf16>, vector<16x64xbf16>, vector<16x64xbf16>, vector<16x64xbf16>, vector<16x64xbf16> -> vector<16x384xbf16>
    %266 = tpu.concatenate %137, %265 in 0 : vector<16x384xbf16>, vector<16x384xbf16> -> vector<32x384xbf16>
    %c0_76 = arith.constant 0 : index
    %c0_77 = arith.constant 0 : index
    %267 = vector.load %arg3[%c0_76, %c0_77] : memref<384x384xbf16, #tpu.memory_space<vmem>>, vector<384x384xbf16>
    %cst_78 = arith.constant dense<0.000000e+00> : vector<32x384xf32>
    %268 = tpu.matmul %266, %267, %cst_78 {dimension_numbers = #tpu.dot_dimension_numbers<[1], [0], [0], [1], [0, 0, 1, 1], [], []>} : vector<32x384xbf16>, vector<384x384xbf16>, vector<32x384xf32> -> vector<32x384xf32>
    %c0_79 = arith.constant 0 : index
    %c0_80 = arith.constant 0 : index
    %269 = vector.load %arg4[%c0_79, %c0_80] : memref<1x384xf32, #tpu.memory_space<vmem>>, vector<1x384xf32>
    %270 = vector.broadcast %269 : vector<1x384xf32> to vector<32x384xf32>
    %271 = arith.addf %268, %270 : vector<32x384xf32>
    %272 = vector.shape_cast %271 : vector<32x384xf32> to vector<2x16x384xf32>
    %c0_81 = arith.constant 0 : index
    %c0_82 = arith.constant 0 : index
    %c0_83 = arith.constant 0 : index
    %273 = vector.load %arg5[%c0_81, %c0_82, %c0_83] : memref<2x16x384xf32, #tpu.memory_space<vmem>>, vector<2x16x384xf32>
    tpu.vector_store %arg5[%c0_81, %c0_82, %c0_83], %272 {strides = array<i32>} : memref<2x16x384xf32, #tpu.memory_space<vmem>>, vector<2x16x384xf32>,
    return
  }
  func.func @transform_0(%arg0: i32) -> (i32, i32, i32) {
    %c0_i32 = arith.constant 0 : i32
    %c0_i32_0 = arith.constant 0 : i32
    %c0_i32_1 = arith.constant 0 : i32
    return %arg0, %c0_i32, %c0_i32_0 : i32, i32, i32
  }
  func.func @transform_1(%arg0: i32) -> (i32, i32) {
    %c0_i32 = arith.constant 0 : i32
    %c0_i32_0 = arith.constant 0 : i32
    %c0_i32_1 = arith.constant 0 : i32
    return %c0_i32, %c0_i32_0 : i32, i32
  }
  func.func @transform_2(%arg0: i32) -> (i32, i32) {
    %c0_i32 = arith.constant 0 : i32
    %c0_i32_0 = arith.constant 0 : i32
    %c0_i32_1 = arith.constant 0 : i32
    return %c0_i32, %c0_i32_0 : i32, i32
  }
  func.func @transform_3(%arg0: i32) -> (i32, i32) {
    %c0_i32 = arith.constant 0 : i32
    %c0_i32_0 = arith.constant 0 : i32
    %c0_i32_1 = arith.constant 0 : i32
    return %c0_i32, %c0_i32_0 : i32, i32
  }
  func.func @transform_4(%arg0: i32) -> (i32, i32, i32) {
    %c0_i32 = arith.constant 0 : i32
    %c0_i32_0 = arith.constant 0 : i32
    %c0_i32_1 = arith.constant 0 : i32
    return %arg0, %c0_i32, %c0_i32_0 : i32, i32, i32
  }
}

</mosaic_0001>

<llo_original>
// kernel: tpu_custom_call.1
$region0: #{tpu_custom_call.1}
  #allocation0 [shape = 'u32[]', space=smem, size = 0x4, offset = 0x4, fixed_abs, tag = 'smem constant byte address 0x4 - core index']
  #allocation1 [shape = 'u32[144,128]{1,0:T(1,128)}', space=vmem, size = 0x12000, scoped, tag = 'internal scratch']
  %s0 = inlined_call_operand.hbm [shape: bf16[8,16,384], index: 0, kind: input, shape index: {}]
  %s1 = inlined_call_operand.hbm [shape: bf16[384,1152], index: 1, kind: input, shape index: {}]
  %s2 = inlined_call_operand.hbm [shape: bf16[384,384], index: 2, kind: input, shape index: {}]
  %s3 = inlined_call_operand.vmem [shape: f32[1,384], index: 3, kind: input, shape index: {}]
  %s4 = inlined_call_operand.hbm [shape: f32[8,16,384], index: 4, kind: output, shape index: {}]
  %s5 = sld [smem:[#allocation0]]
  $region61: #{tpu_custom_call.1} parent=0
    _
  %s7 = ssub.s32 1, %s5
  %s8 = scalar_select 0, %s7, %s5
  $region1: #{tpu_custom_call.1} parent=0
    #allocation2 [shape = 'u8[49152]{0}', space=vmem, size = 0xc000, scoped, tag = 'input window, operand 0']
    #allocation3 [shape = 's32[2]{0}', space=sflag, size = 0x8, scoped, tag = 'scoped memory for tpu_custom_call.1']
    #allocation4 [shape = 's32[2]{0}', space=sflag, size = 0x8, scoped, tag = 'scoped memory for tpu_custom_call.1']
    #allocation5 [shape = 'u8[884736]{0}', space=vmem, size = 0xd8000, scoped, tag = 'input window, operand 1, single buffered']
    #allocation6 [shape = 's32[1]{0}', space=sflag, size = 0x4, scoped, tag = 'scoped memory for tpu_custom_call.1']
    #allocation7 [shape = 'u8[294912]{0}', space=vmem, size = 0x48000, scoped, tag = 'input window, operand 2, single buffered']
    #allocation8 [shape = 'u8[98304]{0}', space=vmem, size = 0x18000, scoped, tag = 'output window, operand 0']
    %9 = vsyncpa [#allocation3], 0
    %s10 = scalar_lea.sflag [#allocation3], 1
    %11 = vsyncpa %s10, 0
    %12 = vsyncpa [#allocation6], 0
    %13 = vsyncpa [#allocation4], 0
    %s14 = scalar_lea.sflag [#allocation4], 1
    %15 = vsyncpa %s14, 0
    loop: start=0, step=1, limit=6
    $region2: #{tpu_custom_call.1} parent=1 // loop_pre_header
      _
    $region3: #{tpu_custom_call.1} parent=1 // loop_header
      %s17 = sphi 0, %s21
      %p18 = scmp.ge.s32.totalorder %s17, 6
      %s27 = sphi 0, %s29
      %s30 = sphi 0, %s27
      %s31 = sphi 0, %s30
      %s47 = sphi 0, %s31
      %s51 = sphi 0, %s51
      %s53 = sphi 0, %s51
      %s54 = sphi 0, %s53
      %s68 = sphi 0, %s54
      %s72 = sphi 0, %s72
      %s74 = sphi 0, %s72
      %s75 = sphi 0, %s74
      %s89 = sphi 0, %s75
      %s93 = sphi 0, %s93
      %s95 = sphi 0, %s93
      %s96 = sphi 0, %s95
      %s110 = sphi 0, %s96
      %s116 = sphi 0, %s118
      %s119 = sphi 0, %s116
      %s120 = sphi 0, %s119
      %s136 = sphi 0, %s120
    $region4: #{tpu_custom_call.1} parent=1 // loop_header_branch
      %20 = sbr.rel (%p18) target = $region8
    $region5: #{tpu_custom_call.1} parent=1 // loop_body
      %s22 = ssub.s32 %s17, 1
      %s23 = ssub.s32 %s17, 2
      %s24 = sadd.s32 %s17, 1
      %s25 = ssub.s32 %s17, %s24
      %p26 = scmp.eq.s32.totalorder %s25, 0
      %s28 = sadd.s32 %s27, 1
      %s29 = scalar_select %p26, %s27, %s28
      %p32 = pneg %p26
      %p33 = scmp.eq.s32.totalorder %s17, 3
      %p34 = por %p32, %p33
      %p35 = scmp.ne.s32.totalorder %s27, %s30
      %p36 = scmp.eq.s32.totalorder %s17, 0
      %p37 = por %p35, %p36
      %p38 = scmp.ne.s32.totalorder %s27, %s30
      %p39 = scmp.eq.s32.totalorder %s22, 3
      %p40 = por %p38, %p39
      %p41 = scmp.ne.s32.totalorder %s30, %s31
      %p42 = scmp.eq.s32.totalorder %s22, 0
      %p43 = por %p41, %p42
      %p44 = scmp.ne.s32.totalorder %s30, %s31
      %p45 = scmp.eq.s32.totalorder %s23, 3
      %p46 = por %p44, %p45
      %p48 = scmp.ne.s32.totalorder %s31, %s47
      %p49 = scmp.eq.s32.totalorder %s23, 0
      %p50 = por %p48, %p49
      %s52 = sadd.s32 %s51, 1
      %p55 = scmp.eq.s32.totalorder %s17, 3
      %p56 = scmp.ne.s32.totalorder %s51, %s53
      %p57 = scmp.eq.s32.totalorder %s17, 0
      %p58 = por %p56, %p57
      %p59 = scmp.ne.s32.totalorder %s51, %s53
      %p60 = scmp.eq.s32.totalorder %s22, 3
      %p61 = por %p59, %p60
      %p62 = scmp.ne.s32.totalorder %s53, %s54
      %p63 = scmp.eq.s32.totalorder %s22, 0
      %p64 = por %p62, %p63
      %p65 = scmp.ne.s32.totalorder %s53, %s54
      %p66 = scmp.eq.s32.totalorder %s23, 3
      %p67 = por %p65, %p66
      %p69 = scmp.ne.s32.totalorder %s54, %s68
      %p70 = scmp.eq.s32.totalorder %s23, 0
      %p71 = por %p69, %p70
      %s73 = sadd.s32 %s72, 1
      %p76 = scmp.eq.s32.totalorder %s17, 3
      %p77 = scmp.ne.s32.totalorder %s72, %s74
      %p78 = scmp.eq.s32.totalorder %s17, 0
      %p79 = por %p77, %p78
      %p80 = scmp.ne.s32.totalorder %s72, %s74
      %p81 = scmp.eq.s32.totalorder %s22, 3
      %p82 = por %p80, %p81
      %p83 = scmp.ne.s32.totalorder %s74, %s75
      %p84 = scmp.eq.s32.totalorder %s22, 0
      %p85 = por %p83, %p84
      %p86 = scmp.ne.s32.totalorder %s74, %s75
      %p87 = scmp.eq.s32.totalorder %s23, 3
      %p88 = por %p86, %p87
      %p90 = scmp.ne.s32.totalorder %s75, %s89
      %p91 = scmp.eq.s32.totalorder %s23, 0
      %p92 = por %p90, %p91
      %s94 = sadd.s32 %s93, 1
      %p97 = scmp.eq.s32.totalorder %s17, 3
      %p98 = scmp.ne.s32.totalorder %s93, %s95
      %p99 = scmp.eq.s32.totalorder %s17, 0
      %p100 = por %p98, %p99
      %p101 = scmp.ne.s32.totalorder %s93, %s95
      %p102 = scmp.eq.s32.totalorder %s22, 3
      %p103 = por %p101, %p102
      %p104 = scmp.ne.s32.totalorder %s95, %s96
      %p105 = scmp.eq.s32.totalorder %s22, 0
      %p106 = por %p104, %p105
      %p107 = scmp.ne.s32.totalorder %s95, %s96
      %p108 = scmp.eq.s32.totalorder %s23, 3
      %p109 = por %p107, %p108
      %p111 = scmp.ne.s32.totalorder %s96, %s110
      %p112 = scmp.eq.s32.totalorder %s23, 0
      %p113 = por %p111, %p112
      %s114 = ssub.s32 %s17, %s24
      %p115 = scmp.eq.s32.totalorder %s114, 0
      %s117 = sadd.s32 %s116, 1
      %s118 = scalar_select %p115, %s116, %s117
      %p121 = pneg %p115
      %p122 = scmp.eq.s32.totalorder %s17, 3
      %p123 = por %p121, %p122
      %p124 = scmp.ne.s32.totalorder %s116, %s119
      %p125 = scmp.eq.s32.totalorder %s17, 0
      %p126 = por %p124, %p125
      %p127 = scmp.ne.s32.totalorder %s116, %s119
      %p128 = scmp.eq.s32.totalorder %s22, 3
      %p129 = por %p127, %p128
      %p130 = scmp.ne.s32.totalorder %s119, %s120
      %p131 = scmp.eq.s32.totalorder %s22, 0
      %p132 = por %p130, %p131
      %p133 = scmp.ne.s32.totalorder %s119, %s120
      %p134 = scmp.eq.s32.totalorder %s23, 3
      %p135 = por %p133, %p134
      %p137 = scmp.ne.s32.totalorder %s120, %s136
      %p138 = scmp.eq.s32.totalorder %s23, 0
      %p139 = por %p137, %p138
      %p140 = scmp.le.s32.totalorder 1, %s17
      %p141 = scmp.lt.s32.totalorder %s17, 5
      %p142 = pnand %p140, %p141
      %p143 = pneg %p142
      // Predicated region
      $region9: #{tpu_custom_call.1} parent=5 // pred_check
        _
      $region10: #{tpu_custom_call.1} parent=5 // pred_check_branch
        %145 = sbr.rel (%p142) target = $region12
      $region11: #{tpu_custom_call.1} parent=5 // pred_region
        %s146 = ssub.s32 %s17, 1
        // Predicated region
        $region13: #{tpu_custom_call.1} parent=11 // pred_check
          %p147 = pneg %p64
        $region14: #{tpu_custom_call.1} parent=11 // pred_check_branch
          %149 = sbr.rel (%p147) target = $region16
        $region15: #{tpu_custom_call.1} parent=11 // pred_region
          %s151 = ssub.s32 27648, 27648
          %152 = vsyncadd [#allocation6], %s151
          %s153 = sshll.u32 [#allocation5], 4
          %s154 = int_to_ptr.vmem [resolvable:$true] %s153
          %159 = dma.hbm_to_vmem [thread:$0]  %s1, 27648, %s154, [#allocation6], 576, 576, 36
        $region16: #{tpu_custom_call.1} parent=11 // pred_fallthru
          _
        // Predicated region
        $region17: #{tpu_custom_call.1} parent=11 // pred_check
          %p160 = pneg %p85
        $region18: #{tpu_custom_call.1} parent=11 // pred_check_branch
          %162 = sbr.rel (%p160) target = $region20
        $region19: #{tpu_custom_call.1} parent=11 // pred_region
          %s164 = ssub.s32 9216, 9216
          %165 = vsyncadd [#allocation6], %s164
          %s166 = sshll.u32 [#allocation7], 4
          %s167 = int_to_ptr.vmem [resolvable:$true] %s166
          %172 = dma.hbm_to_vmem [thread:$0]  %s2, 9216, %s167, [#allocation6], 192, 192, 12
        $region20: #{tpu_custom_call.1} parent=11 // pred_fallthru
          _
        // Predicated region
        $region21: #{tpu_custom_call.1} parent=11 // pred_check
          %p173 = pneg %p106
        $region22: #{tpu_custom_call.1} parent=11 // pred_check_branch
          %175 = sbr.rel (%p173) target = $region24
        $region23: #{tpu_custom_call.1} parent=11 // pred_region
          _
        $region24: #{tpu_custom_call.1} parent=11 // pred_fallthru
          _
      $region12: #{tpu_custom_call.1} parent=5 // pred_fallthru
        _
      %p176 = scmp.lt.s32.totalorder %s17, 4
      // Predicated region
      $region25: #{tpu_custom_call.1} parent=5 // pred_check
        %p177 = pneg %p176
      $region26: #{tpu_custom_call.1} parent=5 // pred_check_branch
        %179 = sbr.rel (%p177) target = $region28
      $region27: #{tpu_custom_call.1} parent=5 // pred_region
        // Predicated region
        $region29: #{tpu_custom_call.1} parent=27 // pred_check
          %p180 = pneg %p37
        $region30: #{tpu_custom_call.1} parent=27 // pred_check_branch
          %182 = sbr.rel (%p180) target = $region32
        $region31: #{tpu_custom_call.1} parent=27 // pred_region
          %s183 = sand.u32 %s27, 1
          %s184 = scalar_lea.sflag [#allocation3], %s183
          %s185 = sand.u32 %s27, 1
          %s186 = smul.addr %s185, 48
          %s187 = scalar_lea.vmem [#allocation2], %s186
          %s188 = smul.u32 2, %s17
          %s190 = ssub.s32 768, 768
          %191 = vsyncadd %s184, %s190
          %s192 = smul.addr %s188, 6
          %s193 = smul.addr %s192, 64
          %s194 = scalar_lea.hbm %s0, %s193
          %s195 = sshll.u32 %s187, 4
          %s196 = int_to_ptr.vmem [resolvable:$true] %s195
          %201 = dma.hbm_to_vmem [thread:$0]  %s194, 768, %s196, %s184, 192, 192, 12
        $region32: #{tpu_custom_call.1} parent=27 // pred_fallthru
          _
      $region28: #{tpu_custom_call.1} parent=5 // pred_fallthru
        _
      %p202 = scmp.le.s32.totalorder 1, %s17
      %p203 = scmp.lt.s32.totalorder %s17, 5
      %p204 = pnand %p202, %p203
      %p205 = pneg %p204
      // Predicated region
      $region33: #{tpu_custom_call.1} parent=5 // pred_check
        _
      $region34: #{tpu_custom_call.1} parent=5 // pred_check_branch
        %207 = sbr.rel (%p204) target = $region36
      $region35: #{tpu_custom_call.1} parent=5 // pred_region
        %s208 = ssub.s32 %s17, 1
        %s209 = sand.u32 %s30, 1
        %s210 = scalar_lea.sflag [#allocation3], %s209
        %s211 = sand.u32 %s30, 1
        %s212 = smul.addr %s211, 48
        %s213 = scalar_lea.vmem [#allocation2], %s212
        // Predicated region
        $region37: #{tpu_custom_call.1} parent=35 // pred_check
          %p214 = pneg %p43
        $region38: #{tpu_custom_call.1} parent=35 // pred_check_branch
          %216 = sbr.rel (%p214) target = $region40
        $region39: #{tpu_custom_call.1} parent=35 // pred_region
          %217 = dma.done %s210, 768
        $region40: #{tpu_custom_call.1} parent=35 // pred_fallthru
          _
        // Predicated region
        $region41: #{tpu_custom_call.1} parent=35 // pred_check
          %p218 = pneg %p64
        $region42: #{tpu_custom_call.1} parent=35 // pred_check_branch
          %220 = sbr.rel (%p218) target = $region44
        $region43: #{tpu_custom_call.1} parent=35 // pred_region
          %221 = dma.done [#allocation6], 27648
        $region44: #{tpu_custom_call.1} parent=35 // pred_fallthru
          _
        // Predicated region
        $region45: #{tpu_custom_call.1} parent=35 // pred_check
          %p222 = pneg %p85
        $region46: #{tpu_custom_call.1} parent=35 // pred_check_branch
          %224 = sbr.rel (%p222) target = $region48
        $region47: #{tpu_custom_call.1} parent=35 // pred_region
          %225 = dma.done [#allocation6], 9216
        $region48: #{tpu_custom_call.1} parent=35 // pred_fallthru
          _
        %s226 = sand.u32 %s30, 1
        %s227 = scalar_lea.sflag [#allocation3], %s226
        %s228 = sand.u32 %s30, 1
        %s229 = smul.addr %s228, 48
        %s230 = scalar_lea.vmem [#allocation2], %s229
        %p231 = pneg %p43
        %p232 = pneg %p40
        %p233 = pneg %p64
        %p234 = pneg %p61
        %p235 = pneg %p85
        %p236 = pneg %p82
        %p237 = pneg %p106
        %p238 = pneg %p103
        %p239 = pneg %p132
        %p240 = pneg %p129
        %s241 = sand.u32 %s119, 1
        %s242 = scalar_lea.sflag [#allocation4], %s241
        %s243 = sand.u32 %s119, 1
        %s244 = smul.addr %s243, 96
        %s245 = scalar_lea.vmem [#allocation8], %s244
        %s246 = smul.u32 2, %s22
        %s247 = smul.u32 2, %s22
        %v249 = vld [vmem:[%s213] sm:$0xff]
        %v250 = vld [vmem:[%s213 + $0x8] sm:$0xf]
        %v251 = vld [vmem:[%s213 + $0xc] sm:$0xff]
        %v252 = vld [vmem:[%s213 + $0x14] sm:$0xf]
        %v253 = vld [vmem:[%s213 + $0x18] sm:$0xff]
        %v254 = vld [vmem:[%s213 + $0x20] sm:$0xf]
        %v255 = vld [vmem:[%s213 + $0x24] sm:$0xff]
        %v256 = vld [vmem:[%s213 + $0x2c] sm:$0xf]
        %v257 = vld [vmem:[#allocation5] sm:$0xff]
        %v258 = vld [vmem:[#allocation5 + $0x8] sm:$0xff]
        %v259 = vld [vmem:[#allocation5 + $0x10] sm:$0xff]
        %v260 = vld [vmem:[#allocation5 + $0x18] sm:$0xff]
        %v261 = vld [vmem:[#allocation5 + $0x20] sm:$0xf]
        %v262 = vld [vmem:[#allocation5 + $0x24] sm:$0xff]
        %v263 = vld [vmem:[#allocation5 + $0x2c] sm:$0xff]
        %v264 = vld [vmem:[#allocation5 + $0x34] sm:$0xff]
        %v265 = vld [vmem:[#allocation5 + $0x3c] sm:$0xff]
        %v266 = vld [vmem:[#allocation5 + $0x44] sm:$0xf]
        %v267 = vld [vmem:[#allocation5 + $0x48] sm:$0xff]
        %v268 = vld [vmem:[#allocation5 + $0x50] sm:$0xff]
        %v269 = vld [vmem:[#allocation5 + $0x58] sm:$0xff]
        %v270 = vld [vmem:[#allocation5 + $0x60] sm:$0xff]
        %v271 = vld [vmem:[#allocation5 + $0x68] sm:$0xf]
        %v272 = vld [vmem:[#allocation5 + $0x6c] sm:$0xff]
        %v273 = vld [vmem:[#allocation5 + $0x74] sm:$0xff]
        %v274 = vld [vmem:[#allocation5 + $0x7c] sm:$0xff]
        %v275 = vld [vmem:[#allocation5 + $0x84] sm:$0xff]
        %v276 = vld [vmem:[#allocation5 + $0x8c] sm:$0xf]
        %v277 = vld [vmem:[#allocation5 + $0x90] sm:$0xff]
        %v278 = vld [vmem:[#allocation5 + $0x98] sm:$0xff]
        %v279 = vld [vmem:[#allocation5 + $0xa0] sm:$0xff]
        %v280 = vld [vmem:[#allocation5 + $0xa8] sm:$0xff]
        %v281 = vld [vmem:[#allocation5 + $0xb0] sm:$0xf]
        %v282 = vld [vmem:[#allocation5 + $0xb4] sm:$0xff]
        %v283 = vld [vmem:[#allocation5 + $0xbc] sm:$0xff]
        %v284 = vld [vmem:[#allocation5 + $0xc4] sm:$0xff]
        %v285 = vld [vmem:[#allocation5 + $0xcc] sm:$0xff]
        %v286 = vld [vmem:[#allocation5 + $0xd4] sm:$0xf]
        %v287 = vld [vmem:[#allocation5 + $0xd8] sm:$0xff]
        %v288 = vld [vmem:[#allocation5 + $0xe0] sm:$0xff]
        %v289 = vld [vmem:[#allocation5 + $0xe8] sm:$0xff]
        %v290 = vld [vmem:[#allocation5 + $0xf0] sm:$0xff]
        %v291 = vld [vmem:[#allocation5 + $0xf8] sm:$0xf]
        %v292 = vld [vmem:[#allocation5 + $0xfc] sm:$0xff]
        %v293 = vld [vmem:[#allocation5 + $0x104] sm:$0xff]
        %v294 = vld [vmem:[#allocation5 + $0x10c] sm:$0xff]
        %v295 = vld [vmem:[#allocation5 + $0x114] sm:$0xff]
        %v296 = vld [vmem:[#allocation5 + $0x11c] sm:$0xf]
        %v297 = vld [vmem:[#allocation5 + $0x120] sm:$0xff]
        %v298 = vld [vmem:[#allocation5 + $0x128] sm:$0xff]
        %v299 = vld [vmem:[#allocation5 + $0x130] sm:$0xff]
        %v300 = vld [vmem:[#allocation5 + $0x138] sm:$0xff]
        %v301 = vld [vmem:[#allocation5 + $0x140] sm:$0xf]
        %v302 = vld [vmem:[#allocation5 + $0x144] sm:$0xff]
        %v303 = vld [vmem:[#allocation5 + $0x14c] sm:$0xff]
        %v304 = vld [vmem:[#allocation5 + $0x154] sm:$0xff]
        %v305 = vld [vmem:[#allocation5 + $0x15c] sm:$0xff]
        %v306 = vld [vmem:[#allocation5 + $0x164] sm:$0xf]
        %v307 = vld [vmem:[#allocation5 + $0x168] sm:$0xff]
        %v308 = vld [vmem:[#allocation5 + $0x170] sm:$0xff]
        %v309 = vld [vmem:[#allocation5 + $0x178] sm:$0xff]
        %v310 = vld [vmem:[#allocation5 + $0x180] sm:$0xff]
        %v311 = vld [vmem:[#allocation5 + $0x188] sm:$0xf]
        %v312 = vld [vmem:[#allocation5 + $0x18c] sm:$0xff]
        %v313 = vld [vmem:[#allocation5 + $0x194] sm:$0xff]
        %v314 = vld [vmem:[#allocation5 + $0x19c] sm:$0xff]
        %v315 = vld [vmem:[#allocation5 + $0x1a4] sm:$0xff]
        %v316 = vld [vmem:[#allocation5 + $0x1ac] sm:$0xf]
        %v317 = vld [vmem:[#allocation5 + $0x1b0] sm:$0xff]
        %v318 = vld [vmem:[#allocation5 + $0x1b8] sm:$0xff]
        %v319 = vld [vmem:[#allocation5 + $0x1c0] sm:$0xff]
        %v320 = vld [vmem:[#allocation5 + $0x1c8] sm:$0xff]
        %v321 = vld [vmem:[#allocation5 + $0x1d0] sm:$0xf]
        %v322 = vld [vmem:[#allocation5 + $0x1d4] sm:$0xff]
        %v323 = vld [vmem:[#allocation5 + $0x1dc] sm:$0xff]
        %v324 = vld [vmem:[#allocation5 + $0x1e4] sm:$0xff]
        %v325 = vld [vmem:[#allocation5 + $0x1ec] sm:$0xff]
        %v326 = vld [vmem:[#allocation5 + $0x1f4] sm:$0xf]
        %v327 = vld [vmem:[#allocation5 + $0x1f8] sm:$0xff]
        %v328 = vld [vmem:[#allocation5 + $0x200] sm:$0xff]
        %v329 = vld [vmem:[#allocation5 + $0x208] sm:$0xff]
        %v330 = vld [vmem:[#allocation5 + $0x210] sm:$0xff]
        %v331 = vld [vmem:[#allocation5 + $0x218] sm:$0xf]
        %v332 = vld [vmem:[#allocation5 + $0x21c] sm:$0xff]
        %v333 = vld [vmem:[#allocation5 + $0x224] sm:$0xff]
        %v334 = vld [vmem:[#allocation5 + $0x22c] sm:$0xff]
        %v335 = vld [vmem:[#allocation5 + $0x234] sm:$0xff]
        %v336 = vld [vmem:[#allocation5 + $0x23c] sm:$0xf]
        %v337 = vld [vmem:[#allocation5 + $0x240] sm:$0xff]
        %v338 = vld [vmem:[#allocation5 + $0x248] sm:$0xff]
        %v339 = vld [vmem:[#allocation5 + $0x250] sm:$0xff]
        %v340 = vld [vmem:[#allocation5 + $0x258] sm:$0xff]
        %v341 = vld [vmem:[#allocation5 + $0x260] sm:$0xf]
        %v342 = vld [vmem:[#allocation5 + $0x264] sm:$0xff]
        %v343 = vld [vmem:[#allocation5 + $0x26c] sm:$0xff]
        %v344 = vld [vmem:[#allocation5 + $0x274] sm:$0xff]
        %v345 = vld [vmem:[#allocation5 + $0x27c] sm:$0xff]
        %v346 = vld [vmem:[#allocation5 + $0x284] sm:$0xf]
        %v347 = vld [vmem:[#allocation5 + $0x288] sm:$0xff]
        %v348 = vld [vmem:[#allocation5 + $0x290] sm:$0xff]
        %v349 = vld [vmem:[#allocation5 + $0x298] sm:$0xff]
        %v350 = vld [vmem:[#allocation5 + $0x2a0] sm:$0xff]
        %v351 = vld [vmem:[#allocation5 + $0x2a8] sm:$0xf]
        %v352 = vld [vmem:[#allocation5 + $0x2ac] sm:$0xff]
        %v353 = vld [vmem:[#allocation5 + $0x2b4] sm:$0xff]
        %v354 = vld [vmem:[#allocation5 + $0x2bc] sm:$0xff]
        %v355 = vld [vmem:[#allocation5 + $0x2c4] sm:$0xff]
        %v356 = vld [vmem:[#allocation5 + $0x2cc] sm:$0xf]
        %v357 = vld [vmem:[#allocation5 + $0x2d0] sm:$0xff]
        %v358 = vld [vmem:[#allocation5 + $0x2d8] sm:$0xff]
        %v359 = vld [vmem:[#allocation5 + $0x2e0] sm:$0xff]
        %v360 = vld [vmem:[#allocation5 + $0x2e8] sm:$0xff]
        %v361 = vld [vmem:[#allocation5 + $0x2f0] sm:$0xf]
        %v362 = vld [vmem:[#allocation5 + $0x2f4] sm:$0xff]
        %v363 = vld [vmem:[#allocation5 + $0x2fc] sm:$0xff]
        %v364 = vld [vmem:[#allocation5 + $0x304] sm:$0xff]
        %v365 = vld [vmem:[#allocation5 + $0x30c] sm:$0xff]
        %v366 = vld [vmem:[#allocation5 + $0x314] sm:$0xf]
        %v367 = vld [vmem:[#allocation5 + $0x318] sm:$0xff]
        %v368 = vld [vmem:[#allocation5 + $0x320] sm:$0xff]
        %v369 = vld [vmem:[#allocation5 + $0x328] sm:$0xff]
        %v370 = vld [vmem:[#allocation5 + $0x330] sm:$0xff]
        %v371 = vld [vmem:[#allocation5 + $0x338] sm:$0xf]
        %v372 = vld [vmem:[#allocation5 + $0x33c] sm:$0xff]
        %v373 = vld [vmem:[#allocation5 + $0x344] sm:$0xff]
        %v374 = vld [vmem:[#allocation5 + $0x34c] sm:$0xff]
        %v375 = vld [vmem:[#allocation5 + $0x354] sm:$0xff]
        %v376 = vld [vmem:[#allocation5 + $0x35c] sm:$0xf]
        %v377 = vld [vmem:[#allocation5 + $0x360] sm:$0xff]
        %v378 = vld [vmem:[#allocation5 + $0x368] sm:$0xff]
        %v379 = vld [vmem:[#allocation5 + $0x370] sm:$0xff]
        %v380 = vld [vmem:[#allocation5 + $0x378] sm:$0xff]
        %v381 = vld [vmem:[#allocation5 + $0x380] sm:$0xf]
        %v382 = vld [vmem:[#allocation5 + $0x384] sm:$0xff]
        %v383 = vld [vmem:[#allocation5 + $0x38c] sm:$0xff]
        %v384 = vld [vmem:[#allocation5 + $0x394] sm:$0xff]
        %v385 = vld [vmem:[#allocation5 + $0x39c] sm:$0xff]
        %v386 = vld [vmem:[#allocation5 + $0x3a4] sm:$0xf]
        %v387 = vld [vmem:[#allocation5 + $0x3a8] sm:$0xff]
        %v388 = vld [vmem:[#allocation5 + $0x3b0] sm:$0xff]
        %v389 = vld [vmem:[#allocation5 + $0x3b8] sm:$0xff]
        %v390 = vld [vmem:[#allocation5 + $0x3c0] sm:$0xff]
        %v391 = vld [vmem:[#allocation5 + $0x3c8] sm:$0xf]
        %v392 = vld [vmem:[#allocation5 + $0x3cc] sm:$0xff]
        %v393 = vld [vmem:[#allocation5 + $0x3d4] sm:$0xff]
        %v394 = vld [vmem:[#allocation5 + $0x3dc] sm:$0xff]
        %v395 = vld [vmem:[#allocation5 + $0x3e4] sm:$0xff]
        %v396 = vld [vmem:[#allocation5 + $0x3ec] sm:$0xf]
        %v397 = vld [vmem:[#allocation5 + $0x3f0] sm:$0xff]
        %v398 = vld [vmem:[#allocation5 + $0x3f8] sm:$0xff]
        %v399 = vld [vmem:[#allocation5 + $0x400] sm:$0xff]
        %v400 = vld [vmem:[#allocation5 + $0x408] sm:$0xff]
        %v401 = vld [vmem:[#allocation5 + $0x410] sm:$0xf]
        %v402 = vld [vmem:[#allocation5 + $0x414] sm:$0xff]
        %v403 = vld [vmem:[#allocation5 + $0x41c] sm:$0xff]
        %v404 = vld [vmem:[#allocation5 + $0x424] sm:$0xff]
        %v405 = vld [vmem:[#allocation5 + $0x42c] sm:$0xff]
        %v406 = vld [vmem:[#allocation5 + $0x434] sm:$0xf]
        %v407 = vld [vmem:[#allocation5 + $0x438] sm:$0xff]
        %v408 = vld [vmem:[#allocation5 + $0x440] sm:$0xff]
        %v409 = vld [vmem:[#allocation5 + $0x448] sm:$0xff]
        %v410 = vld [vmem:[#allocation5 + $0x450] sm:$0xff]
        %v411 = vld [vmem:[#allocation5 + $0x458] sm:$0xf]
        %v412 = vld [vmem:[#allocation5 + $0x45c] sm:$0xff]
        %v413 = vld [vmem:[#allocation5 + $0x464] sm:$0xff]
        %v414 = vld [vmem:[#allocation5 + $0x46c] sm:$0xff]
        %v415 = vld [vmem:[#allocation5 + $0x474] sm:$0xff]
        %v416 = vld [vmem:[#allocation5 + $0x47c] sm:$0xf]
        %v417 = vld [vmem:[#allocation5 + $0x480] sm:$0xff]
        %v418 = vld [vmem:[#allocation5 + $0x488] sm:$0xff]
        %v419 = vld [vmem:[#allocation5 + $0x490] sm:$0xff]
        %v420 = vld [vmem:[#allocation5 + $0x498] sm:$0xff]
        %v421 = vld [vmem:[#allocation5 + $0x4a0] sm:$0xf]
        %v422 = vld [vmem:[#allocation5 + $0x4a4] sm:$0xff]
        %v423 = vld [vmem:[#allocation5 + $0x4ac] sm:$0xff]
        %v424 = vld [vmem:[#allocation5 + $0x4b4] sm:$0xff]
        %v425 = vld [vmem:[#allocation5 + $0x4bc] sm:$0xff]
        %v426 = vld [vmem:[#allocation5 + $0x4c4] sm:$0xf]
        %v427 = vld [vmem:[#allocation5 + $0x4c8] sm:$0xff]
        %v428 = vld [vmem:[#allocation5 + $0x4d0] sm:$0xff]
        %v429 = vld [vmem:[#allocation5 + $0x4d8] sm:$0xff]
        %v430 = vld [vmem:[#allocation5 + $0x4e0] sm:$0xff]
        %v431 = vld [vmem:[#allocation5 + $0x4e8] sm:$0xf]
        %v432 = vld [vmem:[#allocation5 + $0x4ec] sm:$0xff]
        %v433 = vld [vmem:[#allocation5 + $0x4f4] sm:$0xff]
        %v434 = vld [vmem:[#allocation5 + $0x4fc] sm:$0xff]
        %v435 = vld [vmem:[#allocation5 + $0x504] sm:$0xff]
        %v436 = vld [vmem:[#allocation5 + $0x50c] sm:$0xf]
        %v437 = vld [vmem:[#allocation5 + $0x510] sm:$0xff]
        %v438 = vld [vmem:[#allocation5 + $0x518] sm:$0xff]
        %v439 = vld [vmem:[#allocation5 + $0x520] sm:$0xff]
        %v440 = vld [vmem:[#allocation5 + $0x528] sm:$0xff]
        %v441 = vld [vmem:[#allocation5 + $0x530] sm:$0xf]
        %v442 = vld [vmem:[#allocation5 + $0x534] sm:$0xff]
        %v443 = vld [vmem:[#allocation5 + $0x53c] sm:$0xff]
        %v444 = vld [vmem:[#allocation5 + $0x544] sm:$0xff]
        %v445 = vld [vmem:[#allocation5 + $0x54c] sm:$0xff]
        %v446 = vld [vmem:[#allocation5 + $0x554] sm:$0xf]
        %v447 = vld [vmem:[#allocation5 + $0x558] sm:$0xff]
        %v448 = vld [vmem:[#allocation5 + $0x560] sm:$0xff]
        %v449 = vld [vmem:[#allocation5 + $0x568] sm:$0xff]
        %v450 = vld [vmem:[#allocation5 + $0x570] sm:$0xff]
        %v451 = vld [vmem:[#allocation5 + $0x578] sm:$0xf]
        %v452 = vld [vmem:[#allocation5 + $0x57c] sm:$0xff]
        %v453 = vld [vmem:[#allocation5 + $0x584] sm:$0xff]
        %v454 = vld [vmem:[#allocation5 + $0x58c] sm:$0xff]
        %v455 = vld [vmem:[#allocation5 + $0x594] sm:$0xff]
        %v456 = vld [vmem:[#allocation5 + $0x59c] sm:$0xf]
        %v457 = vld [vmem:[#allocation5 + $0x5a0] sm:$0xff]
        %v458 = vld [vmem:[#allocation5 + $0x5a8] sm:$0xff]
        %v459 = vld [vmem:[#allocation5 + $0x5b0] sm:$0xff]
        %v460 = vld [vmem:[#allocation5 + $0x5b8] sm:$0xff]
        %v461 = vld [vmem:[#allocation5 + $0x5c0] sm:$0xf]
        %v462 = vld [vmem:[#allocation5 + $0x5c4] sm:$0xff]
        %v463 = vld [vmem:[#allocation5 + $0x5cc] sm:$0xff]
        %v464 = vld [vmem:[#allocation5 + $0x5d4] sm:$0xff]
        %v465 = vld [vmem:[#allocation5 + $0x5dc] sm:$0xff]
        %v466 = vld [vmem:[#allocation5 + $0x5e4] sm:$0xf]
        %v467 = vld [vmem:[#allocation5 + $0x5e8] sm:$0xff]
        %v468 = vld [vmem:[#allocation5 + $0x5f0] sm:$0xff]
        %v469 = vld [vmem:[#allocation5 + $0x5f8] sm:$0xff]
        %v470 = vld [vmem:[#allocation5 + $0x600] sm:$0xff]
        %v471 = vld [vmem:[#allocation5 + $0x608] sm:$0xf]
        %v472 = vld [vmem:[#allocation5 + $0x60c] sm:$0xff]
        %v473 = vld [vmem:[#allocation5 + $0x614] sm:$0xff]
        %v474 = vld [vmem:[#allocation5 + $0x61c] sm:$0xff]
        %v475 = vld [vmem:[#allocation5 + $0x624] sm:$0xff]
        %v476 = vld [vmem:[#allocation5 + $0x62c] sm:$0xf]
        %v477 = vld [vmem:[#allocation5 + $0x630] sm:$0xff]
        %v478 = vld [vmem:[#allocation5 + $0x638] sm:$0xff]
        %v479 = vld [vmem:[#allocation5 + $0x640] sm:$0xff]
        %v480 = vld [vmem:[#allocation5 + $0x648] sm:$0xff]
        %v481 = vld [vmem:[#allocation5 + $0x650] sm:$0xf]
        %v482 = vld [vmem:[#allocation5 + $0x654] sm:$0xff]
        %v483 = vld [vmem:[#allocation5 + $0x65c] sm:$0xff]
        %v484 = vld [vmem:[#allocation5 + $0x664] sm:$0xff]
        %v485 = vld [vmem:[#allocation5 + $0x66c] sm:$0xff]
        %v486 = vld [vmem:[#allocation5 + $0x674] sm:$0xf]
        %v487 = vld [vmem:[#allocation5 + $0x678] sm:$0xff]
        %v488 = vld [vmem:[#allocation5 + $0x680] sm:$0xff]
        %v489 = vld [vmem:[#allocation5 + $0x688] sm:$0xff]
        %v490 = vld [vmem:[#allocation5 + $0x690] sm:$0xff]
        %v491 = vld [vmem:[#allocation5 + $0x698] sm:$0xf]
        %v492 = vld [vmem:[#allocation5 + $0x69c] sm:$0xff]
        %v493 = vld [vmem:[#allocation5 + $0x6a4] sm:$0xff]
        %v494 = vld [vmem:[#allocation5 + $0x6ac] sm:$0xff]
        %v495 = vld [vmem:[#allocation5 + $0x6b4] sm:$0xff]
        %v496 = vld [vmem:[#allocation5 + $0x6bc] sm:$0xf]
        %v505 = vunpack.c.l.b16 %v249
        %v506 = vunpack.c.h.b16 %v249
        %v507 = vunpack.c.l.b16 %v250
        %v508 = vunpack.c.l.b16 %v251
        %v509 = vunpack.c.h.b16 %v251
        %v510 = vunpack.c.l.b16 %v252
        %v511 = vunpack.c.l.b16 %v253
        %v512 = vunpack.c.h.b16 %v253
        %v513 = vunpack.c.l.b16 %v254
        %v514 = vunpack.c.l.b16 %v255
        %v515 = vunpack.c.h.b16 %v255
        %v516 = vunpack.c.l.b16 %v256
        %v517 = vpack.c.b16 %v508, %v505
        %v518 = vpack.c.b16 %v509, %v506
        %v519 = vpack.c.b16 %v510, %v507
        %v520 = vpack.c.b16 %v514, %v511
        %v521 = vpack.c.b16 %v515, %v512
        %v522 = vpack.c.b16 %v516, %v513
        %v769 = vunpack.c.l.b16 %v257
        %v770 = vunpack.c.h.b16 %v257
        %v771 = vunpack.c.l.b16 %v258
        %v772 = vunpack.c.h.b16 %v258
        %v773 = vunpack.c.l.b16 %v259
        %v774 = vunpack.c.h.b16 %v259
        %v775 = vunpack.c.l.b16 %v260
        %v776 = vunpack.c.h.b16 %v260
        %v777 = vunpack.c.l.b16 %v261
        %v778 = vunpack.c.l.b16 %v262
        %v779 = vunpack.c.h.b16 %v262
        %v780 = vunpack.c.l.b16 %v263
        %v781 = vunpack.c.h.b16 %v263
        %v782 = vunpack.c.l.b16 %v264
        %v783 = vunpack.c.h.b16 %v264
        %v784 = vunpack.c.l.b16 %v265
        %v785 = vunpack.c.h.b16 %v265
        %v786 = vunpack.c.l.b16 %v266
        %v787 = vunpack.c.l.b16 %v267
        %v788 = vunpack.c.h.b16 %v267
        %v789 = vunpack.c.l.b16 %v268
        %v790 = vunpack.c.h.b16 %v268
        %v791 = vunpack.c.l.b16 %v269
        %v792 = vunpack.c.h.b16 %v269
        %v793 = vunpack.c.l.b16 %v270
        %v794 = vunpack.c.h.b16 %v270
        %v795 = vunpack.c.l.b16 %v271
        %v796 = vunpack.c.l.b16 %v272
        %v797 = vunpack.c.h.b16 %v272
        %v798 = vunpack.c.l.b16 %v273
        %v799 = vunpack.c.h.b16 %v273
        %v800 = vunpack.c.l.b16 %v274
        %v801 = vunpack.c.h.b16 %v274
        %v802 = vunpack.c.l.b16 %v275
        %v803 = vunpack.c.h.b16 %v275
        %v804 = vunpack.c.l.b16 %v276
        %v805 = vunpack.c.l.b16 %v277
        %v806 = vunpack.c.h.b16 %v277
        %v807 = vunpack.c.l.b16 %v278
        %v808 = vunpack.c.h.b16 %v278
        %v809 = vunpack.c.l.b16 %v279
        %v810 = vunpack.c.h.b16 %v279
        %v811 = vunpack.c.l.b16 %v280
        %v812 = vunpack.c.h.b16 %v280
        %v813 = vunpack.c.l.b16 %v281
        %v814 = vunpack.c.l.b16 %v282
        %v815 = vunpack.c.h.b16 %v282
        %v816 = vunpack.c.l.b16 %v283
        %v817 = vunpack.c.h.b16 %v283
        %v818 = vunpack.c.l.b16 %v284
        %v819 = vunpack.c.h.b16 %v284
        %v820 = vunpack.c.l.b16 %v285
        %v821 = vunpack.c.h.b16 %v285
        %v822 = vunpack.c.l.b16 %v286
        %v823 = vunpack.c.l.b16 %v287
        %v824 = vunpack.c.h.b16 %v287
        %v825 = vunpack.c.l.b16 %v288
        %v826 = vunpack.c.h.b16 %v288
        %v827 = vunpack.c.l.b16 %v289
        %v828 = vunpack.c.h.b16 %v289
        %v829 = vunpack.c.l.b16 %v290
        %v830 = vunpack.c.h.b16 %v290
        %v831 = vunpack.c.l.b16 %v291
        %v832 = vunpack.c.l.b16 %v292
        %v833 = vunpack.c.h.b16 %v292
        %v834 = vunpack.c.l.b16 %v293
        %v835 = vunpack.c.h.b16 %v293
        %v836 = vunpack.c.l.b16 %v294
        %v837 = vunpack.c.h.b16 %v294
        %v838 = vunpack.c.l.b16 %v295
        %v839 = vunpack.c.h.b16 %v295
        %v840 = vunpack.c.l.b16 %v296
        %v841 = vunpack.c.l.b16 %v297
        %v842 = vunpack.c.h.b16 %v297
        %v843 = vunpack.c.l.b16 %v298
        %v844 = vunpack.c.h.b16 %v298
        %v845 = vunpack.c.l.b16 %v299
        %v846 = vunpack.c.h.b16 %v299
        %v847 = vunpack.c.l.b16 %v300
        %v848 = vunpack.c.h.b16 %v300
        %v849 = vunpack.c.l.b16 %v301
        %v850 = vunpack.c.l.b16 %v302
        %v851 = vunpack.c.h.b16 %v302
        %v852 = vunpack.c.l.b16 %v303
        %v853 = vunpack.c.h.b16 %v303
        %v854 = vunpack.c.l.b16 %v304
        %v855 = vunpack.c.h.b16 %v304
        %v856 = vunpack.c.l.b16 %v305
        %v857 = vunpack.c.h.b16 %v305
        %v858 = vunpack.c.l.b16 %v306
        %v859 = vunpack.c.l.b16 %v307
        %v860 = vunpack.c.h.b16 %v307
        %v861 = vunpack.c.l.b16 %v308
        %v862 = vunpack.c.h.b16 %v308
        %v863 = vunpack.c.l.b16 %v309
        %v864 = vunpack.c.h.b16 %v309
        %v865 = vunpack.c.l.b16 %v310
        %v866 = vunpack.c.h.b16 %v310
        %v867 = vunpack.c.l.b16 %v311
        %v868 = vunpack.c.l.b16 %v312
        %v869 = vunpack.c.h.b16 %v312
        %v870 = vunpack.c.l.b16 %v313
        %v871 = vunpack.c.h.b16 %v313
        %v872 = vunpack.c.l.b16 %v314
        %v873 = vunpack.c.h.b16 %v314
        %v874 = vunpack.c.l.b16 %v315
        %v875 = vunpack.c.h.b16 %v315
        %v876 = vunpack.c.l.b16 %v316
        %v877 = vunpack.c.l.b16 %v317
        %v878 = vunpack.c.h.b16 %v317
        %v879 = vunpack.c.l.b16 %v318
        %v880 = vunpack.c.h.b16 %v318
        %v881 = vunpack.c.l.b16 %v319
        %v882 = vunpack.c.h.b16 %v319
        %v883 = vunpack.c.l.b16 %v320
        %v884 = vunpack.c.h.b16 %v320
        %v885 = vunpack.c.l.b16 %v321
        %v886 = vunpack.c.l.b16 %v322
        %v887 = vunpack.c.h.b16 %v322
        %v888 = vunpack.c.l.b16 %v323
        %v889 = vunpack.c.h.b16 %v323
        %v890 = vunpack.c.l.b16 %v324
        %v891 = vunpack.c.h.b16 %v324
        %v892 = vunpack.c.l.b16 %v325
        %v893 = vunpack.c.h.b16 %v325
        %v894 = vunpack.c.l.b16 %v326
        %v895 = vunpack.c.l.b16 %v327
        %v896 = vunpack.c.h.b16 %v327
        %v897 = vunpack.c.l.b16 %v328
        %v898 = vunpack.c.h.b16 %v328
        %v899 = vunpack.c.l.b16 %v329
        %v900 = vunpack.c.h.b16 %v329
        %v901 = vunpack.c.l.b16 %v330
        %v902 = vunpack.c.h.b16 %v330
        %v903 = vunpack.c.l.b16 %v331
        %v904 = vunpack.c.l.b16 %v332
        %v905 = vunpack.c.h.b16 %v332
        %v906 = vunpack.c.l.b16 %v333
        %v907 = vunpack.c.h.b16 %v333
        %v908 = vunpack.c.l.b16 %v334
        %v909 = vunpack.c.h.b16 %v334
        %v910 = vunpack.c.l.b16 %v335
        %v911 = vunpack.c.h.b16 %v335
        %v912 = vunpack.c.l.b16 %v336
        %v913 = vunpack.c.l.b16 %v337
        %v914 = vunpack.c.h.b16 %v337
        %v915 = vunpack.c.l.b16 %v338
        %v916 = vunpack.c.h.b16 %v338
        %v917 = vunpack.c.l.b16 %v339
        %v918 = vunpack.c.h.b16 %v339
        %v919 = vunpack.c.l.b16 %v340
        %v920 = vunpack.c.h.b16 %v340
        %v921 = vunpack.c.l.b16 %v341
        %v922 = vunpack.c.l.b16 %v342
        %v923 = vunpack.c.h.b16 %v342
        %v924 = vunpack.c.l.b16 %v343
        %v925 = vunpack.c.h.b16 %v343
        %v926 = vunpack.c.l.b16 %v344
        %v927 = vunpack.c.h.b16 %v344
        %v928 = vunpack.c.l.b16 %v345
        %v929 = vunpack.c.h.b16 %v345
        %v930 = vunpack.c.l.b16 %v346
        %v931 = vunpack.c.l.b16 %v347
        %v932 = vunpack.c.h.b16 %v347
        %v933 = vunpack.c.l.b16 %v348
        %v934 = vunpack.c.h.b16 %v348
        %v935 = vunpack.c.l.b16 %v349
        %v936 = vunpack.c.h.b16 %v349
        %v937 = vunpack.c.l.b16 %v350
        %v938 = vunpack.c.h.b16 %v350
        %v939 = vunpack.c.l.b16 %v351
        %v940 = vunpack.c.l.b16 %v352
        %v941 = vunpack.c.h.b16 %v352
        %v942 = vunpack.c.l.b16 %v353
        %v943 = vunpack.c.h.b16 %v353
        %v944 = vunpack.c.l.b16 %v354
        %v945 = vunpack.c.h.b16 %v354
        %v946 = vunpack.c.l.b16 %v355
        %v947 = vunpack.c.h.b16 %v355
        %v948 = vunpack.c.l.b16 %v356
        %v949 = vunpack.c.l.b16 %v357
        %v950 = vunpack.c.h.b16 %v357
        %v951 = vunpack.c.l.b16 %v358
        %v952 = vunpack.c.h.b16 %v358
        %v953 = vunpack.c.l.b16 %v359
        %v954 = vunpack.c.h.b16 %v359
        %v955 = vunpack.c.l.b16 %v360
        %v956 = vunpack.c.h.b16 %v360
        %v957 = vunpack.c.l.b16 %v361
        %v958 = vunpack.c.l.b16 %v362
        %v959 = vunpack.c.h.b16 %v362
        %v960 = vunpack.c.l.b16 %v363
        %v961 = vunpack.c.h.b16 %v363
        %v962 = vunpack.c.l.b16 %v364
        %v963 = vunpack.c.h.b16 %v364
        %v964 = vunpack.c.l.b16 %v365
        %v965 = vunpack.c.h.b16 %v365
        %v966 = vunpack.c.l.b16 %v366
        %v967 = vunpack.c.l.b16 %v367
        %v968 = vunpack.c.h.b16 %v367
        %v969 = vunpack.c.l.b16 %v368
        %v970 = vunpack.c.h.b16 %v368
        %v971 = vunpack.c.l.b16 %v369
        %v972 = vunpack.c.h.b16 %v369
        %v973 = vunpack.c.l.b16 %v370
        %v974 = vunpack.c.h.b16 %v370
        %v975 = vunpack.c.l.b16 %v371
        %v976 = vunpack.c.l.b16 %v372
        %v977 = vunpack.c.h.b16 %v372
        %v978 = vunpack.c.l.b16 %v373
        %v979 = vunpack.c.h.b16 %v373
        %v980 = vunpack.c.l.b16 %v374
        %v981 = vunpack.c.h.b16 %v374
        %v982 = vunpack.c.l.b16 %v375
        %v983 = vunpack.c.h.b16 %v375
        %v984 = vunpack.c.l.b16 %v376
        %v985 = vunpack.c.l.b16 %v377
        %v986 = vunpack.c.h.b16 %v377
        %v987 = vunpack.c.l.b16 %v378
        %v988 = vunpack.c.h.b16 %v378
        %v989 = vunpack.c.l.b16 %v379
        %v990 = vunpack.c.h.b16 %v379
        %v991 = vunpack.c.l.b16 %v380
        %v992 = vunpack.c.h.b16 %v380
        %v993 = vunpack.c.l.b16 %v381
        %v994 = vunpack.c.l.b16 %v382
        %v995 = vunpack.c.h.b16 %v382
        %v996 = vunpack.c.l.b16 %v383
        %v997 = vunpack.c.h.b16 %v383
        %v998 = vunpack.c.l.b16 %v384
        %v999 = vunpack.c.h.b16 %v384
        %v1000 = vunpack.c.l.b16 %v385
        %v1001 = vunpack.c.h.b16 %v385
        %v1002 = vunpack.c.l.b16 %v386
        %v1003 = vunpack.c.l.b16 %v387
        %v1004 = vunpack.c.h.b16 %v387
        %v1005 = vunpack.c.l.b16 %v388
        %v1006 = vunpack.c.h.b16 %v388
        %v1007 = vunpack.c.l.b16 %v389
        %v1008 = vunpack.c.h.b16 %v389
        %v1009 = vunpack.c.l.b16 %v390
        %v1010 = vunpack.c.h.b16 %v390
        %v1011 = vunpack.c.l.b16 %v391
        %v1012 = vunpack.c.l.b16 %v392
        %v1013 = vunpack.c.h.b16 %v392
        %v1014 = vunpack.c.l.b16 %v393
        %v1015 = vunpack.c.h.b16 %v393
        %v1016 = vunpack.c.l.b16 %v394
        %v1017 = vunpack.c.h.b16 %v394
        %v1018 = vunpack.c.l.b16 %v395
        %v1019 = vunpack.c.h.b16 %v395
        %v1020 = vunpack.c.l.b16 %v396
        %v1021 = vunpack.c.l.b16 %v397
        %v1022 = vunpack.c.h.b16 %v397
        %v1023 = vunpack.c.l.b16 %v398
        %v1024 = vunpack.c.h.b16 %v398
        %v1025 = vunpack.c.l.b16 %v399
        %v1026 = vunpack.c.h.b16 %v399
        %v1027 = vunpack.c.l.b16 %v400
        %v1028 = vunpack.c.h.b16 %v400
        %v1029 = vunpack.c.l.b16 %v401
        %v1030 = vunpack.c.l.b16 %v402
        %v1031 = vunpack.c.h.b16 %v402
        %v1032 = vunpack.c.l.b16 %v403
        %v1033 = vunpack.c.h.b16 %v403
        %v1034 = vunpack.c.l.b16 %v404
        %v1035 = vunpack.c.h.b16 %v404
        %v1036 = vunpack.c.l.b16 %v405
        %v1037 = vunpack.c.h.b16 %v405
        %v1038 = vunpack.c.l.b16 %v406
        %v1039 = vunpack.c.l.b16 %v407
        %v1040 = vunpack.c.h.b16 %v407
        %v1041 = vunpack.c.l.b16 %v408
        %v1042 = vunpack.c.h.b16 %v408
        %v1043 = vunpack.c.l.b16 %v409
        %v1044 = vunpack.c.h.b16 %v409
        %v1045 = vunpack.c.l.b16 %v410
        %v1046 = vunpack.c.h.b16 %v410
        %v1047 = vunpack.c.l.b16 %v411
        %v1048 = vunpack.c.l.b16 %v412
        %v1049 = vunpack.c.h.b16 %v412
        %v1050 = vunpack.c.l.b16 %v413
        %v1051 = vunpack.c.h.b16 %v413
        %v1052 = vunpack.c.l.b16 %v414
        %v1053 = vunpack.c.h.b16 %v414
        %v1054 = vunpack.c.l.b16 %v415
        %v1055 = vunpack.c.h.b16 %v415
        %v1056 = vunpack.c.l.b16 %v416
        %v1057 = vunpack.c.l.b16 %v417
        %v1058 = vunpack.c.h.b16 %v417
        %v1059 = vunpack.c.l.b16 %v418
        %v1060 = vunpack.c.h.b16 %v418
        %v1061 = vunpack.c.l.b16 %v419
        %v1062 = vunpack.c.h.b16 %v419
        %v1063 = vunpack.c.l.b16 %v420
        %v1064 = vunpack.c.h.b16 %v420
        %v1065 = vunpack.c.l.b16 %v421
        %v1066 = vunpack.c.l.b16 %v422
        %v1067 = vunpack.c.h.b16 %v422
        %v1068 = vunpack.c.l.b16 %v423
        %v1069 = vunpack.c.h.b16 %v423
        %v1070 = vunpack.c.l.b16 %v424
        %v1071 = vunpack.c.h.b16 %v424
        %v1072 = vunpack.c.l.b16 %v425
        %v1073 = vunpack.c.h.b16 %v425
        %v1074 = vunpack.c.l.b16 %v426
        %v1075 = vunpack.c.l.b16 %v427
        %v1076 = vunpack.c.h.b16 %v427
        %v1077 = vunpack.c.l.b16 %v428
        %v1078 = vunpack.c.h.b16 %v428
        %v1079 = vunpack.c.l.b16 %v429
        %v1080 = vunpack.c.h.b16 %v429
        %v1081 = vunpack.c.l.b16 %v430
        %v1082 = vunpack.c.h.b16 %v430
        %v1083 = vunpack.c.l.b16 %v431
        %v1084 = vunpack.c.l.b16 %v432
        %v1085 = vunpack.c.h.b16 %v432
        %v1086 = vunpack.c.l.b16 %v433
        %v1087 = vunpack.c.h.b16 %v433
        %v1088 = vunpack.c.l.b16 %v434
        %v1089 = vunpack.c.h.b16 %v434
        %v1090 = vunpack.c.l.b16 %v435
        %v1091 = vunpack.c.h.b16 %v435
        %v1092 = vunpack.c.l.b16 %v436
        %v1093 = vunpack.c.l.b16 %v437
        %v1094 = vunpack.c.h.b16 %v437
        %v1095 = vunpack.c.l.b16 %v438
        %v1096 = vunpack.c.h.b16 %v438
        %v1097 = vunpack.c.l.b16 %v439
        %v1098 = vunpack.c.h.b16 %v439
        %v1099 = vunpack.c.l.b16 %v440
        %v1100 = vunpack.c.h.b16 %v440
        %v1101 = vunpack.c.l.b16 %v441
        %v1102 = vunpack.c.l.b16 %v442
        %v1103 = vunpack.c.h.b16 %v442
        %v1104 = vunpack.c.l.b16 %v443
        %v1105 = vunpack.c.h.b16 %v443
        %v1106 = vunpack.c.l.b16 %v444
        %v1107 = vunpack.c.h.b16 %v444
        %v1108 = vunpack.c.l.b16 %v445
        %v1109 = vunpack.c.h.b16 %v445
        %v1110 = vunpack.c.l.b16 %v446
        %v1111 = vunpack.c.l.b16 %v447
        %v1112 = vunpack.c.h.b16 %v447
        %v1113 = vunpack.c.l.b16 %v448
        %v1114 = vunpack.c.h.b16 %v448
        %v1115 = vunpack.c.l.b16 %v449
        %v1116 = vunpack.c.h.b16 %v449
        %v1117 = vunpack.c.l.b16 %v450
        %v1118 = vunpack.c.h.b16 %v450
        %v1119 = vunpack.c.l.b16 %v451
        %v1120 = vunpack.c.l.b16 %v452
        %v1121 = vunpack.c.h.b16 %v452
        %v1122 = vunpack.c.l.b16 %v453
        %v1123 = vunpack.c.h.b16 %v453
        %v1124 = vunpack.c.l.b16 %v454
        %v1125 = vunpack.c.h.b16 %v454
        %v1126 = vunpack.c.l.b16 %v455
        %v1127 = vunpack.c.h.b16 %v455
        %v1128 = vunpack.c.l.b16 %v456
        %v1129 = vunpack.c.l.b16 %v457
        %v1130 = vunpack.c.h.b16 %v457
        %v1131 = vunpack.c.l.b16 %v458
        %v1132 = vunpack.c.h.b16 %v458
        %v1133 = vunpack.c.l.b16 %v459
        %v1134 = vunpack.c.h.b16 %v459
        %v1135 = vunpack.c.l.b16 %v460
        %v1136 = vunpack.c.h.b16 %v460
        %v1137 = vunpack.c.l.b16 %v461
        %v1138 = vunpack.c.l.b16 %v462
        %v1139 = vunpack.c.h.b16 %v462
        %v1140 = vunpack.c.l.b16 %v463
        %v1141 = vunpack.c.h.b16 %v463
        %v1142 = vunpack.c.l.b16 %v464
        %v1143 = vunpack.c.h.b16 %v464
        %v1144 = vunpack.c.l.b16 %v465
        %v1145 = vunpack.c.h.b16 %v465
        %v1146 = vunpack.c.l.b16 %v466
        %v1147 = vunpack.c.l.b16 %v467
        %v1148 = vunpack.c.h.b16 %v467
        %v1149 = vunpack.c.l.b16 %v468
        %v1150 = vunpack.c.h.b16 %v468
        %v1151 = vunpack.c.l.b16 %v469
        %v1152 = vunpack.c.h.b16 %v469
        %v1153 = vunpack.c.l.b16 %v470
        %v1154 = vunpack.c.h.b16 %v470
        %v1155 = vunpack.c.l.b16 %v471
        %v1156 = vunpack.c.l.b16 %v472
        %v1157 = vunpack.c.h.b16 %v472
        %v1158 = vunpack.c.l.b16 %v473
        %v1159 = vunpack.c.h.b16 %v473
        %v1160 = vunpack.c.l.b16 %v474
        %v1161 = vunpack.c.h.b16 %v474
        %v1162 = vunpack.c.l.b16 %v475
        %v1163 = vunpack.c.h.b16 %v475
        %v1164 = vunpack.c.l.b16 %v476
        %v1165 = vunpack.c.l.b16 %v477
        %v1166 = vunpack.c.h.b16 %v477
        %v1167 = vunpack.c.l.b16 %v478
        %v1168 = vunpack.c.h.b16 %v478
        %v1169 = vunpack.c.l.b16 %v479
        %v1170 = vunpack.c.h.b16 %v479
        %v1171 = vunpack.c.l.b16 %v480
        %v1172 = vunpack.c.h.b16 %v480
        %v1173 = vunpack.c.l.b16 %v481
        %v1174 = vunpack.c.l.b16 %v482
        %v1175 = vunpack.c.h.b16 %v482
        %v1176 = vunpack.c.l.b16 %v483
        %v1177 = vunpack.c.h.b16 %v483
        %v1178 = vunpack.c.l.b16 %v484
        %v1179 = vunpack.c.h.b16 %v484
        %v1180 = vunpack.c.l.b16 %v485
        %v1181 = vunpack.c.h.b16 %v485
        %v1182 = vunpack.c.l.b16 %v486
        %v1183 = vunpack.c.l.b16 %v487
        %v1184 = vunpack.c.h.b16 %v487
        %v1185 = vunpack.c.l.b16 %v488
        %v1186 = vunpack.c.h.b16 %v488
        %v1187 = vunpack.c.l.b16 %v489
        %v1188 = vunpack.c.h.b16 %v489
        %v1189 = vunpack.c.l.b16 %v490
        %v1190 = vunpack.c.h.b16 %v490
        %v1191 = vunpack.c.l.b16 %v491
        %v1192 = vunpack.c.l.b16 %v492
        %v1193 = vunpack.c.h.b16 %v492
        %v1194 = vunpack.c.l.b16 %v493
        %v1195 = vunpack.c.h.b16 %v493
        %v1196 = vunpack.c.l.b16 %v494
        %v1197 = vunpack.c.h.b16 %v494
        %v1198 = vunpack.c.l.b16 %v495
        %v1199 = vunpack.c.h.b16 %v495
        %v1200 = vunpack.c.l.b16 %v496
        %v1201 = vpack.c.b16 %v778, %v769
        %v1202 = vpack.c.b16 %v779, %v770
        %v1203 = vpack.c.b16 %v780, %v771
        %v1204 = vpack.c.b16 %v781, %v772
        %v1205 = vpack.c.b16 %v782, %v773
        %v1206 = vpack.c.b16 %v783, %v774
        %v1207 = vpack.c.b16 %v784, %v775
        %v1208 = vpack.c.b16 %v785, %v776
        %v1209 = vpack.c.b16 %v786, %v777
        %v1210 = vpack.c.b16 %v796, %v787
        %v1211 = vpack.c.b16 %v797, %v788
        %v1212 = vpack.c.b16 %v798, %v789
        %v1213 = vpack.c.b16 %v799, %v790
        %v1214 = vpack.c.b16 %v800, %v791
        %v1215 = vpack.c.b16 %v801, %v792
        %v1216 = vpack.c.b16 %v802, %v793
        %v1217 = vpack.c.b16 %v803, %v794
        %v1218 = vpack.c.b16 %v804, %v795
        %v1219 = vpack.c.b16 %v814, %v805
        %v1220 = vpack.c.b16 %v815, %v806
        %v1221 = vpack.c.b16 %v816, %v807
        %v1222 = vpack.c.b16 %v817, %v808
        %v1223 = vpack.c.b16 %v818, %v809
        %v1224 = vpack.c.b16 %v819, %v810
        %v1225 = vpack.c.b16 %v820, %v811
        %v1226 = vpack.c.b16 %v821, %v812
        %v1227 = vpack.c.b16 %v822, %v813
        %v1228 = vpack.c.b16 %v832, %v823
        %v1229 = vpack.c.b16 %v833, %v824
        %v1230 = vpack.c.b16 %v834, %v825
        %v1231 = vpack.c.b16 %v835, %v826
        %v1232 = vpack.c.b16 %v836, %v827
        %v1233 = vpack.c.b16 %v837, %v828
        %v1234 = vpack.c.b16 %v838, %v829
        %v1235 = vpack.c.b16 %v839, %v830
        %v1236 = vpack.c.b16 %v840, %v831
        %v1237 = vpack.c.b16 %v850, %v841
        %v1238 = vpack.c.b16 %v851, %v842
        %v1239 = vpack.c.b16 %v852, %v843
        %v1240 = vpack.c.b16 %v853, %v844
        %v1241 = vpack.c.b16 %v854, %v845
        %v1242 = vpack.c.b16 %v855, %v846
        %v1243 = vpack.c.b16 %v856, %v847
        %v1244 = vpack.c.b16 %v857, %v848
        %v1245 = vpack.c.b16 %v858, %v849
        %v1246 = vpack.c.b16 %v868, %v859
        %v1247 = vpack.c.b16 %v869, %v860
        %v1248 = vpack.c.b16 %v870, %v861
        %v1249 = vpack.c.b16 %v871, %v862
        %v1250 = vpack.c.b16 %v872, %v863
        %v1251 = vpack.c.b16 %v873, %v864
        %v1252 = vpack.c.b16 %v874, %v865
        %v1253 = vpack.c.b16 %v875, %v866
        %v1254 = vpack.c.b16 %v876, %v867
        %v1255 = vpack.c.b16 %v886, %v877
        %v1256 = vpack.c.b16 %v887, %v878
        %v1257 = vpack.c.b16 %v888, %v879
        %v1258 = vpack.c.b16 %v889, %v880
        %v1259 = vpack.c.b16 %v890, %v881
        %v1260 = vpack.c.b16 %v891, %v882
        %v1261 = vpack.c.b16 %v892, %v883
        %v1262 = vpack.c.b16 %v893, %v884
        %v1263 = vpack.c.b16 %v894, %v885
        %v1264 = vpack.c.b16 %v904, %v895
        %v1265 = vpack.c.b16 %v905, %v896
        %v1266 = vpack.c.b16 %v906, %v897
        %v1267 = vpack.c.b16 %v907, %v898
        %v1268 = vpack.c.b16 %v908, %v899
        %v1269 = vpack.c.b16 %v909, %v900
        %v1270 = vpack.c.b16 %v910, %v901
        %v1271 = vpack.c.b16 %v911, %v902
        %v1272 = vpack.c.b16 %v912, %v903
        %v1273 = vpack.c.b16 %v922, %v913
        %v1274 = vpack.c.b16 %v923, %v914
        %v1275 = vpack.c.b16 %v924, %v915
        %v1276 = vpack.c.b16 %v925, %v916
        %v1277 = vpack.c.b16 %v926, %v917
        %v1278 = vpack.c.b16 %v927, %v918
        %v1279 = vpack.c.b16 %v928, %v919
        %v1280 = vpack.c.b16 %v929, %v920
        %v1281 = vpack.c.b16 %v930, %v921
        %v1282 = vpack.c.b16 %v940, %v931
        %v1283 = vpack.c.b16 %v941, %v932
        %v1284 = vpack.c.b16 %v942, %v933
        %v1285 = vpack.c.b16 %v943, %v934
        %v1286 = vpack.c.b16 %v944, %v935
        %v1287 = vpack.c.b16 %v945, %v936
        %v1288 = vpack.c.b16 %v946, %v937
        %v1289 = vpack.c.b16 %v947, %v938
        %v1290 = vpack.c.b16 %v948, %v939
        %v1291 = vpack.c.b16 %v958, %v949
        %v1292 = vpack.c.b16 %v959, %v950
        %v1293 = vpack.c.b16 %v960, %v951
        %v1294 = vpack.c.b16 %v961, %v952
        %v1295 = vpack.c.b16 %v962, %v953
        %v1296 = vpack.c.b16 %v963, %v954
        %v1297 = vpack.c.b16 %v964, %v955
        %v1298 = vpack.c.b16 %v965, %v956
        %v1299 = vpack.c.b16 %v966, %v957
        %v1300 = vpack.c.b16 %v976, %v967
        %v1301 = vpack.c.b16 %v977, %v968
        %v1302 = vpack.c.b16 %v978, %v969
        %v1303 = vpack.c.b16 %v979, %v970
        %v1304 = vpack.c.b16 %v980, %v971
        %v1305 = vpack.c.b16 %v981, %v972
        %v1306 = vpack.c.b16 %v982, %v973
        %v1307 = vpack.c.b16 %v983, %v974
        %v1308 = vpack.c.b16 %v984, %v975
        %v1309 = vpack.c.b16 %v994, %v985
        %v1310 = vpack.c.b16 %v995, %v986
        %v1311 = vpack.c.b16 %v996, %v987
        %v1312 = vpack.c.b16 %v997, %v988
        %v1313 = vpack.c.b16 %v998, %v989
        %v1314 = vpack.c.b16 %v999, %v990
        %v1315 = vpack.c.b16 %v1000, %v991
        %v1316 = vpack.c.b16 %v1001, %v992
        %v1317 = vpack.c.b16 %v1002, %v993
        %v1318 = vpack.c.b16 %v1012, %v1003
        %v1319 = vpack.c.b16 %v1013, %v1004
        %v1320 = vpack.c.b16 %v1014, %v1005
        %v1321 = vpack.c.b16 %v1015, %v1006
        %v1322 = vpack.c.b16 %v1016, %v1007
        %v1323 = vpack.c.b16 %v1017, %v1008
        %v1324 = vpack.c.b16 %v1018, %v1009
        %v1325 = vpack.c.b16 %v1019, %v1010
        %v1326 = vpack.c.b16 %v1020, %v1011
        %v1327 = vpack.c.b16 %v1030, %v1021
        %v1328 = vpack.c.b16 %v1031, %v1022
        %v1329 = vpack.c.b16 %v1032, %v1023
        %v1330 = vpack.c.b16 %v1033, %v1024
        %v1331 = vpack.c.b16 %v1034, %v1025
        %v1332 = vpack.c.b16 %v1035, %v1026
        %v1333 = vpack.c.b16 %v1036, %v1027
        %v1334 = vpack.c.b16 %v1037, %v1028
        %v1335 = vpack.c.b16 %v1038, %v1029
        %v1336 = vpack.c.b16 %v1048, %v1039
        %v1337 = vpack.c.b16 %v1049, %v1040
        %v1338 = vpack.c.b16 %v1050, %v1041
        %v1339 = vpack.c.b16 %v1051, %v1042
        %v1340 = vpack.c.b16 %v1052, %v1043
        %v1341 = vpack.c.b16 %v1053, %v1044
        %v1342 = vpack.c.b16 %v1054, %v1045
        %v1343 = vpack.c.b16 %v1055, %v1046
        %v1344 = vpack.c.b16 %v1056, %v1047
        %v1345 = vpack.c.b16 %v1066, %v1057
        %v1346 = vpack.c.b16 %v1067, %v1058
        %v1347 = vpack.c.b16 %v1068, %v1059
        %v1348 = vpack.c.b16 %v1069, %v1060
        %v1349 = vpack.c.b16 %v1070, %v1061
        %v1350 = vpack.c.b16 %v1071, %v1062
        %v1351 = vpack.c.b16 %v1072, %v1063
        %v1352 = vpack.c.b16 %v1073, %v1064
        %v1353 = vpack.c.b16 %v1074, %v1065
        %v1354 = vpack.c.b16 %v1084, %v1075
        %v1355 = vpack.c.b16 %v1085, %v1076
        %v1356 = vpack.c.b16 %v1086, %v1077
        %v1357 = vpack.c.b16 %v1087, %v1078
        %v1358 = vpack.c.b16 %v1088, %v1079
        %v1359 = vpack.c.b16 %v1089, %v1080
        %v1360 = vpack.c.b16 %v1090, %v1081
        %v1361 = vpack.c.b16 %v1091, %v1082
        %v1362 = vpack.c.b16 %v1092, %v1083
        %v1363 = vpack.c.b16 %v1102, %v1093
        %v1364 = vpack.c.b16 %v1103, %v1094
        %v1365 = vpack.c.b16 %v1104, %v1095
        %v1366 = vpack.c.b16 %v1105, %v1096
        %v1367 = vpack.c.b16 %v1106, %v1097
        %v1368 = vpack.c.b16 %v1107, %v1098
        %v1369 = vpack.c.b16 %v1108, %v1099
        %v1370 = vpack.c.b16 %v1109, %v1100
        %v1371 = vpack.c.b16 %v1110, %v1101
        %v1372 = vpack.c.b16 %v1120, %v1111
        %v1373 = vpack.c.b16 %v1121, %v1112
        %v1374 = vpack.c.b16 %v1122, %v1113
        %v1375 = vpack.c.b16 %v1123, %v1114
        %v1376 = vpack.c.b16 %v1124, %v1115
        %v1377 = vpack.c.b16 %v1125, %v1116
        %v1378 = vpack.c.b16 %v1126, %v1117
        %v1379 = vpack.c.b16 %v1127, %v1118
        %v1380 = vpack.c.b16 %v1128, %v1119
        %v1381 = vpack.c.b16 %v1138, %v1129
        %v1382 = vpack.c.b16 %v1139, %v1130
        %v1383 = vpack.c.b16 %v1140, %v1131
        %v1384 = vpack.c.b16 %v1141, %v1132
        %v1385 = vpack.c.b16 %v1142, %v1133
        %v1386 = vpack.c.b16 %v1143, %v1134
        %v1387 = vpack.c.b16 %v1144, %v1135
        %v1388 = vpack.c.b16 %v1145, %v1136
        %v1389 = vpack.c.b16 %v1146, %v1137
        %v1390 = vpack.c.b16 %v1156, %v1147
        %v1391 = vpack.c.b16 %v1157, %v1148
        %v1392 = vpack.c.b16 %v1158, %v1149
        %v1393 = vpack.c.b16 %v1159, %v1150
        %v1394 = vpack.c.b16 %v1160, %v1151
        %v1395 = vpack.c.b16 %v1161, %v1152
        %v1396 = vpack.c.b16 %v1162, %v1153
        %v1397 = vpack.c.b16 %v1163, %v1154
        %v1398 = vpack.c.b16 %v1164, %v1155
        %v1399 = vpack.c.b16 %v1174, %v1165
        %v1400 = vpack.c.b16 %v1175, %v1166
        %v1401 = vpack.c.b16 %v1176, %v1167
        %v1402 = vpack.c.b16 %v1177, %v1168
        %v1403 = vpack.c.b16 %v1178, %v1169
        %v1404 = vpack.c.b16 %v1179, %v1170
        %v1405 = vpack.c.b16 %v1180, %v1171
        %v1406 = vpack.c.b16 %v1181, %v1172
        %v1407 = vpack.c.b16 %v1182, %v1173
        %v1408 = vpack.c.b16 %v1192, %v1183
        %v1409 = vpack.c.b16 %v1193, %v1184
        %v1410 = vpack.c.b16 %v1194, %v1185
        %v1411 = vpack.c.b16 %v1195, %v1186
        %v1412 = vpack.c.b16 %v1196, %v1187
        %v1413 = vpack.c.b16 %v1197, %v1188
        %v1414 = vpack.c.b16 %v1198, %v1189
        %v1415 = vpack.c.b16 %v1199, %v1190
        %v1416 = vpack.c.b16 %v1200, %v1191
        %1633 = vmatprep.subr.bf16.mxu0 %v1202
        %1634 = vmatpush1.bf16.msra.mxu0 %v1201
        %1635 = vmatprep.subr.bf16.mxu0 %v1211
        %1636 = vmatpush1.bf16.msra.mxu0 %v1210
        %1637 = vmatprep.subr.bf16.mxu0 %v1220
        %1638 = vmatpush1.bf16.msra.mxu0 %v1219
        %1639 = vmatprep.subr.bf16.mxu0 %v1229
        %1640 = vmatpush1.bf16.msra.mxu0 %v1228
        %1641 = vmatprep.subr.bf16.mxu0 %v1238
        %1642 = vmatpush1.bf16.msra.mxu0 %v1237
        %1643 = vmatprep.subr.bf16.mxu0 %v1247
        %1644 = vmatpush1.bf16.msra.mxu0 %v1246
        %1645 = vmatprep.subr.bf16.mxu0 %v1256
        %1646 = vmatpush1.bf16.msra.mxu0 %v1255
        %1647 = vmatprep.subr.bf16.mxu0 %v1265
        %1648 = vmatpush1.bf16.msra.mxu0 %v1264
        %1649 = vmatprep.subr.bf16.mxu0 %v1274
        %1650 = vmatpush1.bf16.msra.mxu0 %v1273
        %1651 = vmatprep.subr.bf16.mxu0 %v1283
        %1652 = vmatpush1.bf16.msra.mxu0 %v1282
        %1653 = vmatprep.subr.bf16.mxu0 %v1292
        %1654 = vmatpush1.bf16.msra.mxu0 %v1291
        %1655 = vmatprep.subr.bf16.mxu0 %v1301
        %1656 = vmatpush1.bf16.msra.mxu0 %v1300
        %1657 = vmatprep.subr.bf16.mxu0 %v1310
        %1658 = vmatpush1.bf16.msra.mxu0 %v1309
        %1659 = vmatprep.subr.bf16.mxu0 %v1319
        %1660 = vmatpush1.bf16.msra.mxu0 %v1318
        %1661 = vmatprep.subr.bf16.mxu0 %v1328
        %1662 = vmatpush1.bf16.msra.mxu0 %v1327
        %1663 = vmatprep.subr.bf16.mxu0 %v1337
        %1664 = vmatpush1.bf16.msra.mxu0 %v1336
        %1665 = vmatprep.mubr.bf16.mxu0 %v518
        %1666 = vmatmul.mubr.bf16.gmra.mrb[0].mxu0 %v517
        %v1667 = vpop.f32.mrb[0].mxu0
        %v1668 = vadd.f32 0.0, %v1667
        %v1669 = vpop.f32.mrb[0].mxu0
        %v1670 = vadd.f32 0.0, %v1669
        %v1671 = vpop.f32.mrb[0].mxu0
        %v1672 = vadd.f32 0.0, %v1671
        %v1673 = vpop.f32.mrb[0].mxu0
        %v1674 = vadd.f32 0.0, %v1673
        %1675 = vmatprep.mubr.bf16.mxu0 %v521
        %1676 = vmatmul.mubr.bf16.gmra.mrb[0].mxu0 %v520
        %v1677 = vpop.f32.mrb[0].mxu0
        %v1678 = vadd.f32 0.0, %v1677
        %v1679 = vpop.f32.mrb[0].mxu0
        %v1680 = vadd.f32 0.0, %v1679
        %v1681 = vpop.f32.mrb[0].mxu0
        %v1682 = vadd.f32 0.0, %v1681
        %v1683 = vpop.f32.mrb[0].mxu0
        %v1684 = vadd.f32 0.0, %v1683
        %1685 = vdwg.mxu0
        %1686 = vmatprep.subr.bf16.mxu0 %v1346
        %1687 = vmatpush1.bf16.msra.mxu0 %v1345
        %1688 = vmatprep.subr.bf16.mxu0 %v1355
        %1689 = vmatpush1.bf16.msra.mxu0 %v1354
        %1690 = vmatprep.subr.bf16.mxu0 %v1364
        %1691 = vmatpush1.bf16.msra.mxu0 %v1363
        %1692 = vmatprep.subr.bf16.mxu0 %v1373
        %1693 = vmatpush1.bf16.msra.mxu0 %v1372
        %1694 = vmatprep.subr.bf16.mxu0 %v1382
        %1695 = vmatpush1.bf16.msra.mxu0 %v1381
        %1696 = vmatprep.subr.bf16.mxu0 %v1391
        %1697 = vmatpush1.bf16.msra.mxu0 %v1390
        %1698 = vmatprep.subr.bf16.mxu0 %v1400
        %1699 = vmatpush1.bf16.msra.mxu0 %v1399
        %1700 = vmatprep.subr.bf16.mxu0 %v1409
        %1701 = vmatpush1.bf16.msra.mxu0 %v1408
        %1702 = vmatprep.subr.bf16.mxu0 0
        %1703 = vmatpush1.bf16.msra.mxu0 0
        %1704 = vmatprep.subr.bf16.mxu0 0
        %1705 = vmatpush1.bf16.msra.mxu0 0
        %1706 = vmatprep.subr.bf16.mxu0 0
        %1707 = vmatpush1.bf16.msra.mxu0 0
        %1708 = vmatprep.subr.bf16.mxu0 0
        %1709 = vmatpush1.bf16.msra.mxu0 0
        %1710 = vmatprep.subr.bf16.mxu0 0
        %1711 = vmatpush1.bf16.msra.mxu0 0
        %1712 = vmatprep.subr.bf16.mxu0 0
        %1713 = vmatpush1.bf16.msra.mxu0 0
        %1714 = vmatprep.subr.bf16.mxu0 0
        %1715 = vmatpush1.bf16.msra.mxu0 0
        %1716 = vmatprep.subr.bf16.mxu0 0
        %1717 = vmatpush1.bf16.msra.mxu0 0
        %1718 = vmatprep.mubr.bf16.mxu0 0
        %1719 = vmatmul.mubr.bf16.gmra.mrb[0].mxu0 %v519
        %v1720 = vpop.f32.mrb[0].mxu0
        %v1721 = vadd.f32 %v1668, %v1720
        %v1722 = vpop.f32.mrb[0].mxu0
        %v1723 = vadd.f32 %v1670, %v1722
        %v1724 = vpop.f32.mrb[0].mxu0
        %v1725 = vadd.f32 %v1672, %v1724
        %v1726 = vpop.f32.mrb[0].mxu0
        %v1727 = vadd.f32 %v1674, %v1726
        %1728 = vmatprep.mubr.bf16.mxu0 0
        %1729 = vmatmul.mubr.bf16.gmra.mrb[0].mxu0 %v522
        %v1730 = vpop.f32.mrb[0].mxu0
        %v1731 = vadd.f32 %v1678, %v1730
        %v1732 = vpop.f32.mrb[0].mxu0
        %v1733 = vadd.f32 %v1680, %v1732
        %v1734 = vpop.f32.mrb[0].mxu0
        %v1735 = vadd.f32 %v1682, %v1734
        %v1736 = vpop.f32.mrb[0].mxu0
        %v1737 = vadd.f32 %v1684, %v1736
        %1738 = vdwg.mxu0
        %1739 = vmatprep.subr.bf16.mxu0 %v1204
        %1740 = vmatpush1.bf16.msra.mxu0 %v1203
        %1741 = vmatprep.subr.bf16.mxu0 %v1213
        %1742 = vmatpush1.bf16.msra.mxu0 %v1212
        %1743 = vmatprep.subr.bf16.mxu0 %v1222
        %1744 = vmatpush1.bf16.msra.mxu0 %v1221
        %1745 = vmatprep.subr.bf16.mxu0 %v1231
        %1746 = vmatpush1.bf16.msra.mxu0 %v1230
        %1747 = vmatprep.subr.bf16.mxu0 %v1240
        %1748 = vmatpush1.bf16.msra.mxu0 %v1239
        %1749 = vmatprep.subr.bf16.mxu0 %v1249
        %1750 = vmatpush1.bf16.msra.mxu0 %v1248
        %1751 = vmatprep.subr.bf16.mxu0 %v1258
        %1752 = vmatpush1.bf16.msra.mxu0 %v1257
        %1753 = vmatprep.subr.bf16.mxu0 %v1267
        %1754 = vmatpush1.bf16.msra.mxu0 %v1266
        %1755 = vmatprep.subr.bf16.mxu0 %v1276
        %1756 = vmatpush1.bf16.msra.mxu0 %v1275
        %1757 = vmatprep.subr.bf16.mxu0 %v1285
        %1758 = vmatpush1.bf16.msra.mxu0 %v1284
        %1759 = vmatprep.subr.bf16.mxu0 %v1294
        %1760 = vmatpush1.bf16.msra.mxu0 %v1293
        %1761 = vmatprep.subr.bf16.mxu0 %v1303
        %1762 = vmatpush1.bf16.msra.mxu0 %v1302
        %1763 = vmatprep.subr.bf16.mxu0 %v1312
        %1764 = vmatpush1.bf16.msra.mxu0 %v1311
        %1765 = vmatprep.subr.bf16.mxu0 %v1321
        %1766 = vmatpush1.bf16.msra.mxu0 %v1320
        %1767 = vmatprep.subr.bf16.mxu0 %v1330
        %1768 = vmatpush1.bf16.msra.mxu0 %v1329
        %1769 = vmatprep.subr.bf16.mxu0 %v1339
        %1770 = vmatpush1.bf16.msra.mxu0 %v1338
        %1771 = vmatprep.mubr.bf16.mxu0 %v518
        %1772 = vmatmul.mubr.bf16.gmra.mrb[0].mxu0 %v517
        %v1773 = vpop.f32.mrb[0].mxu0
        %v1774 = vadd.f32 0.0, %v1773
        %v1775 = vpop.f32.mrb[0].mxu0
        %v1776 = vadd.f32 0.0, %v1775
        %v1777 = vpop.f32.mrb[0].mxu0
        %v1778 = vadd.f32 0.0, %v1777
        %v1779 = vpop.f32.mrb[0].mxu0
        %v1780 = vadd.f32 0.0, %v1779
        %1781 = vmatprep.mubr.bf16.mxu0 %v521
        %1782 = vmatmul.mubr.bf16.gmra.mrb[0].mxu0 %v520
        %v1783 = vpop.f32.mrb[0].mxu0
        %v1784 = vadd.f32 0.0, %v1783
        %v1785 = vpop.f32.mrb[0].mxu0
        %v1786 = vadd.f32 0.0, %v1785
        %v1787 = vpop.f32.mrb[0].mxu0
        %v1788 = vadd.f32 0.0, %v1787
        %v1789 = vpop.f32.mrb[0].mxu0
        %v1790 = vadd.f32 0.0, %v1789
        %1791 = vdwg.mxu0
        %1792 = vmatprep.subr.bf16.mxu0 %v1348
        %1793 = vmatpush1.bf16.msra.mxu0 %v1347
        %1794 = vmatprep.subr.bf16.mxu0 %v1357
        %1795 = vmatpush1.bf16.msra.mxu0 %v1356
        %1796 = vmatprep.subr.bf16.mxu0 %v1366
        %1797 = vmatpush1.bf16.msra.mxu0 %v1365
        %1798 = vmatprep.subr.bf16.mxu0 %v1375
        %1799 = vmatpush1.bf16.msra.mxu0 %v1374
        %1800 = vmatprep.subr.bf16.mxu0 %v1384
        %1801 = vmatpush1.bf16.msra.mxu0 %v1383
        %1802 = vmatprep.subr.bf16.mxu0 %v1393
        %1803 = vmatpush1.bf16.msra.mxu0 %v1392
        %1804 = vmatprep.subr.bf16.mxu0 %v1402
        %1805 = vmatpush1.bf16.msra.mxu0 %v1401
        %1806 = vmatprep.subr.bf16.mxu0 %v1411
        %1807 = vmatpush1.bf16.msra.mxu0 %v1410
        %1808 = vmatprep.subr.bf16.mxu0 0
        %1809 = vmatpush1.bf16.msra.mxu0 0
        %1810 = vmatprep.subr.bf16.mxu0 0
        %1811 = vmatpush1.bf16.msra.mxu0 0
        %1812 = vmatprep.subr.bf16.mxu0 0
        %1813 = vmatpush1.bf16.msra.mxu0 0
        %1814 = vmatprep.subr.bf16.mxu0 0
        %1815 = vmatpush1.bf16.msra.mxu0 0
        %1816 = vmatprep.subr.bf16.mxu0 0
        %1817 = vmatpush1.bf16.msra.mxu0 0
        %1818 = vmatprep.subr.bf16.mxu0 0
        %1819 = vmatpush1.bf16.msra.mxu0 0
        %1820 = vmatprep.subr.bf16.mxu0 0
        %1821 = vmatpush1.bf16.msra.mxu0 0
        %1822 = vmatprep.subr.bf16.mxu0 0
        %1823 = vmatpush1.bf16.msra.mxu0 0
        %1824 = vmatprep.mubr.bf16.mxu0 0
        %1825 = vmatmul.mubr.bf16.gmra.mrb[0].mxu0 %v519
        %v1826 = vpop.f32.mrb[0].mxu0
        %v1827 = vadd.f32 %v1774, %v1826
        %v1828 = vpop.f32.mrb[0].mxu0
        %v1829 = vadd.f32 %v1776, %v1828
        %v1830 = vpop.f32.mrb[0].mxu0
        %v1831 = vadd.f32 %v1778, %v1830
        %v1832 = vpop.f32.mrb[0].mxu0
        %v1833 = vadd.f32 %v1780, %v1832
        %1834 = vmatprep.mubr.bf16.mxu0 0
        %1835 = vmatmul.mubr.bf16.gmra.mrb[0].mxu0 %v522
        %v1836 = vpop.f32.mrb[0].mxu0
        %v1837 = vadd.f32 %v1784, %v1836
        %v1838 = vpop.f32.mrb[0].mxu0
        %v1839 = vadd.f32 %v1786, %v1838
        %v1840 = vpop.f32.mrb[0].mxu0
        %v1841 = vadd.f32 %v1788, %v1840
        %v1842 = vpop.f32.mrb[0].mxu0
        %v1843 = vadd.f32 %v1790, %v1842
        %1844 = vdwg.mxu0
        %1845 = vmatprep.subr.bf16.mxu0 %v1206
        %1846 = vmatpush1.bf16.msra.mxu0 %v1205
        %1847 = vmatprep.subr.bf16.mxu0 %v1215
        %1848 = vmatpush1.bf16.msra.mxu0 %v1214
        %1849 = vmatprep.subr.bf16.mxu0 %v1224
        %1850 = vmatpush1.bf16.msra.mxu0 %v1223
        %1851 = vmatprep.subr.bf16.mxu0 %v1233
        %1852 = vmatpush1.bf16.msra.mxu0 %v1232
        %1853 = vmatprep.subr.bf16.mxu0 %v1242
        %1854 = vmatpush1.bf16.msra.mxu0 %v1241
        %1855 = vmatprep.subr.bf16.mxu0 %v1251
        %1856 = vmatpush1.bf16.msra.mxu0 %v1250
        %1857 = vmatprep.subr.bf16.mxu0 %v1260
        %1858 = vmatpush1.bf16.msra.mxu0 %v1259
        %1859 = vmatprep.subr.bf16.mxu0 %v1269
        %1860 = vmatpush1.bf16.msra.mxu0 %v1268
        %1861 = vmatprep.subr.bf16.mxu0 %v1278
        %1862 = vmatpush1.bf16.msra.mxu0 %v1277
        %1863 = vmatprep.subr.bf16.mxu0 %v1287
        %1864 = vmatpush1.bf16.msra.mxu0 %v1286
        %1865 = vmatprep.subr.bf16.mxu0 %v1296
        %1866 = vmatpush1.bf16.msra.mxu0 %v1295
        %1867 = vmatprep.subr.bf16.mxu0 %v1305
        %1868 = vmatpush1.bf16.msra.mxu0 %v1304
        %1869 = vmatprep.subr.bf16.mxu0 %v1314
        %1870 = vmatpush1.bf16.msra.mxu0 %v1313
        %1871 = vmatprep.subr.bf16.mxu0 %v1323
        %1872 = vmatpush1.bf16.msra.mxu0 %v1322
        %1873 = vmatprep.subr.bf16.mxu0 %v1332
        %1874 = vmatpush1.bf16.msra.mxu0 %v1331
        %1875 = vmatprep.subr.bf16.mxu0 %v1341
        %1876 = vmatpush1.bf16.msra.mxu0 %v1340
        %1877 = vmatprep.mubr.bf16.mxu0 %v518
        %1878 = vmatmul.mubr.bf16.gmra.mrb[0].mxu0 %v517
        %v1879 = vpop.f32.mrb[0].mxu0
        %v1880 = vadd.f32 0.0, %v1879
        %v1881 = vpop.f32.mrb[0].mxu0
        %v1882 = vadd.f32 0.0, %v1881
        %v1883 = vpop.f32.mrb[0].mxu0
        %v1884 = vadd.f32 0.0, %v1883
        %v1885 = vpop.f32.mrb[0].mxu0
        %v1886 = vadd.f32 0.0, %v1885
        %1887 = vmatprep.mubr.bf16.mxu0 %v521
        %1888 = vmatmul.mubr.bf16.gmra.mrb[0].mxu0 %v520
        %v1889 = vpop.f32.mrb[0].mxu0
        %v1890 = vadd.f32 0.0, %v1889
        %v1891 = vpop.f32.mrb[0].mxu0
        %v1892 = vadd.f32 0.0, %v1891
        %v1893 = vpop.f32.mrb[0].mxu0
        %v1894 = vadd.f32 0.0, %v1893
        %v1895 = vpop.f32.mrb[0].mxu0
        %v1896 = vadd.f32 0.0, %v1895
        %1897 = vdwg.mxu0
        %1898 = vmatprep.subr.bf16.mxu0 %v1350
        %1899 = vmatpush1.bf16.msra.mxu0 %v1349
        %1900 = vmatprep.subr.bf16.mxu0 %v1359
        %1901 = vmatpush1.bf16.msra.mxu0 %v1358
        %1902 = vmatprep.subr.bf16.mxu0 %v1368
        %1903 = vmatpush1.bf16.msra.mxu0 %v1367
        %1904 = vmatprep.subr.bf16.mxu0 %v1377
        %1905 = vmatpush1.bf16.msra.mxu0 %v1376
        %1906 = vmatprep.subr.bf16.mxu0 %v1386
        %1907 = vmatpush1.bf16.msra.mxu0 %v1385
        %1908 = vmatprep.subr.bf16.mxu0 %v1395
        %1909 = vmatpush1.bf16.msra.mxu0 %v1394
        %1910 = vmatprep.subr.bf16.mxu0 %v1404
        %1911 = vmatpush1.bf16.msra.mxu0 %v1403
        %1912 = vmatprep.subr.bf16.mxu0 %v1413
        %1913 = vmatpush1.bf16.msra.mxu0 %v1412
        %1914 = vmatprep.subr.bf16.mxu0 0
        %1915 = vmatpush1.bf16.msra.mxu0 0
        %1916 = vmatprep.subr.bf16.mxu0 0
        %1917 = vmatpush1.bf16.msra.mxu0 0
        %1918 = vmatprep.subr.bf16.mxu0 0
        %1919 = vmatpush1.bf16.msra.mxu0 0
        %1920 = vmatprep.subr.bf16.mxu0 0
        %1921 = vmatpush1.bf16.msra.mxu0 0
        %1922 = vmatprep.subr.bf16.mxu0 0
        %1923 = vmatpush1.bf16.msra.mxu0 0
        %1924 = vmatprep.subr.bf16.mxu0 0
        %1925 = vmatpush1.bf16.msra.mxu0 0
        %1926 = vmatprep.subr.bf16.mxu0 0
        %1927 = vmatpush1.bf16.msra.mxu0 0
        %1928 = vmatprep.subr.bf16.mxu0 0
        %1929 = vmatpush1.bf16.msra.mxu0 0
        %1930 = vmatprep.mubr.bf16.mxu0 0
        %1931 = vmatmul.mubr.bf16.gmra.mrb[0].mxu0 %v519
        %v1932 = vpop.f32.mrb[0].mxu0
        %v1933 = vadd.f32 %v1880, %v1932
        %v1934 = vpop.f32.mrb[0].mxu0
        %v1935 = vadd.f32 %v1882, %v1934
        %v1936 = vpop.f32.mrb[0].mxu0
        %v1937 = vadd.f32 %v1884, %v1936
        %v1938 = vpop.f32.mrb[0].mxu0
        %v1939 = vadd.f32 %v1886, %v1938
        %1940 = vmatprep.mubr.bf16.mxu0 0
        %1941 = vmatmul.mubr.bf16.gmra.mrb[0].mxu0 %v522
        %v1942 = vpop.f32.mrb[0].mxu0
        %v1943 = vadd.f32 %v1890, %v1942
        %v1944 = vpop.f32.mrb[0].mxu0
        %v1945 = vadd.f32 %v1892, %v1944
        %v1946 = vpop.f32.mrb[0].mxu0
        %v1947 = vadd.f32 %v1894, %v1946
        %v1948 = vpop.f32.mrb[0].mxu0
        %v1949 = vadd.f32 %v1896, %v1948
        %1950 = vdwg.mxu0
        %1951 = vmatprep.subr.bf16.mxu0 %v1208
        %1952 = vmatpush1.bf16.msra.mxu0 %v1207
        %1953 = vmatprep.subr.bf16.mxu0 %v1217
        %1954 = vmatpush1.bf16.msra.mxu0 %v1216
        %1955 = vmatprep.subr.bf16.mxu0 %v1226
        %1956 = vmatpush1.bf16.msra.mxu0 %v1225
        %1957 = vmatprep.subr.bf16.mxu0 %v1235
        %1958 = vmatpush1.bf16.msra.mxu0 %v1234
        %1959 = vmatprep.subr.bf16.mxu0 %v1244
        %1960 = vmatpush1.bf16.msra.mxu0 %v1243
        %1961 = vmatprep.subr.bf16.mxu0 %v1253
        %1962 = vmatpush1.bf16.msra.mxu0 %v1252
        %1963 = vmatprep.subr.bf16.mxu0 %v1262
        %1964 = vmatpush1.bf16.msra.mxu0 %v1261
        %1965 = vmatprep.subr.bf16.mxu0 %v1271
        %1966 = vmatpush1.bf16.msra.mxu0 %v1270
        %1967 = vmatprep.subr.bf16.mxu0 %v1280
        %1968 = vmatpush1.bf16.msra.mxu0 %v1279
        %1969 = vmatprep.subr.bf16.mxu0 %v1289
        %1970 = vmatpush1.bf16.msra.mxu0 %v1288
        %1971 = vmatprep.subr.bf16.mxu0 %v1298
        %1972 = vmatpush1.bf16.msra.mxu0 %v1297
        %1973 = vmatprep.subr.bf16.mxu0 %v1307
        %1974 = vmatpush1.bf16.msra.mxu0 %v1306
        %1975 = vmatprep.subr.bf16.mxu0 %v1316
        %1976 = vmatpush1.bf16.msra.mxu0 %v1315
        %1977 = vmatprep.subr.bf16.mxu0 %v1325
        %1978 = vmatpush1.bf16.msra.mxu0 %v1324
        %1979 = vmatprep.subr.bf16.mxu0 %v1334
        %1980 = vmatpush1.bf16.msra.mxu0 %v1333
        %1981 = vmatprep.subr.bf16.mxu0 %v1343
        %1982 = vmatpush1.bf16.msra.mxu0 %v1342
        %1983 = vmatprep.mubr.bf16.mxu0 %v518
        %1984 = vmatmul.mubr.bf16.gmra.mrb[0].mxu0 %v517
        %v1985 = vpop.f32.mrb[0].mxu0
        %v1986 = vadd.f32 0.0, %v1985
        %v1987 = vpop.f32.mrb[0].mxu0
        %v1988 = vadd.f32 0.0, %v1987
        %v1989 = vpop.f32.mrb[0].mxu0
        %v1990 = vadd.f32 0.0, %v1989
        %v1991 = vpop.f32.mrb[0].mxu0
        %v1992 = vadd.f32 0.0, %v1991
        %1993 = vmatprep.mubr.bf16.mxu0 %v521
        %1994 = vmatmul.mubr.bf16.gmra.mrb[0].mxu0 %v520
        %v1995 = vpop.f32.mrb[0].mxu0
        %v1996 = vadd.f32 0.0, %v1995
        %v1997 = vpop.f32.mrb[0].mxu0
        %v1998 = vadd.f32 0.0, %v1997
        %v1999 = vpop.f32.mrb[0].mxu0
        %v2000 = vadd.f32 0.0, %v1999
        %v2001 = vpop.f32.mrb[0].mxu0
        %v2002 = vadd.f32 0.0, %v2001
        %2003 = vdwg.mxu0
        %2004 = vmatprep.subr.bf16.mxu0 %v1352
        %2005 = vmatpush1.bf16.msra.mxu0 %v1351
        %2006 = vmatprep.subr.bf16.mxu0 %v1361
        %2007 = vmatpush1.bf16.msra.mxu0 %v1360
        %2008 = vmatprep.subr.bf16.mxu0 %v1370
        %2009 = vmatpush1.bf16.msra.mxu0 %v1369
        %2010 = vmatprep.subr.bf16.mxu0 %v1379
        %2011 = vmatpush1.bf16.msra.mxu0 %v1378
        %2012 = vmatprep.subr.bf16.mxu0 %v1388
        %2013 = vmatpush1.bf16.msra.mxu0 %v1387
        %2014 = vmatprep.subr.bf16.mxu0 %v1397
        %2015 = vmatpush1.bf16.msra.mxu0 %v1396
        %2016 = vmatprep.subr.bf16.mxu0 %v1406
        %2017 = vmatpush1.bf16.msra.mxu0 %v1405
        %2018 = vmatprep.subr.bf16.mxu0 %v1415
        %2019 = vmatpush1.bf16.msra.mxu0 %v1414
        %2020 = vmatprep.subr.bf16.mxu0 0
        %2021 = vmatpush1.bf16.msra.mxu0 0
        %2022 = vmatprep.subr.bf16.mxu0 0
        %2023 = vmatpush1.bf16.msra.mxu0 0
        %2024 = vmatprep.subr.bf16.mxu0 0
        %2025 = vmatpush1.bf16.msra.mxu0 0
        %2026 = vmatprep.subr.bf16.mxu0 0
        %2027 = vmatpush1.bf16.msra.mxu0 0
        %2028 = vmatprep.subr.bf16.mxu0 0
        %2029 = vmatpush1.bf16.msra.mxu0 0
        %2030 = vmatprep.subr.bf16.mxu0 0
        %2031 = vmatpush1.bf16.msra.mxu0 0
        %2032 = vmatprep.subr.bf16.mxu0 0
        %2033 = vmatpush1.bf16.msra.mxu0 0
        %2034 = vmatprep.subr.bf16.mxu0 0
        %2035 = vmatpush1.bf16.msra.mxu0 0
        %2036 = vmatprep.mubr.bf16.mxu0 0
        %2037 = vmatmul.mubr.bf16.gmra.mrb[0].mxu0 %v519
        %v2038 = vpop.f32.mrb[0].mxu0
        %v2039 = vadd.f32 %v1986, %v2038
        %v2040 = vpop.f32.mrb[0].mxu0
        %v2041 = vadd.f32 %v1988, %v2040
        %v2042 = vpop.f32.mrb[0].mxu0
        %v2043 = vadd.f32 %v1990, %v2042
        %v2044 = vpop.f32.mrb[0].mxu0
        %v2045 = vadd.f32 %v1992, %v2044
        %2046 = vmatprep.mubr.bf16.mxu0 0
        %2047 = vmatmul.mubr.bf16.gmra.mrb[0].mxu0 %v522
        %v2048 = vpop.f32.mrb[0].mxu0
        %v2049 = vadd.f32 %v1996, %v2048
        %v2050 = vpop.f32.mrb[0].mxu0
        %v2051 = vadd.f32 %v1998, %v2050
        %v2052 = vpop.f32.mrb[0].mxu0
        %v2053 = vadd.f32 %v2000, %v2052
        %v2054 = vpop.f32.mrb[0].mxu0
        %v2055 = vadd.f32 %v2002, %v2054
        %2056 = vdwg.mxu0
        %2057 = vmatprep.subr.bf16.mxu0 0
        %2058 = vmatpush1.bf16.msra.mxu0 %v1209
        %2059 = vmatprep.subr.bf16.mxu0 0
        %2060 = vmatpush1.bf16.msra.mxu0 %v1218
        %2061 = vmatprep.subr.bf16.mxu0 0
        %2062 = vmatpush1.bf16.msra.mxu0 %v1227
        %2063 = vmatprep.subr.bf16.mxu0 0
        %2064 = vmatpush1.bf16.msra.mxu0 %v1236
        %2065 = vmatprep.subr.bf16.mxu0 0
        %2066 = vmatpush1.bf16.msra.mxu0 %v1245
        %2067 = vmatprep.subr.bf16.mxu0 0
        %2068 = vmatpush1.bf16.msra.mxu0 %v1254
        %2069 = vmatprep.subr.bf16.mxu0 0
        %2070 = vmatpush1.bf16.msra.mxu0 %v1263
        %2071 = vmatprep.subr.bf16.mxu0 0
        %2072 = vmatpush1.bf16.msra.mxu0 %v1272
        %2073 = vmatprep.subr.bf16.mxu0 0
        %2074 = vmatpush1.bf16.msra.mxu0 %v1281
        %2075 = vmatprep.subr.bf16.mxu0 0
        %2076 = vmatpush1.bf16.msra.mxu0 %v1290
        %2077 = vmatprep.subr.bf16.mxu0 0
        %2078 = vmatpush1.bf16.msra.mxu0 %v1299
        %2079 = vmatprep.subr.bf16.mxu0 0
        %2080 = vmatpush1.bf16.msra.mxu0 %v1308
        %2081 = vmatprep.subr.bf16.mxu0 0
        %2082 = vmatpush1.bf16.msra.mxu0 %v1317
        %2083 = vmatprep.subr.bf16.mxu0 0
        %2084 = vmatpush1.bf16.msra.mxu0 %v1326
        %2085 = vmatprep.subr.bf16.mxu0 0
        %2086 = vmatpush1.bf16.msra.mxu0 %v1335
        %2087 = vmatprep.subr.bf16.mxu0 0
        %2088 = vmatpush1.bf16.msra.mxu0 %v1344
        %2089 = vmatprep.mubr.bf16.mxu0 %v518
        %2090 = vmatmul.mubr.bf16.gmra.mrb[0].mxu0 %v517
        %v2091 = vpop.f32.mrb[0].mxu0
        %v2092 = vadd.f32 0.0, %v2091
        %v2093 = vpop.f32.mrb[0].mxu0
        %v2094 = vpop.f32.mrb[0].mxu0
        %v2095 = vadd.f32 0.0, %v2094
        %v2096 = vpop.f32.mrb[0].mxu0
        %2097 = vmatprep.mubr.bf16.mxu0 %v521
        %2098 = vmatmul.mubr.bf16.gmra.mrb[0].mxu0 %v520
        %v2099 = vpop.f32.mrb[0].mxu0
        %v2100 = vadd.f32 0.0, %v2099
        %v2101 = vpop.f32.mrb[0].mxu0
        %v2102 = vpop.f32.mrb[0].mxu0
        %v2103 = vadd.f32 0.0, %v2102
        %v2104 = vpop.f32.mrb[0].mxu0
        %2105 = vdwg.mxu0
        %2106 = vmatprep.subr.bf16.mxu0 0
        %2107 = vmatpush1.bf16.msra.mxu0 %v1353
        %2108 = vmatprep.subr.bf16.mxu0 0
        %2109 = vmatpush1.bf16.msra.mxu0 %v1362
        %2110 = vmatprep.subr.bf16.mxu0 0
        %2111 = vmatpush1.bf16.msra.mxu0 %v1371
        %2112 = vmatprep.subr.bf16.mxu0 0
        %2113 = vmatpush1.bf16.msra.mxu0 %v1380
        %2114 = vmatprep.subr.bf16.mxu0 0
        %2115 = vmatpush1.bf16.msra.mxu0 %v1389
        %2116 = vmatprep.subr.bf16.mxu0 0
        %2117 = vmatpush1.bf16.msra.mxu0 %v1398
        %2118 = vmatprep.subr.bf16.mxu0 0
        %2119 = vmatpush1.bf16.msra.mxu0 %v1407
        %2120 = vmatprep.subr.bf16.mxu0 0
        %2121 = vmatpush1.bf16.msra.mxu0 %v1416
        %2122 = vmatprep.subr.bf16.mxu0 0
        %2123 = vmatpush1.bf16.msra.mxu0 0
        %2124 = vmatprep.subr.bf16.mxu0 0
        %2125 = vmatpush1.bf16.msra.mxu0 0
        %2126 = vmatprep.subr.bf16.mxu0 0
        %2127 = vmatpush1.bf16.msra.mxu0 0
        %2128 = vmatprep.subr.bf16.mxu0 0
        %2129 = vmatpush1.bf16.msra.mxu0 0
        %2130 = vmatprep.subr.bf16.mxu0 0
        %2131 = vmatpush1.bf16.msra.mxu0 0
        %2132 = vmatprep.subr.bf16.mxu0 0
        %2133 = vmatpush1.bf16.msra.mxu0 0
        %2134 = vmatprep.subr.bf16.mxu0 0
        %2135 = vmatpush1.bf16.msra.mxu0 0
        %2136 = vmatprep.subr.bf16.mxu0 0
        %2137 = vmatpush1.bf16.msra.mxu0 0
        %2138 = vmatprep.mubr.bf16.mxu0 0
        %2139 = vmatmul.mubr.bf16.gmra.mrb[0].mxu0 %v519
        %v2140 = vpop.f32.mrb[0].mxu0
        %v2141 = vadd.f32 %v2092, %v2140
        %v2142 = vpop.f32.mrb[0].mxu0
        %v2143 = vpop.f32.mrb[0].mxu0
        %v2144 = vadd.f32 %v2095, %v2143
        %v2145 = vpop.f32.mrb[0].mxu0
        %2146 = vmatprep.mubr.bf16.mxu0 0
        %2147 = vmatmul.mubr.bf16.gmra.mrb[0].mxu0 %v522
        %v2148 = vpop.f32.mrb[0].mxu0
        %v2149 = vadd.f32 %v2100, %v2148
        %v2150 = vpop.f32.mrb[0].mxu0
        %v2151 = vpop.f32.mrb[0].mxu0
        %v2152 = vadd.f32 %v2103, %v2151
        %v2153 = vpop.f32.mrb[0].mxu0
        %2154 = vdwg.mxu0
        %v2155 = vpack.c.bf16 %v1725, %v1721
        %v2156 = vpack.c.bf16 %v1727, %v1723
        %v2157 = vpack.c.bf16 %v1831, %v1827
        %v2158 = vpack.c.bf16 %v1833, %v1829
        %v2159 = vpack.c.bf16 %v1937, %v1933
        %v2160 = vpack.c.bf16 %v1939, %v1935
        %v2161 = vpack.c.bf16 %v2043, %v2039
        %v2162 = vpack.c.bf16 %v2045, %v2041
        %v2163 = vpack.c.bf16 %v2144, %v2141
        %v2164 = vpack.c.bf16 %v1735, %v1731
        %v2165 = vpack.c.bf16 %v1737, %v1733
        %v2166 = vpack.c.bf16 %v1841, %v1837
        %v2167 = vpack.c.bf16 %v1843, %v1839
        %v2168 = vpack.c.bf16 %v1947, %v1943
        %v2169 = vpack.c.bf16 %v1949, %v1945
        %v2170 = vpack.c.bf16 %v2053, %v2049
        %v2171 = vpack.c.bf16 %v2055, %v2051
        %v2172 = vpack.c.bf16 %v2152, %v2149
        %v2173 = vlaneseq
        %v2174 = vshrl.u32 %v2173, 7
        %v2175 = vadd.s32 %v2174, 8
        %v2176 = vlaneseq
        %v2177 = vand.u32 %v2176, 127
        %vm2178 = vcmp.le.s32.totalorder %v2177, %v2174
        %vm2179 = vcmp.le.s32.totalorder %v2177, %v2175
        %vm2180 = vcmask 523264
        %v2182 = vsel %vm2180, %v2155, 0
        %v2185 = vsel %vm2180, %v2158, 0
        %2187 = vmatprep.subr.bf16.mxu0 0
        %2188 = vmatpush1.bf16.xpose.msra.mxu0 %v2185
        %2189 = vmatprep.subr.bf16.mxu0 0
        %2190 = vmatpush1.bf16.xpose.msra.mxu0 0
        %2191 = vmatprep.subr.bf16.mxu0 0
        %2192 = vmatpush1.bf16.xpose.msra.mxu0 0
        %2193 = vmatprep.subr.bf16.mxu0 0
        %2194 = vmatpush1.bf16.xpose.msra.mxu0 0
        %2195 = vmatprep.subr.bf16.mxu0 0
        %2196 = vmatpush1.bf16.xpose.msra.mxu0 0
        %2197 = vmatprep.subr.bf16.mxu0 0
        %2198 = vmatpush1.bf16.xpose.msra.mxu0 0
        %2199 = vmatprep.subr.bf16.mxu0 0
        %2200 = vmatpush1.bf16.xpose.msra.mxu0 0
        %2201 = vmatprep.subr.bf16.mxu0 0
        %2202 = vmatpush1.bf16.xpose.msra.mxu0 0
        %2203 = vmatprep.subr.bf16.mxu0 0
        %2204 = vmatpush1.bf16.xpose.msra.mxu0 0
        %2205 = vmatprep.subr.bf16.mxu0 0
        %2206 = vmatpush1.bf16.xpose.msra.mxu0 0
        %2207 = vmatprep.subr.bf16.mxu0 0
        %2208 = vmatpush1.bf16.xpose.msra.mxu0 0
        %2209 = vmatprep.subr.bf16.mxu0 0
        %2210 = vmatpush1.bf16.xpose.msra.mxu0 0
        %2211 = vmatprep.subr.bf16.mxu0 0
        %2212 = vmatpush1.bf16.xpose.msra.mxu0 0
        %2213 = vmatprep.subr.bf16.mxu0 0
        %2214 = vmatpush1.bf16.xpose.msra.mxu0 0
        %2215 = vmatprep.subr.bf16.mxu0 0
        %2216 = vmatpush1.bf16.xpose.msra.mxu0 0
        %2217 = vmatprep.subr.bf16.mxu0 0
        %2218 = vmatpush1.bf16.xpose.msra.mxu0 0
        %2219 = vmatprep.mubr.bf16.mxu0 0
        %2220 = vmatmul.mubr.bf16.gmra.mrb[0].mxu0 %v2182
        %v2221 = vpop.f32.mrb[0].mxu0
        %v2222 = vadd.f32 0.0, %v2221
        %v2223 = vpop.f32.mrb[0].mxu0
        %v2224 = vpop.f32.mrb[0].mxu0
        %v2225 = vadd.f32 0.0, %v2224
        %v2226 = vpop.f32.mrb[0].mxu0
        %2227 = vdwg.mxu0
        %v2228 = vsel %vm2178, %v2222, -1e+30
        %v2229 = vsel %vm2179, %v2225, -1e+30
        %vm2230 = vcmask 130048
        %v2231 = vsel %vm2230, %v2228, -inf
        %v2232 = vsel %vm2230, %v2229, -inf
        %v2233 = vmax.f32 %v2231, %v2232
        %v2234 = vrot.slane %v2233, 4
        %v2235 = vmax.f32 %v2233, %v2234
        %v2236 = vrot.slane %v2235, 2
        %v2237 = vmax.f32 %v2235, %v2236
        %v2238 = vrot.slane %v2237, 1
        %v2239 = vmax.f32 %v2237, %v2238
        %v2240 = vsub.f32 %v2228, %v2239
        %v2241 = vsub.f32 %v2229, %v2239
        %v2242 = vmul.f32 %v2240, 1.442695
        %v2243 = vpow.pop %v2242
        %v2244 = vmul.f32 %v2241, 1.442695
        %v2245 = vpow.pop %v2244
        %v2246 = vsel %vm2230, %v2243, 0.0
        %v2247 = vsel %vm2230, %v2245, 0.0
        %v2248 = vadd.f32 %v2246, %v2247
        %v2249 = vrot.slane %v2248, 4
        %v2250 = vadd.f32 %v2248, %v2249
        %v2251 = vrot.slane %v2250, 2
        %v2252 = vadd.f32 %v2250, %v2251
        %v2253 = vrot.slane %v2252, 1
        %v2254 = vadd.f32 %v2252, %v2253
        %v2255 = vrcp.pop %v2254
        %v2256 = vmul.f32 %v2243, %v2255
        %v2257 = vmul.f32 %v2245, %v2255
        %v2258 = vpack.c.bf16 %v2257, %v2256
        %v2260 = vsel %vm2230, %v2258, 0
        %2262 = vmatprep.subr.bf16.mxu0 0
        %2263 = vmatpush1.bf16.msra.mxu0 %v2161
        %2264 = vmatprep.subr.bf16.mxu0 0
        %2265 = vmatpush1.bf16.msra.mxu0 0
        %2266 = vmatprep.subr.bf16.mxu0 0
        %2267 = vmatpush1.bf16.msra.mxu0 0
        %2268 = vmatprep.subr.bf16.mxu0 0
        %2269 = vmatpush1.bf16.msra.mxu0 0
        %2270 = vmatprep.subr.bf16.mxu0 0
        %2271 = vmatpush1.bf16.msra.mxu0 0
        %2272 = vmatprep.subr.bf16.mxu0 0
        %2273 = vmatpush1.bf16.msra.mxu0 0
        %2274 = vmatprep.subr.bf16.mxu0 0
        %2275 = vmatpush1.bf16.msra.mxu0 0
        %2276 = vmatprep.subr.bf16.mxu0 0
        %2277 = vmatpush1.bf16.msra.mxu0 0
        %2278 = vmatprep.subr.bf16.mxu0 0
        %2279 = vmatpush1.bf16.msra.mxu0 0
        %2280 = vmatprep.subr.bf16.mxu0 0
        %2281 = vmatpush1.bf16.msra.mxu0 0
        %2282 = vmatprep.subr.bf16.mxu0 0
        %2283 = vmatpush1.bf16.msra.mxu0 0
        %2284 = vmatprep.subr.bf16.mxu0 0
        %2285 = vmatpush1.bf16.msra.mxu0 0
        %2286 = vmatprep.subr.bf16.mxu0 0
        %2287 = vmatpush1.bf16.msra.mxu0 0
        %2288 = vmatprep.subr.bf16.mxu0 0
        %2289 = vmatpush1.bf16.msra.mxu0 0
        %2290 = vmatprep.subr.bf16.mxu0 0
        %2291 = vmatpush1.bf16.msra.mxu0 0
        %2292 = vmatprep.subr.bf16.mxu0 0
        %2293 = vmatpush1.bf16.msra.mxu0 0
        %2294 = vmatprep.mubr.bf16.mxu0 0
        %2295 = vmatmul.mubr.bf16.gmra.mrb[0].mxu0 %v2260
        %v2296 = vpop.f32.mrb[0].mxu0
        %v2297 = vadd.f32 0.0, %v2296
        %v2298 = vpop.f32.mrb[0].mxu0
        %v2299 = vpop.f32.mrb[0].mxu0
        %v2300 = vadd.f32 0.0, %v2299
        %v2301 = vpop.f32.mrb[0].mxu0
        %2302 = vdwg.mxu0
        %v2303 = vpack.c.bf16 %v2300, %v2297
        %2305 = vrot.lane.b32.xlu0 %v2155, 64
        %v2306 = vpop.permute.xlu0 %2305
        %2308 = vrot.lane.b32.xlu0 %v2158, 64
        %v2309 = vpop.permute.xlu0 %2308
        %v2311 = vsel %vm2180, %v2306, 0
        %v2314 = vsel %vm2180, %v2309, 0
        %2316 = vmatprep.subr.bf16.mxu0 0
        %2317 = vmatpush1.bf16.xpose.msra.mxu0 %v2314
        %2318 = vmatprep.subr.bf16.mxu0 0
        %2319 = vmatpush1.bf16.xpose.msra.mxu0 0
        %2320 = vmatprep.subr.bf16.mxu0 0
        %2321 = vmatpush1.bf16.xpose.msra.mxu0 0
        %2322 = vmatprep.subr.bf16.mxu0 0
        %2323 = vmatpush1.bf16.xpose.msra.mxu0 0
        %2324 = vmatprep.subr.bf16.mxu0 0
        %2325 = vmatpush1.bf16.xpose.msra.mxu0 0
        %2326 = vmatprep.subr.bf16.mxu0 0
        %2327 = vmatpush1.bf16.xpose.msra.mxu0 0
        %2328 = vmatprep.subr.bf16.mxu0 0
        %2329 = vmatpush1.bf16.xpose.msra.mxu0 0
        %2330 = vmatprep.subr.bf16.mxu0 0
        %2331 = vmatpush1.bf16.xpose.msra.mxu0 0
        %2332 = vmatprep.subr.bf16.mxu0 0
        %2333 = vmatpush1.bf16.xpose.msra.mxu0 0
        %2334 = vmatprep.subr.bf16.mxu0 0
        %2335 = vmatpush1.bf16.xpose.msra.mxu0 0
        %2336 = vmatprep.subr.bf16.mxu0 0
        %2337 = vmatpush1.bf16.xpose.msra.mxu0 0
        %2338 = vmatprep.subr.bf16.mxu0 0
        %2339 = vmatpush1.bf16.xpose.msra.mxu0 0
        %2340 = vmatprep.subr.bf16.mxu0 0
        %2341 = vmatpush1.bf16.xpose.msra.mxu0 0
        %2342 = vmatprep.subr.bf16.mxu0 0
        %2343 = vmatpush1.bf16.xpose.msra.mxu0 0
        %2344 = vmatprep.subr.bf16.mxu0 0
        %2345 = vmatpush1.bf16.xpose.msra.mxu0 0
        %2346 = vmatprep.subr.bf16.mxu0 0
        %2347 = vmatpush1.bf16.xpose.msra.mxu0 0
        %2348 = vmatprep.mubr.bf16.mxu0 0
        %2349 = vmatmul.mubr.bf16.gmra.mrb[0].mxu0 %v2311
        %v2350 = vpop.f32.mrb[0].mxu0
        %v2351 = vadd.f32 0.0, %v2350
        %v2352 = vpop.f32.mrb[0].mxu0
        %v2353 = vpop.f32.mrb[0].mxu0
        %v2354 = vadd.f32 0.0, %v2353
        %v2355 = vpop.f32.mrb[0].mxu0
        %2356 = vdwg.mxu0
        %v2357 = vsel %vm2178, %v2351, -1e+30
        %v2358 = vsel %vm2179, %v2354, -1e+30
        %v2359 = vsel %vm2230, %v2357, -inf
        %v2360 = vsel %vm2230, %v2358, -inf
        %v2361 = vmax.f32 %v2359, %v2360
        %v2362 = vrot.slane %v2361, 4
        %v2363 = vmax.f32 %v2361, %v2362
        %v2364 = vrot.slane %v2363, 2
        %v2365 = vmax.f32 %v2363, %v2364
        %v2366 = vrot.slane %v2365, 1
        %v2367 = vmax.f32 %v2365, %v2366
        %v2368 = vsub.f32 %v2357, %v2367
        %v2369 = vsub.f32 %v2358, %v2367
        %v2370 = vmul.f32 %v2368, 1.442695
        %v2371 = vpow.pop %v2370
        %v2372 = vmul.f32 %v2369, 1.442695
        %v2373 = vpow.pop %v2372
        %v2374 = vsel %vm2230, %v2371, 0.0
        %v2375 = vsel %vm2230, %v2373, 0.0
        %v2376 = vadd.f32 %v2374, %v2375
        %v2377 = vrot.slane %v2376, 4
        %v2378 = vadd.f32 %v2376, %v2377
        %v2379 = vrot.slane %v2378, 2
        %v2380 = vadd.f32 %v2378, %v2379
        %v2381 = vrot.slane %v2380, 1
        %v2382 = vadd.f32 %v2380, %v2381
        %v2383 = vrcp.pop %v2382
        %v2384 = vmul.f32 %v2371, %v2383
        %v2385 = vmul.f32 %v2373, %v2383
        %v2386 = vpack.c.bf16 %v2385, %v2384
        %2388 = vrot.lane.b32.xlu0 %v2161, 64
        %v2389 = vpop.permute.xlu0 %2388
        %v2392 = vsel %vm2230, %v2386, 0
        %2394 = vmatprep.subr.bf16.mxu0 0
        %2395 = vmatpush1.bf16.msra.mxu0 %v2389
        %2396 = vmatprep.subr.bf16.mxu0 0
        %2397 = vmatpush1.bf16.msra.mxu0 0
        %2398 = vmatprep.subr.bf16.mxu0 0
        %2399 = vmatpush1.bf16.msra.mxu0 0
        %2400 = vmatprep.subr.bf16.mxu0 0
        %2401 = vmatpush1.bf16.msra.mxu0 0
        %2402 = vmatprep.subr.bf16.mxu0 0
        %2403 = vmatpush1.bf16.msra.mxu0 0
        %2404 = vmatprep.subr.bf16.mxu0 0
        %2405 = vmatpush1.bf16.msra.mxu0 0
        %2406 = vmatprep.subr.bf16.mxu0 0
        %2407 = vmatpush1.bf16.msra.mxu0 0
        %2408 = vmatprep.subr.bf16.mxu0 0
        %2409 = vmatpush1.bf16.msra.mxu0 0
        %2410 = vmatprep.subr.bf16.mxu0 0
        %2411 = vmatpush1.bf16.msra.mxu0 0
        %2412 = vmatprep.subr.bf16.mxu0 0
        %2413 = vmatpush1.bf16.msra.mxu0 0
        %2414 = vmatprep.subr.bf16.mxu0 0
        %2415 = vmatpush1.bf16.msra.mxu0 0
        %2416 = vmatprep.subr.bf16.mxu0 0
        %2417 = vmatpush1.bf16.msra.mxu0 0
        %2418 = vmatprep.subr.bf16.mxu0 0
        %2419 = vmatpush1.bf16.msra.mxu0 0
        %2420 = vmatprep.subr.bf16.mxu0 0
        %2421 = vmatpush1.bf16.msra.mxu0 0
        %2422 = vmatprep.subr.bf16.mxu0 0
        %2423 = vmatpush1.bf16.msra.mxu0 0
        %2424 = vmatprep.subr.bf16.mxu0 0
        %2425 = vmatpush1.bf16.msra.mxu0 0
        %2426 = vmatprep.mubr.bf16.mxu0 0
        %2427 = vmatmul.mubr.bf16.gmra.mrb[0].mxu0 %v2392
        %v2428 = vpop.f32.mrb[0].mxu0
        %v2429 = vadd.f32 0.0, %v2428
        %v2430 = vpop.f32.mrb[0].mxu0
        %v2431 = vpop.f32.mrb[0].mxu0
        %v2432 = vadd.f32 0.0, %v2431
        %v2433 = vpop.f32.mrb[0].mxu0
        %2434 = vdwg.mxu0
        %v2435 = vpack.c.bf16 %v2432, %v2429
        %v2437 = vsel %vm2180, %v2156, 0
        %v2440 = vsel %vm2180, %v2159, 0
        %2442 = vmatprep.subr.bf16.mxu0 0
        %2443 = vmatpush1.bf16.xpose.msra.mxu0 %v2440
        %2444 = vmatprep.subr.bf16.mxu0 0
        %2445 = vmatpush1.bf16.xpose.msra.mxu0 0
        %2446 = vmatprep.subr.bf16.mxu0 0
        %2447 = vmatpush1.bf16.xpose.msra.mxu0 0
        %2448 = vmatprep.subr.bf16.mxu0 0
        %2449 = vmatpush1.bf16.xpose.msra.mxu0 0
        %2450 = vmatprep.subr.bf16.mxu0 0
        %2451 = vmatpush1.bf16.xpose.msra.mxu0 0
        %2452 = vmatprep.subr.bf16.mxu0 0
        %2453 = vmatpush1.bf16.xpose.msra.mxu0 0
        %2454 = vmatprep.subr.bf16.mxu0 0
        %2455 = vmatpush1.bf16.xpose.msra.mxu0 0
        %2456 = vmatprep.subr.bf16.mxu0 0
        %2457 = vmatpush1.bf16.xpose.msra.mxu0 0
        %2458 = vmatprep.subr.bf16.mxu0 0
        %2459 = vmatpush1.bf16.xpose.msra.mxu0 0
        %2460 = vmatprep.subr.bf16.mxu0 0
        %2461 = vmatpush1.bf16.xpose.msra.mxu0 0
        %2462 = vmatprep.subr.bf16.mxu0 0
        %2463 = vmatpush1.bf16.xpose.msra.mxu0 0
        %2464 = vmatprep.subr.bf16.mxu0 0
        %2465 = vmatpush1.bf16.xpose.msra.mxu0 0
        %2466 = vmatprep.subr.bf16.mxu0 0
        %2467 = vmatpush1.bf16.xpose.msra.mxu0 0
        %2468 = vmatprep.subr.bf16.mxu0 0
        %2469 = vmatpush1.bf16.xpose.msra.mxu0 0
        %2470 = vmatprep.subr.bf16.mxu0 0
        %2471 = vmatpush1.bf16.xpose.msra.mxu0 0
        %2472 = vmatprep.subr.bf16.mxu0 0
        %2473 = vmatpush1.bf16.xpose.msra.mxu0 0
        %2474 = vmatprep.mubr.bf16.mxu0 0
        %2475 = vmatmul.mubr.bf16.gmra.mrb[0].mxu0 %v2437
        %v2476 = vpop.f32.mrb[0].mxu0
        %v2477 = vadd.f32 0.0, %v2476
        %v2478 = vpop.f32.mrb[0].mxu0
        %v2479 = vpop.f32.mrb[0].mxu0
        %v2480 = vadd.f32 0.0, %v2479
        %v2481 = vpop.f32.mrb[0].mxu0
        %2482 = vdwg.mxu0
        %v2483 = vsel %vm2178, %v2477, -1e+30
        %v2484 = vsel %vm2179, %v2480, -1e+30
        %v2485 = vsel %vm2230, %v2483, -inf
        %v2486 = vsel %vm2230, %v2484, -inf
        %v2487 = vmax.f32 %v2485, %v2486
        %v2488 = vrot.slane %v2487, 4
        %v2489 = vmax.f32 %v2487, %v2488
        %v2490 = vrot.slane %v2489, 2
        %v2491 = vmax.f32 %v2489, %v2490
        %v2492 = vrot.slane %v2491, 1
        %v2493 = vmax.f32 %v2491, %v2492
        %v2494 = vsub.f32 %v2483, %v2493
        %v2495 = vsub.f32 %v2484, %v2493
        %v2496 = vmul.f32 %v2494, 1.442695
        %v2497 = vpow.pop %v2496
        %v2498 = vmul.f32 %v2495, 1.442695
        %v2499 = vpow.pop %v2498
        %v2500 = vsel %vm2230, %v2497, 0.0
        %v2501 = vsel %vm2230, %v2499, 0.0
        %v2502 = vadd.f32 %v2500, %v2501
        %v2503 = vrot.slane %v2502, 4
        %v2504 = vadd.f32 %v2502, %v2503
        %v2505 = vrot.slane %v2504, 2
        %v2506 = vadd.f32 %v2504, %v2505
        %v2507 = vrot.slane %v2506, 1
        %v2508 = vadd.f32 %v2506, %v2507
        %v2509 = vrcp.pop %v2508
        %v2510 = vmul.f32 %v2497, %v2509
        %v2511 = vmul.f32 %v2499, %v2509
        %v2512 = vpack.c.bf16 %v2511, %v2510
        %v2514 = vsel %vm2230, %v2512, 0
        %2516 = vmatprep.subr.bf16.mxu0 0
        %2517 = vmatpush1.bf16.msra.mxu0 %v2162
        %2518 = vmatprep.subr.bf16.mxu0 0
        %2519 = vmatpush1.bf16.msra.mxu0 0
        %2520 = vmatprep.subr.bf16.mxu0 0
        %2521 = vmatpush1.bf16.msra.mxu0 0
        %2522 = vmatprep.subr.bf16.mxu0 0
        %2523 = vmatpush1.bf16.msra.mxu0 0
        %2524 = vmatprep.subr.bf16.mxu0 0
        %2525 = vmatpush1.bf16.msra.mxu0 0
        %2526 = vmatprep.subr.bf16.mxu0 0
        %2527 = vmatpush1.bf16.msra.mxu0 0
        %2528 = vmatprep.subr.bf16.mxu0 0
        %2529 = vmatpush1.bf16.msra.mxu0 0
        %2530 = vmatprep.subr.bf16.mxu0 0
        %2531 = vmatpush1.bf16.msra.mxu0 0
        %2532 = vmatprep.subr.bf16.mxu0 0
        %2533 = vmatpush1.bf16.msra.mxu0 0
        %2534 = vmatprep.subr.bf16.mxu0 0
        %2535 = vmatpush1.bf16.msra.mxu0 0
        %2536 = vmatprep.subr.bf16.mxu0 0
        %2537 = vmatpush1.bf16.msra.mxu0 0
        %2538 = vmatprep.subr.bf16.mxu0 0
        %2539 = vmatpush1.bf16.msra.mxu0 0
        %2540 = vmatprep.subr.bf16.mxu0 0
        %2541 = vmatpush1.bf16.msra.mxu0 0
        %2542 = vmatprep.subr.bf16.mxu0 0
        %2543 = vmatpush1.bf16.msra.mxu0 0
        %2544 = vmatprep.subr.bf16.mxu0 0
        %2545 = vmatpush1.bf16.msra.mxu0 0
        %2546 = vmatprep.subr.bf16.mxu0 0
        %2547 = vmatpush1.bf16.msra.mxu0 0
        %2548 = vmatprep.mubr.bf16.mxu0 0
        %2549 = vmatmul.mubr.bf16.gmra.mrb[0].mxu0 %v2514
        %v2550 = vpop.f32.mrb[0].mxu0
        %v2551 = vadd.f32 0.0, %v2550
        %v2552 = vpop.f32.mrb[0].mxu0
        %v2553 = vpop.f32.mrb[0].mxu0
        %v2554 = vadd.f32 0.0, %v2553
        %v2555 = vpop.f32.mrb[0].mxu0
        %2556 = vdwg.mxu0
        %v2557 = vpack.c.bf16 %v2554, %v2551
        %2559 = vrot.lane.b32.xlu0 %v2156, 64
        %v2560 = vpop.permute.xlu0 %2559
        %2562 = vrot.lane.b32.xlu0 %v2159, 64
        %v2563 = vpop.permute.xlu0 %2562
        %v2565 = vsel %vm2180, %v2560, 0
        %v2568 = vsel %vm2180, %v2563, 0
        %2570 = vmatprep.subr.bf16.mxu0 0
        %2571 = vmatpush1.bf16.xpose.msra.mxu0 %v2568
        %2572 = vmatprep.subr.bf16.mxu0 0
        %2573 = vmatpush1.bf16.xpose.msra.mxu0 0
        %2574 = vmatprep.subr.bf16.mxu0 0
        %2575 = vmatpush1.bf16.xpose.msra.mxu0 0
        %2576 = vmatprep.subr.bf16.mxu0 0
        %2577 = vmatpush1.bf16.xpose.msra.mxu0 0
        %2578 = vmatprep.subr.bf16.mxu0 0
        %2579 = vmatpush1.bf16.xpose.msra.mxu0 0
        %2580 = vmatprep.subr.bf16.mxu0 0
        %2581 = vmatpush1.bf16.xpose.msra.mxu0 0
        %2582 = vmatprep.subr.bf16.mxu0 0
        %2583 = vmatpush1.bf16.xpose.msra.mxu0 0
        %2584 = vmatprep.subr.bf16.mxu0 0
        %2585 = vmatpush1.bf16.xpose.msra.mxu0 0
        %2586 = vmatprep.subr.bf16.mxu0 0
        %2587 = vmatpush1.bf16.xpose.msra.mxu0 0
        %2588 = vmatprep.subr.bf16.mxu0 0
        %2589 = vmatpush1.bf16.xpose.msra.mxu0 0
        %2590 = vmatprep.subr.bf16.mxu0 0
        %2591 = vmatpush1.bf16.xpose.msra.mxu0 0
        %2592 = vmatprep.subr.bf16.mxu0 0
        %2593 = vmatpush1.bf16.xpose.msra.mxu0 0
        %2594 = vmatprep.subr.bf16.mxu0 0
        %2595 = vmatpush1.bf16.xpose.msra.mxu0 0
        %2596 = vmatprep.subr.bf16.mxu0 0
        %2597 = vmatpush1.bf16.xpose.msra.mxu0 0
        %2598 = vmatprep.subr.bf16.mxu0 0
        %2599 = vmatpush1.bf16.xpose.msra.mxu0 0
        %2600 = vmatprep.subr.bf16.mxu0 0
        %2601 = vmatpush1.bf16.xpose.msra.mxu0 0
        %2602 = vmatprep.mubr.bf16.mxu0 0
        %2603 = vmatmul.mubr.bf16.gmra.mrb[0].mxu0 %v2565
        %v2604 = vpop.f32.mrb[0].mxu0
        %v2605 = vadd.f32 0.0, %v2604
        %v2606 = vpop.f32.mrb[0].mxu0
        %v2607 = vpop.f32.mrb[0].mxu0
        %v2608 = vadd.f32 0.0, %v2607
        %v2609 = vpop.f32.mrb[0].mxu0
        %2610 = vdwg.mxu0
        %v2611 = vsel %vm2178, %v2605, -1e+30
        %v2612 = vsel %vm2179, %v2608, -1e+30
        %v2613 = vsel %vm2230, %v2611, -inf
        %v2614 = vsel %vm2230, %v2612, -inf
        %v2615 = vmax.f32 %v2613, %v2614
        %v2616 = vrot.slane %v2615, 4
        %v2617 = vmax.f32 %v2615, %v2616
        %v2618 = vrot.slane %v2617, 2
        %v2619 = vmax.f32 %v2617, %v2618
        %v2620 = vrot.slane %v2619, 1
        %v2621 = vmax.f32 %v2619, %v2620
        %v2622 = vsub.f32 %v2611, %v2621
        %v2623 = vsub.f32 %v2612, %v2621
        %v2624 = vmul.f32 %v2622, 1.442695
        %v2625 = vpow.pop %v2624
        %v2626 = vmul.f32 %v2623, 1.442695
        %v2627 = vpow.pop %v2626
        %v2628 = vsel %vm2230, %v2625, 0.0
        %v2629 = vsel %vm2230, %v2627, 0.0
        %v2630 = vadd.f32 %v2628, %v2629
        %v2631 = vrot.slane %v2630, 4
        %v2632 = vadd.f32 %v2630, %v2631
        %v2633 = vrot.slane %v2632, 2
        %v2634 = vadd.f32 %v2632, %v2633
        %v2635 = vrot.slane %v2634, 1
        %v2636 = vadd.f32 %v2634, %v2635
        %v2637 = vrcp.pop %v2636
        %v2638 = vmul.f32 %v2625, %v2637
        %v2639 = vmul.f32 %v2627, %v2637
        %v2640 = vpack.c.bf16 %v2639, %v2638
        %2642 = vrot.lane.b32.xlu0 %v2162, 64
        %v2643 = vpop.permute.xlu0 %2642
        %v2646 = vsel %vm2230, %v2640, 0
        %2648 = vmatprep.subr.bf16.mxu0 0
        %2649 = vmatpush1.bf16.msra.mxu0 %v2643
        %2650 = vmatprep.subr.bf16.mxu0 0
        %2651 = vmatpush1.bf16.msra.mxu0 0
        %2652 = vmatprep.subr.bf16.mxu0 0
        %2653 = vmatpush1.bf16.msra.mxu0 0
        %2654 = vmatprep.subr.bf16.mxu0 0
        %2655 = vmatpush1.bf16.msra.mxu0 0
        %2656 = vmatprep.subr.bf16.mxu0 0
        %2657 = vmatpush1.bf16.msra.mxu0 0
        %2658 = vmatprep.subr.bf16.mxu0 0
        %2659 = vmatpush1.bf16.msra.mxu0 0
        %2660 = vmatprep.subr.bf16.mxu0 0
        %2661 = vmatpush1.bf16.msra.mxu0 0
        %2662 = vmatprep.subr.bf16.mxu0 0
        %2663 = vmatpush1.bf16.msra.mxu0 0
        %2664 = vmatprep.subr.bf16.mxu0 0
        %2665 = vmatpush1.bf16.msra.mxu0 0
        %2666 = vmatprep.subr.bf16.mxu0 0
        %2667 = vmatpush1.bf16.msra.mxu0 0
        %2668 = vmatprep.subr.bf16.mxu0 0
        %2669 = vmatpush1.bf16.msra.mxu0 0
        %2670 = vmatprep.subr.bf16.mxu0 0
        %2671 = vmatpush1.bf16.msra.mxu0 0
        %2672 = vmatprep.subr.bf16.mxu0 0
        %2673 = vmatpush1.bf16.msra.mxu0 0
        %2674 = vmatprep.subr.bf16.mxu0 0
        %2675 = vmatpush1.bf16.msra.mxu0 0
        %2676 = vmatprep.subr.bf16.mxu0 0
        %2677 = vmatpush1.bf16.msra.mxu0 0
        %2678 = vmatprep.subr.bf16.mxu0 0
        %2679 = vmatpush1.bf16.msra.mxu0 0
        %2680 = vmatprep.mubr.bf16.mxu0 0
        %2681 = vmatmul.mubr.bf16.gmra.mrb[0].mxu0 %v2646
        %v2682 = vpop.f32.mrb[0].mxu0
        %v2683 = vadd.f32 0.0, %v2682
        %v2684 = vpop.f32.mrb[0].mxu0
        %v2685 = vpop.f32.mrb[0].mxu0
        %v2686 = vadd.f32 0.0, %v2685
        %v2687 = vpop.f32.mrb[0].mxu0
        %2688 = vdwg.mxu0
        %v2689 = vpack.c.bf16 %v2686, %v2683
        %v2691 = vsel %vm2180, %v2157, 0
        %v2694 = vsel %vm2180, %v2160, 0
        %2696 = vmatprep.subr.bf16.mxu0 0
        %2697 = vmatpush1.bf16.xpose.msra.mxu0 %v2694
        %2698 = vmatprep.subr.bf16.mxu0 0
        %2699 = vmatpush1.bf16.xpose.msra.mxu0 0
        %2700 = vmatprep.subr.bf16.mxu0 0
        %2701 = vmatpush1.bf16.xpose.msra.mxu0 0
        %2702 = vmatprep.subr.bf16.mxu0 0
        %2703 = vmatpush1.bf16.xpose.msra.mxu0 0
        %2704 = vmatprep.subr.bf16.mxu0 0
        %2705 = vmatpush1.bf16.xpose.msra.mxu0 0
        %2706 = vmatprep.subr.bf16.mxu0 0
        %2707 = vmatpush1.bf16.xpose.msra.mxu0 0
        %2708 = vmatprep.subr.bf16.mxu0 0
        %2709 = vmatpush1.bf16.xpose.msra.mxu0 0
        %2710 = vmatprep.subr.bf16.mxu0 0
        %2711 = vmatpush1.bf16.xpose.msra.mxu0 0
        %2712 = vmatprep.subr.bf16.mxu0 0
        %2713 = vmatpush1.bf16.xpose.msra.mxu0 0
        %2714 = vmatprep.subr.bf16.mxu0 0
        %2715 = vmatpush1.bf16.xpose.msra.mxu0 0
        %2716 = vmatprep.subr.bf16.mxu0 0
        %2717 = vmatpush1.bf16.xpose.msra.mxu0 0
        %2718 = vmatprep.subr.bf16.mxu0 0
        %2719 = vmatpush1.bf16.xpose.msra.mxu0 0
        %2720 = vmatprep.subr.bf16.mxu0 0
        %2721 = vmatpush1.bf16.xpose.msra.mxu0 0
        %2722 = vmatprep.subr.bf16.mxu0 0
        %2723 = vmatpush1.bf16.xpose.msra.mxu0 0
        %2724 = vmatprep.subr.bf16.mxu0 0
        %2725 = vmatpush1.bf16.xpose.msra.mxu0 0
        %2726 = vmatprep.subr.bf16.mxu0 0
        %2727 = vmatpush1.bf16.xpose.msra.mxu0 0
        %2728 = vmatprep.mubr.bf16.mxu0 0
        %2729 = vmatmul.mubr.bf16.gmra.mrb[0].mxu0 %v2691
        %v2730 = vpop.f32.mrb[0].mxu0
        %v2731 = vadd.f32 0.0, %v2730
        %v2732 = vpop.f32.mrb[0].mxu0
        %v2733 = vpop.f32.mrb[0].mxu0
        %v2734 = vadd.f32 0.0, %v2733
        %v2735 = vpop.f32.mrb[0].mxu0
        %2736 = vdwg.mxu0
        %v2737 = vsel %vm2178, %v2731, -1e+30
        %v2738 = vsel %vm2179, %v2734, -1e+30
        %v2739 = vsel %vm2230, %v2737, -inf
        %v2740 = vsel %vm2230, %v2738, -inf
        %v2741 = vmax.f32 %v2739, %v2740
        %v2742 = vrot.slane %v2741, 4
        %v2743 = vmax.f32 %v2741, %v2742
        %v2744 = vrot.slane %v2743, 2
        %v2745 = vmax.f32 %v2743, %v2744
        %v2746 = vrot.slane %v2745, 1
        %v2747 = vmax.f32 %v2745, %v2746
        %v2748 = vsub.f32 %v2737, %v2747
        %v2749 = vsub.f32 %v2738, %v2747
        %v2750 = vmul.f32 %v2748, 1.442695
        %v2751 = vpow.pop %v2750
        %v2752 = vmul.f32 %v2749, 1.442695
        %v2753 = vpow.pop %v2752
        %v2754 = vsel %vm2230, %v2751, 0.0
        %v2755 = vsel %vm2230, %v2753, 0.0
        %v2756 = vadd.f32 %v2754, %v2755
        %v2757 = vrot.slane %v2756, 4
        %v2758 = vadd.f32 %v2756, %v2757
        %v2759 = vrot.slane %v2758, 2
        %v2760 = vadd.f32 %v2758, %v2759
        %v2761 = vrot.slane %v2760, 1
        %v2762 = vadd.f32 %v2760, %v2761
        %v2763 = vrcp.pop %v2762
        %v2764 = vmul.f32 %v2751, %v2763
        %v2765 = vmul.f32 %v2753, %v2763
        %v2766 = vpack.c.bf16 %v2765, %v2764
        %v2768 = vsel %vm2230, %v2766, 0
        %2770 = vmatprep.subr.bf16.mxu0 0
        %2771 = vmatpush1.bf16.msra.mxu0 %v2163
        %2772 = vmatprep.subr.bf16.mxu0 0
        %2773 = vmatpush1.bf16.msra.mxu0 0
        %2774 = vmatprep.subr.bf16.mxu0 0
        %2775 = vmatpush1.bf16.msra.mxu0 0
        %2776 = vmatprep.subr.bf16.mxu0 0
        %2777 = vmatpush1.bf16.msra.mxu0 0
        %2778 = vmatprep.subr.bf16.mxu0 0
        %2779 = vmatpush1.bf16.msra.mxu0 0
        %2780 = vmatprep.subr.bf16.mxu0 0
        %2781 = vmatpush1.bf16.msra.mxu0 0
        %2782 = vmatprep.subr.bf16.mxu0 0
        %2783 = vmatpush1.bf16.msra.mxu0 0
        %2784 = vmatprep.subr.bf16.mxu0 0
        %2785 = vmatpush1.bf16.msra.mxu0 0
        %2786 = vmatprep.subr.bf16.mxu0 0
        %2787 = vmatpush1.bf16.msra.mxu0 0
        %2788 = vmatprep.subr.bf16.mxu0 0
        %2789 = vmatpush1.bf16.msra.mxu0 0
        %2790 = vmatprep.subr.bf16.mxu0 0
        %2791 = vmatpush1.bf16.msra.mxu0 0
        %2792 = vmatprep.subr.bf16.mxu0 0
        %2793 = vmatpush1.bf16.msra.mxu0 0
        %2794 = vmatprep.subr.bf16.mxu0 0
        %2795 = vmatpush1.bf16.msra.mxu0 0
        %2796 = vmatprep.subr.bf16.mxu0 0
        %2797 = vmatpush1.bf16.msra.mxu0 0
        %2798 = vmatprep.subr.bf16.mxu0 0
        %2799 = vmatpush1.bf16.msra.mxu0 0
        %2800 = vmatprep.subr.bf16.mxu0 0
        %2801 = vmatpush1.bf16.msra.mxu0 0
        %2802 = vmatprep.mubr.bf16.mxu0 0
        %2803 = vmatmul.mubr.bf16.gmra.mrb[0].mxu0 %v2768
        %v2804 = vpop.f32.mrb[0].mxu0
        %v2805 = vadd.f32 0.0, %v2804
        %v2806 = vpop.f32.mrb[0].mxu0
        %v2807 = vpop.f32.mrb[0].mxu0
        %v2808 = vadd.f32 0.0, %v2807
        %v2809 = vpop.f32.mrb[0].mxu0
        %2810 = vdwg.mxu0
        %v2811 = vpack.c.bf16 %v2808, %v2805
        %2813 = vrot.lane.b32.xlu0 %v2157, 64
        %v2814 = vpop.permute.xlu0 %2813
        %2816 = vrot.lane.b32.xlu0 %v2160, 64
        %v2817 = vpop.permute.xlu0 %2816
        %v2819 = vsel %vm2180, %v2814, 0
        %v2822 = vsel %vm2180, %v2817, 0
        %2824 = vmatprep.subr.bf16.mxu0 0
        %2825 = vmatpush1.bf16.xpose.msra.mxu0 %v2822
        %2826 = vmatprep.subr.bf16.mxu0 0
        %2827 = vmatpush1.bf16.xpose.msra.mxu0 0
        %2828 = vmatprep.subr.bf16.mxu0 0
        %2829 = vmatpush1.bf16.xpose.msra.mxu0 0
        %2830 = vmatprep.subr.bf16.mxu0 0
        %2831 = vmatpush1.bf16.xpose.msra.mxu0 0
        %2832 = vmatprep.subr.bf16.mxu0 0
        %2833 = vmatpush1.bf16.xpose.msra.mxu0 0
        %2834 = vmatprep.subr.bf16.mxu0 0
        %2835 = vmatpush1.bf16.xpose.msra.mxu0 0
        %2836 = vmatprep.subr.bf16.mxu0 0
        %2837 = vmatpush1.bf16.xpose.msra.mxu0 0
        %2838 = vmatprep.subr.bf16.mxu0 0
        %2839 = vmatpush1.bf16.xpose.msra.mxu0 0
        %2840 = vmatprep.subr.bf16.mxu0 0
        %2841 = vmatpush1.bf16.xpose.msra.mxu0 0
        %2842 = vmatprep.subr.bf16.mxu0 0
        %2843 = vmatpush1.bf16.xpose.msra.mxu0 0
        %2844 = vmatprep.subr.bf16.mxu0 0
        %2845 = vmatpush1.bf16.xpose.msra.mxu0 0
        %2846 = vmatprep.subr.bf16.mxu0 0
        %2847 = vmatpush1.bf16.xpose.msra.mxu0 0
        %2848 = vmatprep.subr.bf16.mxu0 0
        %2849 = vmatpush1.bf16.xpose.msra.mxu0 0
        %2850 = vmatprep.subr.bf16.mxu0 0
        %2851 = vmatpush1.bf16.xpose.msra.mxu0 0
        %2852 = vmatprep.subr.bf16.mxu0 0
        %2853 = vmatpush1.bf16.xpose.msra.mxu0 0
        %2854 = vmatprep.subr.bf16.mxu0 0
        %2855 = vmatpush1.bf16.xpose.msra.mxu0 0
        %2856 = vmatprep.mubr.bf16.mxu0 0
        %2857 = vmatmul.mubr.bf16.gmra.mrb[0].mxu0 %v2819
        %v2858 = vpop.f32.mrb[0].mxu0
        %v2859 = vadd.f32 0.0, %v2858
        %v2860 = vpop.f32.mrb[0].mxu0
        %v2861 = vpop.f32.mrb[0].mxu0
        %v2862 = vadd.f32 0.0, %v2861
        %v2863 = vpop.f32.mrb[0].mxu0
        %2864 = vdwg.mxu0
        %v2865 = vsel %vm2178, %v2859, -1e+30
        %v2866 = vsel %vm2179, %v2862, -1e+30
        %v2867 = vsel %vm2230, %v2865, -inf
        %v2868 = vsel %vm2230, %v2866, -inf
        %v2869 = vmax.f32 %v2867, %v2868
        %v2870 = vrot.slane %v2869, 4
        %v2871 = vmax.f32 %v2869, %v2870
        %v2872 = vrot.slane %v2871, 2
        %v2873 = vmax.f32 %v2871, %v2872
        %v2874 = vrot.slane %v2873, 1
        %v2875 = vmax.f32 %v2873, %v2874
        %v2876 = vsub.f32 %v2865, %v2875
        %v2877 = vsub.f32 %v2866, %v2875
        %v2878 = vmul.f32 %v2876, 1.442695
        %v2879 = vpow.pop %v2878
        %v2880 = vmul.f32 %v2877, 1.442695
        %v2881 = vpow.pop %v2880
        %v2882 = vsel %vm2230, %v2879, 0.0
        %v2883 = vsel %vm2230, %v2881, 0.0
        %v2884 = vadd.f32 %v2882, %v2883
        %v2885 = vrot.slane %v2884, 4
        %v2886 = vadd.f32 %v2884, %v2885
        %v2887 = vrot.slane %v2886, 2
        %v2888 = vadd.f32 %v2886, %v2887
        %v2889 = vrot.slane %v2888, 1
        %v2890 = vadd.f32 %v2888, %v2889
        %v2891 = vrcp.pop %v2890
        %v2892 = vmul.f32 %v2879, %v2891
        %v2893 = vmul.f32 %v2881, %v2891
        %v2894 = vpack.c.bf16 %v2893, %v2892
        %2896 = vrot.lane.b32.xlu0 %v2163, 64
        %v2897 = vpop.permute.xlu0 %2896
        %v2900 = vsel %vm2230, %v2894, 0
        %2902 = vmatprep.subr.bf16.mxu0 0
        %2903 = vmatpush1.bf16.msra.mxu0 %v2897
        %2904 = vmatprep.subr.bf16.mxu0 0
        %2905 = vmatpush1.bf16.msra.mxu0 0
        %2906 = vmatprep.subr.bf16.mxu0 0
        %2907 = vmatpush1.bf16.msra.mxu0 0
        %2908 = vmatprep.subr.bf16.mxu0 0
        %2909 = vmatpush1.bf16.msra.mxu0 0
        %2910 = vmatprep.subr.bf16.mxu0 0
        %2911 = vmatpush1.bf16.msra.mxu0 0
        %2912 = vmatprep.subr.bf16.mxu0 0
        %2913 = vmatpush1.bf16.msra.mxu0 0
        %2914 = vmatprep.subr.bf16.mxu0 0
        %2915 = vmatpush1.bf16.msra.mxu0 0
        %2916 = vmatprep.subr.bf16.mxu0 0
        %2917 = vmatpush1.bf16.msra.mxu0 0
        %2918 = vmatprep.subr.bf16.mxu0 0
        %2919 = vmatpush1.bf16.msra.mxu0 0
        %2920 = vmatprep.subr.bf16.mxu0 0
        %2921 = vmatpush1.bf16.msra.mxu0 0
        %2922 = vmatprep.subr.bf16.mxu0 0
        %2923 = vmatpush1.bf16.msra.mxu0 0
        %2924 = vmatprep.subr.bf16.mxu0 0
        %2925 = vmatpush1.bf16.msra.mxu0 0
        %2926 = vmatprep.subr.bf16.mxu0 0
        %2927 = vmatpush1.bf16.msra.mxu0 0
        %2928 = vmatprep.subr.bf16.mxu0 0
        %2929 = vmatpush1.bf16.msra.mxu0 0
        %2930 = vmatprep.subr.bf16.mxu0 0
        %2931 = vmatpush1.bf16.msra.mxu0 0
        %2932 = vmatprep.subr.bf16.mxu0 0
        %2933 = vmatpush1.bf16.msra.mxu0 0
        %2934 = vmatprep.mubr.bf16.mxu0 0
        %2935 = vmatmul.mubr.bf16.gmra.mrb[0].mxu0 %v2900
        %v2936 = vpop.f32.mrb[0].mxu0
        %v2937 = vadd.f32 0.0, %v2936
        %v2938 = vpop.f32.mrb[0].mxu0
        %v2939 = vpop.f32.mrb[0].mxu0
        %v2940 = vadd.f32 0.0, %v2939
        %v2941 = vpop.f32.mrb[0].mxu0
        %2942 = vdwg.mxu0
        %v2943 = vpack.c.bf16 %v2940, %v2937
        %2945 = vrot.lane.b32.xlu0 %v2435, 64
        %v2946 = vpop.permute.xlu0 %2945
        %2948 = vrot.lane.b32.xlu0 %v2689, 64
        %v2949 = vpop.permute.xlu0 %2948
        %2951 = vrot.lane.b32.xlu0 %v2943, 64
        %v2952 = vpop.permute.xlu0 %2951
        %v2955 = vsel %vm2180, %v2303, %v2946
        %v2959 = vsel %vm2180, %v2557, %v2949
        %v2963 = vsel %vm2180, %v2811, %v2952
        %v2966 = vsel %vm2180, %v2164, 0
        %v2969 = vsel %vm2180, %v2167, 0
        %2971 = vmatprep.subr.bf16.mxu0 0
        %2972 = vmatpush1.bf16.xpose.msra.mxu0 %v2969
        %2973 = vmatprep.subr.bf16.mxu0 0
        %2974 = vmatpush1.bf16.xpose.msra.mxu0 0
        %2975 = vmatprep.subr.bf16.mxu0 0
        %2976 = vmatpush1.bf16.xpose.msra.mxu0 0
        %2977 = vmatprep.subr.bf16.mxu0 0
        %2978 = vmatpush1.bf16.xpose.msra.mxu0 0
        %2979 = vmatprep.subr.bf16.mxu0 0
        %2980 = vmatpush1.bf16.xpose.msra.mxu0 0
        %2981 = vmatprep.subr.bf16.mxu0 0
        %2982 = vmatpush1.bf16.xpose.msra.mxu0 0
        %2983 = vmatprep.subr.bf16.mxu0 0
        %2984 = vmatpush1.bf16.xpose.msra.mxu0 0
        %2985 = vmatprep.subr.bf16.mxu0 0
        %2986 = vmatpush1.bf16.xpose.msra.mxu0 0
        %2987 = vmatprep.subr.bf16.mxu0 0
        %2988 = vmatpush1.bf16.xpose.msra.mxu0 0
        %2989 = vmatprep.subr.bf16.mxu0 0
        %2990 = vmatpush1.bf16.xpose.msra.mxu0 0
        %2991 = vmatprep.subr.bf16.mxu0 0
        %2992 = vmatpush1.bf16.xpose.msra.mxu0 0
        %2993 = vmatprep.subr.bf16.mxu0 0
        %2994 = vmatpush1.bf16.xpose.msra.mxu0 0
        %2995 = vmatprep.subr.bf16.mxu0 0
        %2996 = vmatpush1.bf16.xpose.msra.mxu0 0
        %2997 = vmatprep.subr.bf16.mxu0 0
        %2998 = vmatpush1.bf16.xpose.msra.mxu0 0
        %2999 = vmatprep.subr.bf16.mxu0 0
        %3000 = vmatpush1.bf16.xpose.msra.mxu0 0
        %3001 = vmatprep.subr.bf16.mxu0 0
        %3002 = vmatpush1.bf16.xpose.msra.mxu0 0
        %3003 = vmatprep.mubr.bf16.mxu0 0
        %3004 = vmatmul.mubr.bf16.gmra.mrb[0].mxu0 %v2966
        %v3005 = vpop.f32.mrb[0].mxu0
        %v3006 = vadd.f32 0.0, %v3005
        %v3007 = vpop.f32.mrb[0].mxu0
        %v3008 = vpop.f32.mrb[0].mxu0
        %v3009 = vadd.f32 0.0, %v3008
        %v3010 = vpop.f32.mrb[0].mxu0
        %3011 = vdwg.mxu0
        %v3012 = vsel %vm2178, %v3006, -1e+30
        %v3013 = vsel %vm2179, %v3009, -1e+30
        %v3014 = vsel %vm2230, %v3012, -inf
        %v3015 = vsel %vm2230, %v3013, -inf
        %v3016 = vmax.f32 %v3014, %v3015
        %v3017 = vrot.slane %v3016, 4
        %v3018 = vmax.f32 %v3016, %v3017
        %v3019 = vrot.slane %v3018, 2
        %v3020 = vmax.f32 %v3018, %v3019
        %v3021 = vrot.slane %v3020, 1
        %v3022 = vmax.f32 %v3020, %v3021
        %v3023 = vsub.f32 %v3012, %v3022
        %v3024 = vsub.f32 %v3013, %v3022
        %v3025 = vmul.f32 %v3023, 1.442695
        %v3026 = vpow.pop %v3025
        %v3027 = vmul.f32 %v3024, 1.442695
        %v3028 = vpow.pop %v3027
        %v3029 = vsel %vm2230, %v3026, 0.0
        %v3030 = vsel %vm2230, %v3028, 0.0
        %v3031 = vadd.f32 %v3029, %v3030
        %v3032 = vrot.slane %v3031, 4
        %v3033 = vadd.f32 %v3031, %v3032
        %v3034 = vrot.slane %v3033, 2
        %v3035 = vadd.f32 %v3033, %v3034
        %v3036 = vrot.slane %v3035, 1
        %v3037 = vadd.f32 %v3035, %v3036
        %v3038 = vrcp.pop %v3037
        %v3039 = vmul.f32 %v3026, %v3038
        %v3040 = vmul.f32 %v3028, %v3038
        %v3041 = vpack.c.bf16 %v3040, %v3039
        %v3043 = vsel %vm2230, %v3041, 0
        %3045 = vmatprep.subr.bf16.mxu0 0
        %3046 = vmatpush1.bf16.msra.mxu0 %v2170
        %3047 = vmatprep.subr.bf16.mxu0 0
        %3048 = vmatpush1.bf16.msra.mxu0 0
        %3049 = vmatprep.subr.bf16.mxu0 0
        %3050 = vmatpush1.bf16.msra.mxu0 0
        %3051 = vmatprep.subr.bf16.mxu0 0
        %3052 = vmatpush1.bf16.msra.mxu0 0
        %3053 = vmatprep.subr.bf16.mxu0 0
        %3054 = vmatpush1.bf16.msra.mxu0 0
        %3055 = vmatprep.subr.bf16.mxu0 0
        %3056 = vmatpush1.bf16.msra.mxu0 0
        %3057 = vmatprep.subr.bf16.mxu0 0
        %3058 = vmatpush1.bf16.msra.mxu0 0
        %3059 = vmatprep.subr.bf16.mxu0 0
        %3060 = vmatpush1.bf16.msra.mxu0 0
        %3061 = vmatprep.subr.bf16.mxu0 0
        %3062 = vmatpush1.bf16.msra.mxu0 0
        %3063 = vmatprep.subr.bf16.mxu0 0
        %3064 = vmatpush1.bf16.msra.mxu0 0
        %3065 = vmatprep.subr.bf16.mxu0 0
        %3066 = vmatpush1.bf16.msra.mxu0 0
        %3067 = vmatprep.subr.bf16.mxu0 0
        %3068 = vmatpush1.bf16.msra.mxu0 0
        %3069 = vmatprep.subr.bf16.mxu0 0
        %3070 = vmatpush1.bf16.msra.mxu0 0
        %3071 = vmatprep.subr.bf16.mxu0 0
        %3072 = vmatpush1.bf16.msra.mxu0 0
        %3073 = vmatprep.subr.bf16.mxu0 0
        %3074 = vmatpush1.bf16.msra.mxu0 0
        %3075 = vmatprep.subr.bf16.mxu0 0
        %3076 = vmatpush1.bf16.msra.mxu0 0
        %3077 = vmatprep.mubr.bf16.mxu0 0
        %3078 = vmatmul.mubr.bf16.gmra.mrb[0].mxu0 %v3043
        %v3079 = vpop.f32.mrb[0].mxu0
        %v3080 = vadd.f32 0.0, %v3079
        %v3081 = vpop.f32.mrb[0].mxu0
        %v3082 = vpop.f32.mrb[0].mxu0
        %v3083 = vadd.f32 0.0, %v3082
        %v3084 = vpop.f32.mrb[0].mxu0
        %3085 = vdwg.mxu0
        %v3086 = vpack.c.bf16 %v3083, %v3080
        %3088 = vrot.lane.b32.xlu0 %v2164, 64
        %v3089 = vpop.permute.xlu0 %3088
        %3091 = vrot.lane.b32.xlu0 %v2167, 64
        %v3092 = vpop.permute.xlu0 %3091
        %v3094 = vsel %vm2180, %v3089, 0
        %v3097 = vsel %vm2180, %v3092, 0
        %3099 = vmatprep.subr.bf16.mxu0 0
        %3100 = vmatpush1.bf16.xpose.msra.mxu0 %v3097
        %3101 = vmatprep.subr.bf16.mxu0 0
        %3102 = vmatpush1.bf16.xpose.msra.mxu0 0
        %3103 = vmatprep.subr.bf16.mxu0 0
        %3104 = vmatpush1.bf16.xpose.msra.mxu0 0
        %3105 = vmatprep.subr.bf16.mxu0 0
        %3106 = vmatpush1.bf16.xpose.msra.mxu0 0
        %3107 = vmatprep.subr.bf16.mxu0 0
        %3108 = vmatpush1.bf16.xpose.msra.mxu0 0
        %3109 = vmatprep.subr.bf16.mxu0 0
        %3110 = vmatpush1.bf16.xpose.msra.mxu0 0
        %3111 = vmatprep.subr.bf16.mxu0 0
        %3112 = vmatpush1.bf16.xpose.msra.mxu0 0
        %3113 = vmatprep.subr.bf16.mxu0 0
        %3114 = vmatpush1.bf16.xpose.msra.mxu0 0
        %3115 = vmatprep.subr.bf16.mxu0 0
        %3116 = vmatpush1.bf16.xpose.msra.mxu0 0
        %3117 = vmatprep.subr.bf16.mxu0 0
        %3118 = vmatpush1.bf16.xpose.msra.mxu0 0
        %3119 = vmatprep.subr.bf16.mxu0 0
        %3120 = vmatpush1.bf16.xpose.msra.mxu0 0
        %3121 = vmatprep.subr.bf16.mxu0 0
        %3122 = vmatpush1.bf16.xpose.msra.mxu0 0
        %3123 = vmatprep.subr.bf16.mxu0 0
        %3124 = vmatpush1.bf16.xpose.msra.mxu0 0
        %3125 = vmatprep.subr.bf16.mxu0 0
        %3126 = vmatpush1.bf16.xpose.msra.mxu0 0
        %3127 = vmatprep.subr.bf16.mxu0 0
        %3128 = vmatpush1.bf16.xpose.msra.mxu0 0
        %3129 = vmatprep.subr.bf16.mxu0 0
        %3130 = vmatpush1.bf16.xpose.msra.mxu0 0
        %3131 = vmatprep.mubr.bf16.mxu0 0
        %3132 = vmatmul.mubr.bf16.gmra.mrb[0].mxu0 %v3094
        %v3133 = vpop.f32.mrb[0].mxu0
        %v3134 = vadd.f32 0.0, %v3133
        %v3135 = vpop.f32.mrb[0].mxu0
        %v3136 = vpop.f32.mrb[0].mxu0
        %v3137 = vadd.f32 0.0, %v3136
        %v3138 = vpop.f32.mrb[0].mxu0
        %3139 = vdwg.mxu0
        %v3140 = vsel %vm2178, %v3134, -1e+30
        %v3141 = vsel %vm2179, %v3137, -1e+30
        %v3142 = vsel %vm2230, %v3140, -inf
        %v3143 = vsel %vm2230, %v3141, -inf
        %v3144 = vmax.f32 %v3142, %v3143
        %v3145 = vrot.slane %v3144, 4
        %v3146 = vmax.f32 %v3144, %v3145
        %v3147 = vrot.slane %v3146, 2
        %v3148 = vmax.f32 %v3146, %v3147
        %v3149 = vrot.slane %v3148, 1
        %v3150 = vmax.f32 %v3148, %v3149
        %v3151 = vsub.f32 %v3140, %v3150
        %v3152 = vsub.f32 %v3141, %v3150
        %v3153 = vmul.f32 %v3151, 1.442695
        %v3154 = vpow.pop %v3153
        %v3155 = vmul.f32 %v3152, 1.442695
        %v3156 = vpow.pop %v3155
        %v3157 = vsel %vm2230, %v3154, 0.0
        %v3158 = vsel %vm2230, %v3156, 0.0
        %v3159 = vadd.f32 %v3157, %v3158
        %v3160 = vrot.slane %v3159, 4
        %v3161 = vadd.f32 %v3159, %v3160
        %v3162 = vrot.slane %v3161, 2
        %v3163 = vadd.f32 %v3161, %v3162
        %v3164 = vrot.slane %v3163, 1
        %v3165 = vadd.f32 %v3163, %v3164
        %v3166 = vrcp.pop %v3165
        %v3167 = vmul.f32 %v3154, %v3166
        %v3168 = vmul.f32 %v3156, %v3166
        %v3169 = vpack.c.bf16 %v3168, %v3167
        %3171 = vrot.lane.b32.xlu0 %v2170, 64
        %v3172 = vpop.permute.xlu0 %3171
        %v3175 = vsel %vm2230, %v3169, 0
        %3177 = vmatprep.subr.bf16.mxu0 0
        %3178 = vmatpush1.bf16.msra.mxu0 %v3172
        %3179 = vmatprep.subr.bf16.mxu0 0
        %3180 = vmatpush1.bf16.msra.mxu0 0
        %3181 = vmatprep.subr.bf16.mxu0 0
        %3182 = vmatpush1.bf16.msra.mxu0 0
        %3183 = vmatprep.subr.bf16.mxu0 0
        %3184 = vmatpush1.bf16.msra.mxu0 0
        %3185 = vmatprep.subr.bf16.mxu0 0
        %3186 = vmatpush1.bf16.msra.mxu0 0
        %3187 = vmatprep.subr.bf16.mxu0 0
        %3188 = vmatpush1.bf16.msra.mxu0 0
        %3189 = vmatprep.subr.bf16.mxu0 0
        %3190 = vmatpush1.bf16.msra.mxu0 0
        %3191 = vmatprep.subr.bf16.mxu0 0
        %3192 = vmatpush1.bf16.msra.mxu0 0
        %3193 = vmatprep.subr.bf16.mxu0 0
        %3194 = vmatpush1.bf16.msra.mxu0 0
        %3195 = vmatprep.subr.bf16.mxu0 0
        %3196 = vmatpush1.bf16.msra.mxu0 0
        %3197 = vmatprep.subr.bf16.mxu0 0
        %3198 = vmatpush1.bf16.msra.mxu0 0
        %3199 = vmatprep.subr.bf16.mxu0 0
        %3200 = vmatpush1.bf16.msra.mxu0 0
        %3201 = vmatprep.subr.bf16.mxu0 0
        %3202 = vmatpush1.bf16.msra.mxu0 0
        %3203 = vmatprep.subr.bf16.mxu0 0
        %3204 = vmatpush1.bf16.msra.mxu0 0
        %3205 = vmatprep.subr.bf16.mxu0 0
        %3206 = vmatpush1.bf16.msra.mxu0 0
        %3207 = vmatprep.subr.bf16.mxu0 0
        %3208 = vmatpush1.bf16.msra.mxu0 0
        %3209 = vmatprep.mubr.bf16.mxu0 0
        %3210 = vmatmul.mubr.bf16.gmra.mrb[0].mxu0 %v3175
        %v3211 = vpop.f32.mrb[0].mxu0
        %v3212 = vadd.f32 0.0, %v3211
        %v3213 = vpop.f32.mrb[0].mxu0
        %v3214 = vpop.f32.mrb[0].mxu0
        %v3215 = vadd.f32 0.0, %v3214
        %v3216 = vpop.f32.mrb[0].mxu0
        %3217 = vdwg.mxu0
        %v3218 = vpack.c.bf16 %v3215, %v3212
        %v3220 = vsel %vm2180, %v2165, 0
        %v3223 = vsel %vm2180, %v2168, 0
        %3225 = vmatprep.subr.bf16.mxu0 0
        %3226 = vmatpush1.bf16.xpose.msra.mxu0 %v3223
        %3227 = vmatprep.subr.bf16.mxu0 0
        %3228 = vmatpush1.bf16.xpose.msra.mxu0 0
        %3229 = vmatprep.subr.bf16.mxu0 0
        %3230 = vmatpush1.bf16.xpose.msra.mxu0 0
        %3231 = vmatprep.subr.bf16.mxu0 0
        %3232 = vmatpush1.bf16.xpose.msra.mxu0 0
        %3233 = vmatprep.subr.bf16.mxu0 0
        %3234 = vmatpush1.bf16.xpose.msra.mxu0 0
        %3235 = vmatprep.subr.bf16.mxu0 0
        %3236 = vmatpush1.bf16.xpose.msra.mxu0 0
        %3237 = vmatprep.subr.bf16.mxu0 0
        %3238 = vmatpush1.bf16.xpose.msra.mxu0 0
        %3239 = vmatprep.subr.bf16.mxu0 0
        %3240 = vmatpush1.bf16.xpose.msra.mxu0 0
        %3241 = vmatprep.subr.bf16.mxu0 0
        %3242 = vmatpush1.bf16.xpose.msra.mxu0 0
        %3243 = vmatprep.subr.bf16.mxu0 0
        %3244 = vmatpush1.bf16.xpose.msra.mxu0 0
        %3245 = vmatprep.subr.bf16.mxu0 0
        %3246 = vmatpush1.bf16.xpose.msra.mxu0 0
        %3247 = vmatprep.subr.bf16.mxu0 0
        %3248 = vmatpush1.bf16.xpose.msra.mxu0 0
        %3249 = vmatprep.subr.bf16.mxu0 0
        %3250 = vmatpush1.bf16.xpose.msra.mxu0 0
        %3251 = vmatprep.subr.bf16.mxu0 0
        %3252 = vmatpush1.bf16.xpose.msra.mxu0 0
        %3253 = vmatprep.subr.bf16.mxu0 0
        %3254 = vmatpush1.bf16.xpose.msra.mxu0 0
        %3255 = vmatprep.subr.bf16.mxu0 0
        %3256 = vmatpush1.bf16.xpose.msra.mxu0 0
        %3257 = vmatprep.mubr.bf16.mxu0 0
        %3258 = vmatmul.mubr.bf16.gmra.mrb[0].mxu0 %v3220
        %v3259 = vpop.f32.mrb[0].mxu0
        %v3260 = vadd.f32 0.0, %v3259
        %v3261 = vpop.f32.mrb[0].mxu0
        %v3262 = vpop.f32.mrb[0].mxu0
        %v3263 = vadd.f32 0.0, %v3262
        %v3264 = vpop.f32.mrb[0].mxu0
        %3265 = vdwg.mxu0
        %v3266 = vsel %vm2178, %v3260, -1e+30
        %v3267 = vsel %vm2179, %v3263, -1e+30
        %v3268 = vsel %vm2230, %v3266, -inf
        %v3269 = vsel %vm2230, %v3267, -inf
        %v3270 = vmax.f32 %v3268, %v3269
        %v3271 = vrot.slane %v3270, 4
        %v3272 = vmax.f32 %v3270, %v3271
        %v3273 = vrot.slane %v3272, 2
        %v3274 = vmax.f32 %v3272, %v3273
        %v3275 = vrot.slane %v3274, 1
        %v3276 = vmax.f32 %v3274, %v3275
        %v3277 = vsub.f32 %v3266, %v3276
        %v3278 = vsub.f32 %v3267, %v3276
        %v3279 = vmul.f32 %v3277, 1.442695
        %v3280 = vpow.pop %v3279
        %v3281 = vmul.f32 %v3278, 1.442695
        %v3282 = vpow.pop %v3281
        %v3283 = vsel %vm2230, %v3280, 0.0
        %v3284 = vsel %vm2230, %v3282, 0.0
        %v3285 = vadd.f32 %v3283, %v3284
        %v3286 = vrot.slane %v3285, 4
        %v3287 = vadd.f32 %v3285, %v3286
        %v3288 = vrot.slane %v3287, 2
        %v3289 = vadd.f32 %v3287, %v3288
        %v3290 = vrot.slane %v3289, 1
        %v3291 = vadd.f32 %v3289, %v3290
        %v3292 = vrcp.pop %v3291
        %v3293 = vmul.f32 %v3280, %v3292
        %v3294 = vmul.f32 %v3282, %v3292
        %v3295 = vpack.c.bf16 %v3294, %v3293
        %v3297 = vsel %vm2230, %v3295, 0
        %3299 = vmatprep.subr.bf16.mxu0 0
        %3300 = vmatpush1.bf16.msra.mxu0 %v2171
        %3301 = vmatprep.subr.bf16.mxu0 0
        %3302 = vmatpush1.bf16.msra.mxu0 0
        %3303 = vmatprep.subr.bf16.mxu0 0
        %3304 = vmatpush1.bf16.msra.mxu0 0
        %3305 = vmatprep.subr.bf16.mxu0 0
        %3306 = vmatpush1.bf16.msra.mxu0 0
        %3307 = vmatprep.subr.bf16.mxu0 0
        %3308 = vmatpush1.bf16.msra.mxu0 0
        %3309 = vmatprep.subr.bf16.mxu0 0
        %3310 = vmatpush1.bf16.msra.mxu0 0
        %3311 = vmatprep.subr.bf16.mxu0 0
        %3312 = vmatpush1.bf16.msra.mxu0 0
        %3313 = vmatprep.subr.bf16.mxu0 0
        %3314 = vmatpush1.bf16.msra.mxu0 0
        %3315 = vmatprep.subr.bf16.mxu0 0
        %3316 = vmatpush1.bf16.msra.mxu0 0
        %3317 = vmatprep.subr.bf16.mxu0 0
        %3318 = vmatpush1.bf16.msra.mxu0 0
        %3319 = vmatprep.subr.bf16.mxu0 0
        %3320 = vmatpush1.bf16.msra.mxu0 0
        %3321 = vmatprep.subr.bf16.mxu0 0
        %3322 = vmatpush1.bf16.msra.mxu0 0
        %3323 = vmatprep.subr.bf16.mxu0 0
        %3324 = vmatpush1.bf16.msra.mxu0 0
        %3325 = vmatprep.subr.bf16.mxu0 0
        %3326 = vmatpush1.bf16.msra.mxu0 0
        %3327 = vmatprep.subr.bf16.mxu0 0
        %3328 = vmatpush1.bf16.msra.mxu0 0
        %3329 = vmatprep.subr.bf16.mxu0 0
        %3330 = vmatpush1.bf16.msra.mxu0 0
        %3331 = vmatprep.mubr.bf16.mxu0 0
        %3332 = vmatmul.mubr.bf16.gmra.mrb[0].mxu0 %v3297
        %v3333 = vpop.f32.mrb[0].mxu0
        %v3334 = vadd.f32 0.0, %v3333
        %v3335 = vpop.f32.mrb[0].mxu0
        %v3336 = vpop.f32.mrb[0].mxu0
        %v3337 = vadd.f32 0.0, %v3336
        %v3338 = vpop.f32.mrb[0].mxu0
        %3339 = vdwg.mxu0
        %v3340 = vpack.c.bf16 %v3337, %v3334
        %3342 = vrot.lane.b32.xlu0 %v2165, 64
        %v3343 = vpop.permute.xlu0 %3342
        %3345 = vrot.lane.b32.xlu0 %v2168, 64
        %v3346 = vpop.permute.xlu0 %3345
        %v3348 = vsel %vm2180, %v3343, 0
        %v3351 = vsel %vm2180, %v3346, 0
        %3353 = vmatprep.subr.bf16.mxu0 0
        %3354 = vmatpush1.bf16.xpose.msra.mxu0 %v3351
        %3355 = vmatprep.subr.bf16.mxu0 0
        %3356 = vmatpush1.bf16.xpose.msra.mxu0 0
        %3357 = vmatprep.subr.bf16.mxu0 0
        %3358 = vmatpush1.bf16.xpose.msra.mxu0 0
        %3359 = vmatprep.subr.bf16.mxu0 0
        %3360 = vmatpush1.bf16.xpose.msra.mxu0 0
        %3361 = vmatprep.subr.bf16.mxu0 0
        %3362 = vmatpush1.bf16.xpose.msra.mxu0 0
        %3363 = vmatprep.subr.bf16.mxu0 0
        %3364 = vmatpush1.bf16.xpose.msra.mxu0 0
        %3365 = vmatprep.subr.bf16.mxu0 0
        %3366 = vmatpush1.bf16.xpose.msra.mxu0 0
        %3367 = vmatprep.subr.bf16.mxu0 0
        %3368 = vmatpush1.bf16.xpose.msra.mxu0 0
        %3369 = vmatprep.subr.bf16.mxu0 0
        %3370 = vmatpush1.bf16.xpose.msra.mxu0 0
        %3371 = vmatprep.subr.bf16.mxu0 0
        %3372 = vmatpush1.bf16.xpose.msra.mxu0 0
        %3373 = vmatprep.subr.bf16.mxu0 0
        %3374 = vmatpush1.bf16.xpose.msra.mxu0 0
        %3375 = vmatprep.subr.bf16.mxu0 0
        %3376 = vmatpush1.bf16.xpose.msra.mxu0 0
        %3377 = vmatprep.subr.bf16.mxu0 0
        %3378 = vmatpush1.bf16.xpose.msra.mxu0 0
        %3379 = vmatprep.subr.bf16.mxu0 0
        %3380 = vmatpush1.bf16.xpose.msra.mxu0 0
        %3381 = vmatprep.subr.bf16.mxu0 0
        %3382 = vmatpush1.bf16.xpose.msra.mxu0 0
        %3383 = vmatprep.subr.bf16.mxu0 0
        %3384 = vmatpush1.bf16.xpose.msra.mxu0 0
        %3385 = vmatprep.mubr.bf16.mxu0 0
        %3386 = vmatmul.mubr.bf16.gmra.mrb[0].mxu0 %v3348
        %v3387 = vpop.f32.mrb[0].mxu0
        %v3388 = vadd.f32 0.0, %v3387
        %v3389 = vpop.f32.mrb[0].mxu0
        %v3390 = vpop.f32.mrb[0].mxu0
        %v3391 = vadd.f32 0.0, %v3390
        %v3392 = vpop.f32.mrb[0].mxu0
        %3393 = vdwg.mxu0
        %v3394 = vsel %vm2178, %v3388, -1e+30
        %v3395 = vsel %vm2179, %v3391, -1e+30
        %v3396 = vsel %vm2230, %v3394, -inf
        %v3397 = vsel %vm2230, %v3395, -inf
        %v3398 = vmax.f32 %v3396, %v3397
        %v3399 = vrot.slane %v3398, 4
        %v3400 = vmax.f32 %v3398, %v3399
        %v3401 = vrot.slane %v3400, 2
        %v3402 = vmax.f32 %v3400, %v3401
        %v3403 = vrot.slane %v3402, 1
        %v3404 = vmax.f32 %v3402, %v3403
        %v3405 = vsub.f32 %v3394, %v3404
        %v3406 = vsub.f32 %v3395, %v3404
        %v3407 = vmul.f32 %v3405, 1.442695
        %v3408 = vpow.pop %v3407
        %v3409 = vmul.f32 %v3406, 1.442695
        %v3410 = vpow.pop %v3409
        %v3411 = vsel %vm2230, %v3408, 0.0
        %v3412 = vsel %vm2230, %v3410, 0.0
        %v3413 = vadd.f32 %v3411, %v3412
        %v3414 = vrot.slane %v3413, 4
        %v3415 = vadd.f32 %v3413, %v3414
        %v3416 = vrot.slane %v3415, 2
        %v3417 = vadd.f32 %v3415, %v3416
        %v3418 = vrot.slane %v3417, 1
        %v3419 = vadd.f32 %v3417, %v3418
        %v3420 = vrcp.pop %v3419
        %v3421 = vmul.f32 %v3408, %v3420
        %v3422 = vmul.f32 %v3410, %v3420
        %v3423 = vpack.c.bf16 %v3422, %v3421
        %3425 = vrot.lane.b32.xlu0 %v2171, 64
        %v3426 = vpop.permute.xlu0 %3425
        %v3429 = vsel %vm2230, %v3423, 0
        %3431 = vmatprep.subr.bf16.mxu0 0
        %3432 = vmatpush1.bf16.msra.mxu0 %v3426
        %3433 = vmatprep.subr.bf16.mxu0 0
        %3434 = vmatpush1.bf16.msra.mxu0 0
        %3435 = vmatprep.subr.bf16.mxu0 0
        %3436 = vmatpush1.bf16.msra.mxu0 0
        %3437 = vmatprep.subr.bf16.mxu0 0
        %3438 = vmatpush1.bf16.msra.mxu0 0
        %3439 = vmatprep.subr.bf16.mxu0 0
        %3440 = vmatpush1.bf16.msra.mxu0 0
        %3441 = vmatprep.subr.bf16.mxu0 0
        %3442 = vmatpush1.bf16.msra.mxu0 0
        %3443 = vmatprep.subr.bf16.mxu0 0
        %3444 = vmatpush1.bf16.msra.mxu0 0
        %3445 = vmatprep.subr.bf16.mxu0 0
        %3446 = vmatpush1.bf16.msra.mxu0 0
        %3447 = vmatprep.subr.bf16.mxu0 0
        %3448 = vmatpush1.bf16.msra.mxu0 0
        %3449 = vmatprep.subr.bf16.mxu0 0
        %3450 = vmatpush1.bf16.msra.mxu0 0
        %3451 = vmatprep.subr.bf16.mxu0 0
        %3452 = vmatpush1.bf16.msra.mxu0 0
        %3453 = vmatprep.subr.bf16.mxu0 0
        %3454 = vmatpush1.bf16.msra.mxu0 0
        %3455 = vmatprep.subr.bf16.mxu0 0
        %3456 = vmatpush1.bf16.msra.mxu0 0
        %3457 = vmatprep.subr.bf16.mxu0 0
        %3458 = vmatpush1.bf16.msra.mxu0 0
        %3459 = vmatprep.subr.bf16.mxu0 0
        %3460 = vmatpush1.bf16.msra.mxu0 0
        %3461 = vmatprep.subr.bf16.mxu0 0
        %3462 = vmatpush1.bf16.msra.mxu0 0
        %3463 = vmatprep.mubr.bf16.mxu0 0
        %3464 = vmatmul.mubr.bf16.gmra.mrb[0].mxu0 %v3429
        %v3465 = vpop.f32.mrb[0].mxu0
        %v3466 = vadd.f32 0.0, %v3465
        %v3467 = vpop.f32.mrb[0].mxu0
        %v3468 = vpop.f32.mrb[0].mxu0
        %v3469 = vadd.f32 0.0, %v3468
        %v3470 = vpop.f32.mrb[0].mxu0
        %3471 = vdwg.mxu0
        %v3472 = vpack.c.bf16 %v3469, %v3466
        %v3474 = vsel %vm2180, %v2166, 0
        %v3477 = vsel %vm2180, %v2169, 0
        %3479 = vmatprep.subr.bf16.mxu0 0
        %3480 = vmatpush1.bf16.xpose.msra.mxu0 %v3477
        %3481 = vmatprep.subr.bf16.mxu0 0
        %3482 = vmatpush1.bf16.xpose.msra.mxu0 0
        %3483 = vmatprep.subr.bf16.mxu0 0
        %3484 = vmatpush1.bf16.xpose.msra.mxu0 0
        %3485 = vmatprep.subr.bf16.mxu0 0
        %3486 = vmatpush1.bf16.xpose.msra.mxu0 0
        %3487 = vmatprep.subr.bf16.mxu0 0
        %3488 = vmatpush1.bf16.xpose.msra.mxu0 0
        %3489 = vmatprep.subr.bf16.mxu0 0
        %3490 = vmatpush1.bf16.xpose.msra.mxu0 0
        %3491 = vmatprep.subr.bf16.mxu0 0
        %3492 = vmatpush1.bf16.xpose.msra.mxu0 0
        %3493 = vmatprep.subr.bf16.mxu0 0
        %3494 = vmatpush1.bf16.xpose.msra.mxu0 0
        %3495 = vmatprep.subr.bf16.mxu0 0
        %3496 = vmatpush1.bf16.xpose.msra.mxu0 0
        %3497 = vmatprep.subr.bf16.mxu0 0
        %3498 = vmatpush1.bf16.xpose.msra.mxu0 0
        %3499 = vmatprep.subr.bf16.mxu0 0
        %3500 = vmatpush1.bf16.xpose.msra.mxu0 0
        %3501 = vmatprep.subr.bf16.mxu0 0
        %3502 = vmatpush1.bf16.xpose.msra.mxu0 0
        %3503 = vmatprep.subr.bf16.mxu0 0
        %3504 = vmatpush1.bf16.xpose.msra.mxu0 0
        %3505 = vmatprep.subr.bf16.mxu0 0
        %3506 = vmatpush1.bf16.xpose.msra.mxu0 0
        %3507 = vmatprep.subr.bf16.mxu0 0
        %3508 = vmatpush1.bf16.xpose.msra.mxu0 0
        %3509 = vmatprep.subr.bf16.mxu0 0
        %3510 = vmatpush1.bf16.xpose.msra.mxu0 0
        %3511 = vmatprep.mubr.bf16.mxu0 0
        %3512 = vmatmul.mubr.bf16.gmra.mrb[0].mxu0 %v3474
        %v3513 = vpop.f32.mrb[0].mxu0
        %v3514 = vadd.f32 0.0, %v3513
        %v3515 = vpop.f32.mrb[0].mxu0
        %v3516 = vpop.f32.mrb[0].mxu0
        %v3517 = vadd.f32 0.0, %v3516
        %v3518 = vpop.f32.mrb[0].mxu0
        %3519 = vdwg.mxu0
        %v3520 = vsel %vm2178, %v3514, -1e+30
        %v3521 = vsel %vm2179, %v3517, -1e+30
        %v3522 = vsel %vm2230, %v3520, -inf
        %v3523 = vsel %vm2230, %v3521, -inf
        %v3524 = vmax.f32 %v3522, %v3523
        %v3525 = vrot.slane %v3524, 4
        %v3526 = vmax.f32 %v3524, %v3525
        %v3527 = vrot.slane %v3526, 2
        %v3528 = vmax.f32 %v3526, %v3527
        %v3529 = vrot.slane %v3528, 1
        %v3530 = vmax.f32 %v3528, %v3529
        %v3531 = vsub.f32 %v3520, %v3530
        %v3532 = vsub.f32 %v3521, %v3530
        %v3533 = vmul.f32 %v3531, 1.442695
        %v3534 = vpow.pop %v3533
        %v3535 = vmul.f32 %v3532, 1.442695
        %v3536 = vpow.pop %v3535
        %v3537 = vsel %vm2230, %v3534, 0.0
        %v3538 = vsel %vm2230, %v3536, 0.0
        %v3539 = vadd.f32 %v3537, %v3538
        %v3540 = vrot.slane %v3539, 4
        %v3541 = vadd.f32 %v3539, %v3540
        %v3542 = vrot.slane %v3541, 2
        %v3543 = vadd.f32 %v3541, %v3542
        %v3544 = vrot.slane %v3543, 1
        %v3545 = vadd.f32 %v3543, %v3544
        %v3546 = vrcp.pop %v3545
        %v3547 = vmul.f32 %v3534, %v3546
        %v3548 = vmul.f32 %v3536, %v3546
        %v3549 = vpack.c.bf16 %v3548, %v3547
        %v3551 = vsel %vm2230, %v3549, 0
        %3553 = vmatprep.subr.bf16.mxu0 0
        %3554 = vmatpush1.bf16.msra.mxu0 %v2172
        %3555 = vmatprep.subr.bf16.mxu0 0
        %3556 = vmatpush1.bf16.msra.mxu0 0
        %3557 = vmatprep.subr.bf16.mxu0 0
        %3558 = vmatpush1.bf16.msra.mxu0 0
        %3559 = vmatprep.subr.bf16.mxu0 0
        %3560 = vmatpush1.bf16.msra.mxu0 0
        %3561 = vmatprep.subr.bf16.mxu0 0
        %3562 = vmatpush1.bf16.msra.mxu0 0
        %3563 = vmatprep.subr.bf16.mxu0 0
        %3564 = vmatpush1.bf16.msra.mxu0 0
        %3565 = vmatprep.subr.bf16.mxu0 0
        %3566 = vmatpush1.bf16.msra.mxu0 0
        %3567 = vmatprep.subr.bf16.mxu0 0
        %3568 = vmatpush1.bf16.msra.mxu0 0
        %3569 = vmatprep.subr.bf16.mxu0 0
        %3570 = vmatpush1.bf16.msra.mxu0 0
        %3571 = vmatprep.subr.bf16.mxu0 0
        %3572 = vmatpush1.bf16.msra.mxu0 0
        %3573 = vmatprep.subr.bf16.mxu0 0
        %3574 = vmatpush1.bf16.msra.mxu0 0
        %3575 = vmatprep.subr.bf16.mxu0 0
        %3576 = vmatpush1.bf16.msra.mxu0 0
        %3577 = vmatprep.subr.bf16.mxu0 0
        %3578 = vmatpush1.bf16.msra.mxu0 0
        %3579 = vmatprep.subr.bf16.mxu0 0
        %3580 = vmatpush1.bf16.msra.mxu0 0
        %3581 = vmatprep.subr.bf16.mxu0 0
        %3582 = vmatpush1.bf16.msra.mxu0 0
        %3583 = vmatprep.subr.bf16.mxu0 0
        %3584 = vmatpush1.bf16.msra.mxu0 0
        %3585 = vmatprep.mubr.bf16.mxu0 0
        %3586 = vmatmul.mubr.bf16.gmra.mrb[0].mxu0 %v3551
        %v3587 = vpop.f32.mrb[0].mxu0
        %v3588 = vadd.f32 0.0, %v3587
        %v3589 = vpop.f32.mrb[0].mxu0
        %v3590 = vpop.f32.mrb[0].mxu0
        %v3591 = vadd.f32 0.0, %v3590
        %v3592 = vpop.f32.mrb[0].mxu0
        %3593 = vdwg.mxu0
        %v3594 = vpack.c.bf16 %v3591, %v3588
        %3596 = vrot.lane.b32.xlu0 %v2166, 64
        %v3597 = vpop.permute.xlu0 %3596
        %3599 = vrot.lane.b32.xlu0 %v2169, 64
        %v3600 = vpop.permute.xlu0 %3599
        %v3602 = vsel %vm2180, %v3597, 0
        %v3605 = vsel %vm2180, %v3600, 0
        %3607 = vmatprep.subr.bf16.mxu0 0
        %3608 = vmatpush1.bf16.xpose.msra.mxu0 %v3605
        %3609 = vmatprep.subr.bf16.mxu0 0
        %3610 = vmatpush1.bf16.xpose.msra.mxu0 0
        %3611 = vmatprep.subr.bf16.mxu0 0
        %3612 = vmatpush1.bf16.xpose.msra.mxu0 0
        %3613 = vmatprep.subr.bf16.mxu0 0
        %3614 = vmatpush1.bf16.xpose.msra.mxu0 0
        %3615 = vmatprep.subr.bf16.mxu0 0
        %3616 = vmatpush1.bf16.xpose.msra.mxu0 0
        %3617 = vmatprep.subr.bf16.mxu0 0
        %3618 = vmatpush1.bf16.xpose.msra.mxu0 0
        %3619 = vmatprep.subr.bf16.mxu0 0
        %3620 = vmatpush1.bf16.xpose.msra.mxu0 0
        %3621 = vmatprep.subr.bf16.mxu0 0
        %3622 = vmatpush1.bf16.xpose.msra.mxu0 0
        %3623 = vmatprep.subr.bf16.mxu0 0
        %3624 = vmatpush1.bf16.xpose.msra.mxu0 0
        %3625 = vmatprep.subr.bf16.mxu0 0
        %3626 = vmatpush1.bf16.xpose.msra.mxu0 0
        %3627 = vmatprep.subr.bf16.mxu0 0
        %3628 = vmatpush1.bf16.xpose.msra.mxu0 0
        %3629 = vmatprep.subr.bf16.mxu0 0
        %3630 = vmatpush1.bf16.xpose.msra.mxu0 0
        %3631 = vmatprep.subr.bf16.mxu0 0
        %3632 = vmatpush1.bf16.xpose.msra.mxu0 0
        %3633 = vmatprep.subr.bf16.mxu0 0
        %3634 = vmatpush1.bf16.xpose.msra.mxu0 0
        %3635 = vmatprep.subr.bf16.mxu0 0
        %3636 = vmatpush1.bf16.xpose.msra.mxu0 0
        %3637 = vmatprep.subr.bf16.mxu0 0
        %3638 = vmatpush1.bf16.xpose.msra.mxu0 0
        %3639 = vmatprep.mubr.bf16.mxu0 0
        %3640 = vmatmul.mubr.bf16.gmra.mrb[0].mxu0 %v3602
        %v3641 = vpop.f32.mrb[0].mxu0
        %v3642 = vadd.f32 0.0, %v3641
        %v3643 = vpop.f32.mrb[0].mxu0
        %v3644 = vpop.f32.mrb[0].mxu0
        %v3645 = vadd.f32 0.0, %v3644
        %v3646 = vpop.f32.mrb[0].mxu0
        %3647 = vdwg.mxu0
        %v3648 = vsel %vm2178, %v3642, -1e+30
        %v3649 = vsel %vm2179, %v3645, -1e+30
        %v3650 = vsel %vm2230, %v3648, -inf
        %v3651 = vsel %vm2230, %v3649, -inf
        %v3652 = vmax.f32 %v3650, %v3651
        %v3653 = vrot.slane %v3652, 4
        %v3654 = vmax.f32 %v3652, %v3653
        %v3655 = vrot.slane %v3654, 2
        %v3656 = vmax.f32 %v3654, %v3655
        %v3657 = vrot.slane %v3656, 1
        %v3658 = vmax.f32 %v3656, %v3657
        %v3659 = vsub.f32 %v3648, %v3658
        %v3660 = vsub.f32 %v3649, %v3658
        %v3661 = vmul.f32 %v3659, 1.442695
        %v3662 = vpow.pop %v3661
        %v3663 = vmul.f32 %v3660, 1.442695
        %v3664 = vpow.pop %v3663
        %v3665 = vsel %vm2230, %v3662, 0.0
        %v3666 = vsel %vm2230, %v3664, 0.0
        %v3667 = vadd.f32 %v3665, %v3666
        %v3668 = vrot.slane %v3667, 4
        %v3669 = vadd.f32 %v3667, %v3668
        %v3670 = vrot.slane %v3669, 2
        %v3671 = vadd.f32 %v3669, %v3670
        %v3672 = vrot.slane %v3671, 1
        %v3673 = vadd.f32 %v3671, %v3672
        %v3674 = vrcp.pop %v3673
        %v3675 = vmul.f32 %v3662, %v3674
        %v3676 = vmul.f32 %v3664, %v3674
        %v3677 = vpack.c.bf16 %v3676, %v3675
        %3679 = vrot.lane.b32.xlu0 %v2172, 64
        %v3680 = vpop.permute.xlu0 %3679
        %v3683 = vsel %vm2230, %v3677, 0
        %3685 = vmatprep.subr.bf16.mxu0 0
        %3686 = vmatpush1.bf16.msra.mxu0 %v3680
        %3687 = vmatprep.subr.bf16.mxu0 0
        %3688 = vmatpush1.bf16.msra.mxu0 0
        %3689 = vmatprep.subr.bf16.mxu0 0
        %3690 = vmatpush1.bf16.msra.mxu0 0
        %3691 = vmatprep.subr.bf16.mxu0 0
        %3692 = vmatpush1.bf16.msra.mxu0 0
        %3693 = vmatprep.subr.bf16.mxu0 0
        %3694 = vmatpush1.bf16.msra.mxu0 0
        %3695 = vmatprep.subr.bf16.mxu0 0
        %3696 = vmatpush1.bf16.msra.mxu0 0
        %3697 = vmatprep.subr.bf16.mxu0 0
        %3698 = vmatpush1.bf16.msra.mxu0 0
        %3699 = vmatprep.subr.bf16.mxu0 0
        %3700 = vmatpush1.bf16.msra.mxu0 0
        %3701 = vmatprep.subr.bf16.mxu0 0
        %3702 = vmatpush1.bf16.msra.mxu0 0
        %3703 = vmatprep.subr.bf16.mxu0 0
        %3704 = vmatpush1.bf16.msra.mxu0 0
        %3705 = vmatprep.subr.bf16.mxu0 0
        %3706 = vmatpush1.bf16.msra.mxu0 0
        %3707 = vmatprep.subr.bf16.mxu0 0
        %3708 = vmatpush1.bf16.msra.mxu0 0
        %3709 = vmatprep.subr.bf16.mxu0 0
        %3710 = vmatpush1.bf16.msra.mxu0 0
        %3711 = vmatprep.subr.bf16.mxu0 0
        %3712 = vmatpush1.bf16.msra.mxu0 0
        %3713 = vmatprep.subr.bf16.mxu0 0
        %3714 = vmatpush1.bf16.msra.mxu0 0
        %3715 = vmatprep.subr.bf16.mxu0 0
        %3716 = vmatpush1.bf16.msra.mxu0 0
        %3717 = vmatprep.mubr.bf16.mxu0 0
        %3718 = vmatmul.mubr.bf16.gmra.mrb[0].mxu0 %v3683
        %v3719 = vpop.f32.mrb[0].mxu0
        %v3720 = vadd.f32 0.0, %v3719
        %v3721 = vpop.f32.mrb[0].mxu0
        %v3722 = vpop.f32.mrb[0].mxu0
        %v3723 = vadd.f32 0.0, %v3722
        %v3724 = vpop.f32.mrb[0].mxu0
        %3725 = vdwg.mxu0
        %v3726 = vpack.c.bf16 %v3723, %v3720
        %3728 = vrot.lane.b32.xlu0 %v3218, 64
        %v3729 = vpop.permute.xlu0 %3728
        %3731 = vrot.lane.b32.xlu0 %v3472, 64
        %v3732 = vpop.permute.xlu0 %3731
        %3734 = vrot.lane.b32.xlu0 %v3726, 64
        %v3735 = vpop.permute.xlu0 %3734
        %v3738 = vsel %vm2180, %v3086, %v3729
        %v3742 = vsel %vm2180, %v3340, %v3732
        %v3746 = vsel %vm2180, %v3594, %v3735
        %v3748 = vld [vmem:[#allocation7] sm:$0xff]
        %v3749 = vld [vmem:[#allocation7 + $0x8] sm:$0xf]
        %v3750 = vld [vmem:[#allocation7 + $0xc] sm:$0xff]
        %v3751 = vld [vmem:[#allocation7 + $0x14] sm:$0xf]
        %v3752 = vld [vmem:[#allocation7 + $0x18] sm:$0xff]
        %v3753 = vld [vmem:[#allocation7 + $0x20] sm:$0xf]
        %v3754 = vld [vmem:[#allocation7 + $0x24] sm:$0xff]
        %v3755 = vld [vmem:[#allocation7 + $0x2c] sm:$0xf]
        %v3756 = vld [vmem:[#allocation7 + $0x30] sm:$0xff]
        %v3757 = vld [vmem:[#allocation7 + $0x38] sm:$0xf]
        %v3758 = vld [vmem:[#allocation7 + $0x3c] sm:$0xff]
        %v3759 = vld [vmem:[#allocation7 + $0x44] sm:$0xf]
        %v3760 = vld [vmem:[#allocation7 + $0x48] sm:$0xff]
        %v3761 = vld [vmem:[#allocation7 + $0x50] sm:$0xf]
        %v3762 = vld [vmem:[#allocation7 + $0x54] sm:$0xff]
        %v3763 = vld [vmem:[#allocation7 + $0x5c] sm:$0xf]
        %v3764 = vld [vmem:[#allocation7 + $0x60] sm:$0xff]
        %v3765 = vld [vmem:[#allocation7 + $0x68] sm:$0xf]
        %v3766 = vld [vmem:[#allocation7 + $0x6c] sm:$0xff]
        %v3767 = vld [vmem:[#allocation7 + $0x74] sm:$0xf]
        %v3768 = vld [vmem:[#allocation7 + $0x78] sm:$0xff]
        %v3769 = vld [vmem:[#allocation7 + $0x80] sm:$0xf]
        %v3770 = vld [vmem:[#allocation7 + $0x84] sm:$0xff]
        %v3771 = vld [vmem:[#allocation7 + $0x8c] sm:$0xf]
        %v3772 = vld [vmem:[#allocation7 + $0x90] sm:$0xff]
        %v3773 = vld [vmem:[#allocation7 + $0x98] sm:$0xf]
        %v3774 = vld [vmem:[#allocation7 + $0x9c] sm:$0xff]
        %v3775 = vld [vmem:[#allocation7 + $0xa4] sm:$0xf]
        %v3776 = vld [vmem:[#allocation7 + $0xa8] sm:$0xff]
        %v3777 = vld [vmem:[#allocation7 + $0xb0] sm:$0xf]
        %v3778 = vld [vmem:[#allocation7 + $0xb4] sm:$0xff]
        %v3779 = vld [vmem:[#allocation7 + $0xbc] sm:$0xf]
        %v3780 = vld [vmem:[#allocation7 + $0xc0] sm:$0xff]
        %v3781 = vld [vmem:[#allocation7 + $0xc8] sm:$0xf]
        %v3782 = vld [vmem:[#allocation7 + $0xcc] sm:$0xff]
        %v3783 = vld [vmem:[#allocation7 + $0xd4] sm:$0xf]
        %v3784 = vld [vmem:[#allocation7 + $0xd8] sm:$0xff]
        %v3785 = vld [vmem:[#allocation7 + $0xe0] sm:$0xf]
        %v3786 = vld [vmem:[#allocation7 + $0xe4] sm:$0xff]
        %v3787 = vld [vmem:[#allocation7 + $0xec] sm:$0xf]
        %v3788 = vld [vmem:[#allocation7 + $0xf0] sm:$0xff]
        %v3789 = vld [vmem:[#allocation7 + $0xf8] sm:$0xf]
        %v3790 = vld [vmem:[#allocation7 + $0xfc] sm:$0xff]
        %v3791 = vld [vmem:[#allocation7 + $0x104] sm:$0xf]
        %v3792 = vld [vmem:[#allocation7 + $0x108] sm:$0xff]
        %v3793 = vld [vmem:[#allocation7 + $0x110] sm:$0xf]
        %v3794 = vld [vmem:[#allocation7 + $0x114] sm:$0xff]
        %v3795 = vld [vmem:[#allocation7 + $0x11c] sm:$0xf]
        %v3796 = vld [vmem:[#allocation7 + $0x120] sm:$0xff]
        %v3797 = vld [vmem:[#allocation7 + $0x128] sm:$0xf]
        %v3798 = vld [vmem:[#allocation7 + $0x12c] sm:$0xff]
        %v3799 = vld [vmem:[#allocation7 + $0x134] sm:$0xf]
        %v3800 = vld [vmem:[#allocation7 + $0x138] sm:$0xff]
        %v3801 = vld [vmem:[#allocation7 + $0x140] sm:$0xf]
        %v3802 = vld [vmem:[#allocation7 + $0x144] sm:$0xff]
        %v3803 = vld [vmem:[#allocation7 + $0x14c] sm:$0xf]
        %v3804 = vld [vmem:[#allocation7 + $0x150] sm:$0xff]
        %v3805 = vld [vmem:[#allocation7 + $0x158] sm:$0xf]
        %v3806 = vld [vmem:[#allocation7 + $0x15c] sm:$0xff]
        %v3807 = vld [vmem:[#allocation7 + $0x164] sm:$0xf]
        %v3808 = vld [vmem:[#allocation7 + $0x168] sm:$0xff]
        %v3809 = vld [vmem:[#allocation7 + $0x170] sm:$0xf]
        %v3810 = vld [vmem:[#allocation7 + $0x174] sm:$0xff]
        %v3811 = vld [vmem:[#allocation7 + $0x17c] sm:$0xf]
        %v3812 = vld [vmem:[#allocation7 + $0x180] sm:$0xff]
        %v3813 = vld [vmem:[#allocation7 + $0x188] sm:$0xf]
        %v3814 = vld [vmem:[#allocation7 + $0x18c] sm:$0xff]
        %v3815 = vld [vmem:[#allocation7 + $0x194] sm:$0xf]
        %v3816 = vld [vmem:[#allocation7 + $0x198] sm:$0xff]
        %v3817 = vld [vmem:[#allocation7 + $0x1a0] sm:$0xf]
        %v3818 = vld [vmem:[#allocation7 + $0x1a4] sm:$0xff]
        %v3819 = vld [vmem:[#allocation7 + $0x1ac] sm:$0xf]
        %v3820 = vld [vmem:[#allocation7 + $0x1b0] sm:$0xff]
        %v3821 = vld [vmem:[#allocation7 + $0x1b8] sm:$0xf]
        %v3822 = vld [vmem:[#allocation7 + $0x1bc] sm:$0xff]
        %v3823 = vld [vmem:[#allocation7 + $0x1c4] sm:$0xf]
        %v3824 = vld [vmem:[#allocation7 + $0x1c8] sm:$0xff]
        %v3825 = vld [vmem:[#allocation7 + $0x1d0] sm:$0xf]
        %v3826 = vld [vmem:[#allocation7 + $0x1d4] sm:$0xff]
        %v3827 = vld [vmem:[#allocation7 + $0x1dc] sm:$0xf]
        %v3828 = vld [vmem:[#allocation7 + $0x1e0] sm:$0xff]
        %v3829 = vld [vmem:[#allocation7 + $0x1e8] sm:$0xf]
        %v3830 = vld [vmem:[#allocation7 + $0x1ec] sm:$0xff]
        %v3831 = vld [vmem:[#allocation7 + $0x1f4] sm:$0xf]
        %v3832 = vld [vmem:[#allocation7 + $0x1f8] sm:$0xff]
        %v3833 = vld [vmem:[#allocation7 + $0x200] sm:$0xf]
        %v3834 = vld [vmem:[#allocation7 + $0x204] sm:$0xff]
        %v3835 = vld [vmem:[#allocation7 + $0x20c] sm:$0xf]
        %v3836 = vld [vmem:[#allocation7 + $0x210] sm:$0xff]
        %v3837 = vld [vmem:[#allocation7 + $0x218] sm:$0xf]
        %v3838 = vld [vmem:[#allocation7 + $0x21c] sm:$0xff]
        %v3839 = vld [vmem:[#allocation7 + $0x224] sm:$0xf]
        %v3840 = vld [vmem:[#allocation7 + $0x228] sm:$0xff]
        %v3841 = vld [vmem:[#allocation7 + $0x230] sm:$0xf]
        %v3842 = vld [vmem:[#allocation7 + $0x234] sm:$0xff]
        %v3843 = vld [vmem:[#allocation7 + $0x23c] sm:$0xf]
        %v3844 = vld [vmem:[%s3] sm:$0x7]
        %v3846 = vlaneseq
        %v3847 = vshrl.u32 %v3846, 7
        %v3848 = vsub.s32 0, %v3847
        %v3849 = vrot.slane %v3844, %v3848
        %v3850 = vlaneseq
        %v3851 = vshrl.u32 %v3850, 7
        %v3852 = vsub.s32 1, %v3851
        %v3853 = vrot.slane %v3844, %v3852
        %v3854 = vlaneseq
        %v3855 = vshrl.u32 %v3854, 7
        %v3856 = vsub.s32 2, %v3855
        %v3857 = vrot.slane %v3844, %v3856
        %v3957 = vunpack.c.l.b16 %v3748
        %v3958 = vunpack.c.h.b16 %v3748
        %v3959 = vunpack.c.l.b16 %v3749
        %v3960 = vunpack.c.l.b16 %v3750
        %v3961 = vunpack.c.h.b16 %v3750
        %v3962 = vunpack.c.l.b16 %v3751
        %v3963 = vunpack.c.l.b16 %v3752
        %v3964 = vunpack.c.h.b16 %v3752
        %v3965 = vunpack.c.l.b16 %v3753
        %v3966 = vunpack.c.l.b16 %v3754
        %v3967 = vunpack.c.h.b16 %v3754
        %v3968 = vunpack.c.l.b16 %v3755
        %v3969 = vunpack.c.l.b16 %v3756
        %v3970 = vunpack.c.h.b16 %v3756
        %v3971 = vunpack.c.l.b16 %v3757
        %v3972 = vunpack.c.l.b16 %v3758
        %v3973 = vunpack.c.h.b16 %v3758
        %v3974 = vunpack.c.l.b16 %v3759
        %v3975 = vunpack.c.l.b16 %v3760
        %v3976 = vunpack.c.h.b16 %v3760
        %v3977 = vunpack.c.l.b16 %v3761
        %v3978 = vunpack.c.l.b16 %v3762
        %v3979 = vunpack.c.h.b16 %v3762
        %v3980 = vunpack.c.l.b16 %v3763
        %v3981 = vunpack.c.l.b16 %v3764
        %v3982 = vunpack.c.h.b16 %v3764
        %v3983 = vunpack.c.l.b16 %v3765
        %v3984 = vunpack.c.l.b16 %v3766
        %v3985 = vunpack.c.h.b16 %v3766
        %v3986 = vunpack.c.l.b16 %v3767
        %v3987 = vunpack.c.l.b16 %v3768
        %v3988 = vunpack.c.h.b16 %v3768
        %v3989 = vunpack.c.l.b16 %v3769
        %v3990 = vunpack.c.l.b16 %v3770
        %v3991 = vunpack.c.h.b16 %v3770
        %v3992 = vunpack.c.l.b16 %v3771
        %v3993 = vunpack.c.l.b16 %v3772
        %v3994 = vunpack.c.h.b16 %v3772
        %v3995 = vunpack.c.l.b16 %v3773
        %v3996 = vunpack.c.l.b16 %v3774
        %v3997 = vunpack.c.h.b16 %v3774
        %v3998 = vunpack.c.l.b16 %v3775
        %v3999 = vunpack.c.l.b16 %v3776
        %v4000 = vunpack.c.h.b16 %v3776
        %v4001 = vunpack.c.l.b16 %v3777
        %v4002 = vunpack.c.l.b16 %v3778
        %v4003 = vunpack.c.h.b16 %v3778
        %v4004 = vunpack.c.l.b16 %v3779
        %v4005 = vunpack.c.l.b16 %v3780
        %v4006 = vunpack.c.h.b16 %v3780
        %v4007 = vunpack.c.l.b16 %v3781
        %v4008 = vunpack.c.l.b16 %v3782
        %v4009 = vunpack.c.h.b16 %v3782
        %v4010 = vunpack.c.l.b16 %v3783
        %v4011 = vunpack.c.l.b16 %v3784
        %v4012 = vunpack.c.h.b16 %v3784
        %v4013 = vunpack.c.l.b16 %v3785
        %v4014 = vunpack.c.l.b16 %v3786
        %v4015 = vunpack.c.h.b16 %v3786
        %v4016 = vunpack.c.l.b16 %v3787
        %v4017 = vunpack.c.l.b16 %v3788
        %v4018 = vunpack.c.h.b16 %v3788
        %v4019 = vunpack.c.l.b16 %v3789
        %v4020 = vunpack.c.l.b16 %v3790
        %v4021 = vunpack.c.h.b16 %v3790
        %v4022 = vunpack.c.l.b16 %v3791
        %v4023 = vunpack.c.l.b16 %v3792
        %v4024 = vunpack.c.h.b16 %v3792
        %v4025 = vunpack.c.l.b16 %v3793
        %v4026 = vunpack.c.l.b16 %v3794
        %v4027 = vunpack.c.h.b16 %v3794
        %v4028 = vunpack.c.l.b16 %v3795
        %v4029 = vunpack.c.l.b16 %v3796
        %v4030 = vunpack.c.h.b16 %v3796
        %v4031 = vunpack.c.l.b16 %v3797
        %v4032 = vunpack.c.l.b16 %v3798
        %v4033 = vunpack.c.h.b16 %v3798
        %v4034 = vunpack.c.l.b16 %v3799
        %v4035 = vunpack.c.l.b16 %v3800
        %v4036 = vunpack.c.h.b16 %v3800
        %v4037 = vunpack.c.l.b16 %v3801
        %v4038 = vunpack.c.l.b16 %v3802
        %v4039 = vunpack.c.h.b16 %v3802
        %v4040 = vunpack.c.l.b16 %v3803
        %v4041 = vunpack.c.l.b16 %v3804
        %v4042 = vunpack.c.h.b16 %v3804
        %v4043 = vunpack.c.l.b16 %v3805
        %v4044 = vunpack.c.l.b16 %v3806
        %v4045 = vunpack.c.h.b16 %v3806
        %v4046 = vunpack.c.l.b16 %v3807
        %v4047 = vunpack.c.l.b16 %v3808
        %v4048 = vunpack.c.h.b16 %v3808
        %v4049 = vunpack.c.l.b16 %v3809
        %v4050 = vunpack.c.l.b16 %v3810
        %v4051 = vunpack.c.h.b16 %v3810
        %v4052 = vunpack.c.l.b16 %v3811
        %v4053 = vunpack.c.l.b16 %v3812
        %v4054 = vunpack.c.h.b16 %v3812
        %v4055 = vunpack.c.l.b16 %v3813
        %v4056 = vunpack.c.l.b16 %v3814
        %v4057 = vunpack.c.h.b16 %v3814
        %v4058 = vunpack.c.l.b16 %v3815
        %v4059 = vunpack.c.l.b16 %v3816
        %v4060 = vunpack.c.h.b16 %v3816
        %v4061 = vunpack.c.l.b16 %v3817
        %v4062 = vunpack.c.l.b16 %v3818
        %v4063 = vunpack.c.h.b16 %v3818
        %v4064 = vunpack.c.l.b16 %v3819
        %v4065 = vunpack.c.l.b16 %v3820
        %v4066 = vunpack.c.h.b16 %v3820
        %v4067 = vunpack.c.l.b16 %v3821
        %v4068 = vunpack.c.l.b16 %v3822
        %v4069 = vunpack.c.h.b16 %v3822
        %v4070 = vunpack.c.l.b16 %v3823
        %v4071 = vunpack.c.l.b16 %v3824
        %v4072 = vunpack.c.h.b16 %v3824
        %v4073 = vunpack.c.l.b16 %v3825
        %v4074 = vunpack.c.l.b16 %v3826
        %v4075 = vunpack.c.h.b16 %v3826
        %v4076 = vunpack.c.l.b16 %v3827
        %v4077 = vunpack.c.l.b16 %v3828
        %v4078 = vunpack.c.h.b16 %v3828
        %v4079 = vunpack.c.l.b16 %v3829
        %v4080 = vunpack.c.l.b16 %v3830
        %v4081 = vunpack.c.h.b16 %v3830
        %v4082 = vunpack.c.l.b16 %v3831
        %v4083 = vunpack.c.l.b16 %v3832
        %v4084 = vunpack.c.h.b16 %v3832
        %v4085 = vunpack.c.l.b16 %v3833
        %v4086 = vunpack.c.l.b16 %v3834
        %v4087 = vunpack.c.h.b16 %v3834
        %v4088 = vunpack.c.l.b16 %v3835
        %v4089 = vunpack.c.l.b16 %v3836
        %v4090 = vunpack.c.h.b16 %v3836
        %v4091 = vunpack.c.l.b16 %v3837
        %v4092 = vunpack.c.l.b16 %v3838
        %v4093 = vunpack.c.h.b16 %v3838
        %v4094 = vunpack.c.l.b16 %v3839
        %v4095 = vunpack.c.l.b16 %v3840
        %v4096 = vunpack.c.h.b16 %v3840
        %v4097 = vunpack.c.l.b16 %v3841
        %v4098 = vunpack.c.l.b16 %v3842
        %v4099 = vunpack.c.h.b16 %v3842
        %v4100 = vunpack.c.l.b16 %v3843
        %v4101 = vpack.c.b16 %v3960, %v3957
        %v4102 = vpack.c.b16 %v3961, %v3958
        %v4103 = vpack.c.b16 %v3962, %v3959
        %v4104 = vpack.c.b16 %v3966, %v3963
        %v4105 = vpack.c.b16 %v3967, %v3964
        %v4106 = vpack.c.b16 %v3968, %v3965
        %v4107 = vpack.c.b16 %v3972, %v3969
        %v4108 = vpack.c.b16 %v3973, %v3970
        %v4109 = vpack.c.b16 %v3974, %v3971
        %v4110 = vpack.c.b16 %v3978, %v3975
        %v4111 = vpack.c.b16 %v3979, %v3976
        %v4112 = vpack.c.b16 %v3980, %v3977
        %v4113 = vpack.c.b16 %v3984, %v3981
        %v4114 = vpack.c.b16 %v3985, %v3982
        %v4115 = vpack.c.b16 %v3986, %v3983
        %v4116 = vpack.c.b16 %v3990, %v3987
        %v4117 = vpack.c.b16 %v3991, %v3988
        %v4118 = vpack.c.b16 %v3992, %v3989
        %v4119 = vpack.c.b16 %v3996, %v3993
        %v4120 = vpack.c.b16 %v3997, %v3994
        %v4121 = vpack.c.b16 %v3998, %v3995
        %v4122 = vpack.c.b16 %v4002, %v3999
        %v4123 = vpack.c.b16 %v4003, %v4000
        %v4124 = vpack.c.b16 %v4004, %v4001
        %v4125 = vpack.c.b16 %v4008, %v4005
        %v4126 = vpack.c.b16 %v4009, %v4006
        %v4127 = vpack.c.b16 %v4010, %v4007
        %v4128 = vpack.c.b16 %v4014, %v4011
        %v4129 = vpack.c.b16 %v4015, %v4012
        %v4130 = vpack.c.b16 %v4016, %v4013
        %v4131 = vpack.c.b16 %v4020, %v4017
        %v4132 = vpack.c.b16 %v4021, %v4018
        %v4133 = vpack.c.b16 %v4022, %v4019
        %v4134 = vpack.c.b16 %v4026, %v4023
        %v4135 = vpack.c.b16 %v4027, %v4024
        %v4136 = vpack.c.b16 %v4028, %v4025
        %v4137 = vpack.c.b16 %v4032, %v4029
        %v4138 = vpack.c.b16 %v4033, %v4030
        %v4139 = vpack.c.b16 %v4034, %v4031
        %v4140 = vpack.c.b16 %v4038, %v4035
        %v4141 = vpack.c.b16 %v4039, %v4036
        %v4142 = vpack.c.b16 %v4040, %v4037
        %v4143 = vpack.c.b16 %v4044, %v4041
        %v4144 = vpack.c.b16 %v4045, %v4042
        %v4145 = vpack.c.b16 %v4046, %v4043
        %v4146 = vpack.c.b16 %v4050, %v4047
        %v4147 = vpack.c.b16 %v4051, %v4048
        %v4148 = vpack.c.b16 %v4052, %v4049
        %v4149 = vpack.c.b16 %v4056, %v4053
        %v4150 = vpack.c.b16 %v4057, %v4054
        %v4151 = vpack.c.b16 %v4058, %v4055
        %v4152 = vpack.c.b16 %v4062, %v4059
        %v4153 = vpack.c.b16 %v4063, %v4060
        %v4154 = vpack.c.b16 %v4064, %v4061
        %v4155 = vpack.c.b16 %v4068, %v4065
        %v4156 = vpack.c.b16 %v4069, %v4066
        %v4157 = vpack.c.b16 %v4070, %v4067
        %v4158 = vpack.c.b16 %v4074, %v4071
        %v4159 = vpack.c.b16 %v4075, %v4072
        %v4160 = vpack.c.b16 %v4076, %v4073
        %v4161 = vpack.c.b16 %v4080, %v4077
        %v4162 = vpack.c.b16 %v4081, %v4078
        %v4163 = vpack.c.b16 %v4082, %v4079
        %v4164 = vpack.c.b16 %v4086, %v4083
        %v4165 = vpack.c.b16 %v4087, %v4084
        %v4166 = vpack.c.b16 %v4088, %v4085
        %v4167 = vpack.c.b16 %v4092, %v4089
        %v4168 = vpack.c.b16 %v4093, %v4090
        %v4169 = vpack.c.b16 %v4094, %v4091
        %v4170 = vpack.c.b16 %v4098, %v4095
        %v4171 = vpack.c.b16 %v4099, %v4096
        %v4172 = vpack.c.b16 %v4100, %v4097
        %4245 = vmatprep.subr.bf16.mxu0 %v4102
        %4246 = vmatpush1.bf16.msra.mxu0 %v4101
        %4247 = vmatprep.subr.bf16.mxu0 %v4105
        %4248 = vmatpush1.bf16.msra.mxu0 %v4104
        %4249 = vmatprep.subr.bf16.mxu0 %v4108
        %4250 = vmatpush1.bf16.msra.mxu0 %v4107
        %4251 = vmatprep.subr.bf16.mxu0 %v4111
        %4252 = vmatpush1.bf16.msra.mxu0 %v4110
        %4253 = vmatprep.subr.bf16.mxu0 %v4114
        %4254 = vmatpush1.bf16.msra.mxu0 %v4113
        %4255 = vmatprep.subr.bf16.mxu0 %v4117
        %4256 = vmatpush1.bf16.msra.mxu0 %v4116
        %4257 = vmatprep.subr.bf16.mxu0 %v4120
        %4258 = vmatpush1.bf16.msra.mxu0 %v4119
        %4259 = vmatprep.subr.bf16.mxu0 %v4123
        %4260 = vmatpush1.bf16.msra.mxu0 %v4122
        %4261 = vmatprep.subr.bf16.mxu0 %v4126
        %4262 = vmatpush1.bf16.msra.mxu0 %v4125
        %4263 = vmatprep.subr.bf16.mxu0 %v4129
        %4264 = vmatpush1.bf16.msra.mxu0 %v4128
        %4265 = vmatprep.subr.bf16.mxu0 %v4132
        %4266 = vmatpush1.bf16.msra.mxu0 %v4131
        %4267 = vmatprep.subr.bf16.mxu0 %v4135
        %4268 = vmatpush1.bf16.msra.mxu0 %v4134
        %4269 = vmatprep.subr.bf16.mxu0 %v4138
        %4270 = vmatpush1.bf16.msra.mxu0 %v4137
        %4271 = vmatprep.subr.bf16.mxu0 %v4141
        %4272 = vmatpush1.bf16.msra.mxu0 %v4140
        %4273 = vmatprep.subr.bf16.mxu0 %v4144
        %4274 = vmatpush1.bf16.msra.mxu0 %v4143
        %4275 = vmatprep.subr.bf16.mxu0 %v4147
        %4276 = vmatpush1.bf16.msra.mxu0 %v4146
        %4277 = vmatprep.mubr.bf16.mxu0 %v2959
        %4278 = vmatmul.mubr.bf16.gmra.mrb[0].mxu0 %v2955
        %v4279 = vpop.f32.mrb[0].mxu0
        %v4280 = vadd.f32 %v3849, %v4279
        %v4281 = vpop.f32.mrb[0].mxu0
        %v4282 = vadd.f32 %v3853, %v4281
        %v4283 = vpop.f32.mrb[0].mxu0
        %v4284 = vadd.f32 %v3849, %v4283
        %v4285 = vpop.f32.mrb[0].mxu0
        %v4286 = vadd.f32 %v3853, %v4285
        %4287 = vmatprep.mubr.bf16.mxu0 %v3742
        %4288 = vmatmul.mubr.bf16.gmra.mrb[0].mxu0 %v3738
        %v4289 = vpop.f32.mrb[0].mxu0
        %v4290 = vadd.f32 %v3849, %v4289
        %v4291 = vpop.f32.mrb[0].mxu0
        %v4292 = vadd.f32 %v3853, %v4291
        %v4293 = vpop.f32.mrb[0].mxu0
        %v4294 = vadd.f32 %v3849, %v4293
        %v4295 = vpop.f32.mrb[0].mxu0
        %v4296 = vadd.f32 %v3853, %v4295
        %4297 = vdwg.mxu0
        %4298 = vmatprep.subr.bf16.mxu0 %v4150
        %4299 = vmatpush1.bf16.msra.mxu0 %v4149
        %4300 = vmatprep.subr.bf16.mxu0 %v4153
        %4301 = vmatpush1.bf16.msra.mxu0 %v4152
        %4302 = vmatprep.subr.bf16.mxu0 %v4156
        %4303 = vmatpush1.bf16.msra.mxu0 %v4155
        %4304 = vmatprep.subr.bf16.mxu0 %v4159
        %4305 = vmatpush1.bf16.msra.mxu0 %v4158
        %4306 = vmatprep.subr.bf16.mxu0 %v4162
        %4307 = vmatpush1.bf16.msra.mxu0 %v4161
        %4308 = vmatprep.subr.bf16.mxu0 %v4165
        %4309 = vmatpush1.bf16.msra.mxu0 %v4164
        %4310 = vmatprep.subr.bf16.mxu0 %v4168
        %4311 = vmatpush1.bf16.msra.mxu0 %v4167
        %4312 = vmatprep.subr.bf16.mxu0 %v4171
        %4313 = vmatpush1.bf16.msra.mxu0 %v4170
        %4314 = vmatprep.subr.bf16.mxu0 0
        %4315 = vmatpush1.bf16.msra.mxu0 0
        %4316 = vmatprep.subr.bf16.mxu0 0
        %4317 = vmatpush1.bf16.msra.mxu0 0
        %4318 = vmatprep.subr.bf16.mxu0 0
        %4319 = vmatpush1.bf16.msra.mxu0 0
        %4320 = vmatprep.subr.bf16.mxu0 0
        %4321 = vmatpush1.bf16.msra.mxu0 0
        %4322 = vmatprep.subr.bf16.mxu0 0
        %4323 = vmatpush1.bf16.msra.mxu0 0
        %4324 = vmatprep.subr.bf16.mxu0 0
        %4325 = vmatpush1.bf16.msra.mxu0 0
        %4326 = vmatprep.subr.bf16.mxu0 0
        %4327 = vmatpush1.bf16.msra.mxu0 0
        %4328 = vmatprep.subr.bf16.mxu0 0
        %4329 = vmatpush1.bf16.msra.mxu0 0
        %4330 = vmatprep.mubr.bf16.mxu0 0
        %4331 = vmatmul.mubr.bf16.gmra.mrb[0].mxu0 %v2963
        %v4332 = vpop.f32.mrb[0].mxu0
        %v4333 = vadd.f32 %v4280, %v4332
        %v4334 = vpop.f32.mrb[0].mxu0
        %v4335 = vadd.f32 %v4282, %v4334
        %v4336 = vpop.f32.mrb[0].mxu0
        %v4337 = vadd.f32 %v4284, %v4336
        %v4338 = vpop.f32.mrb[0].mxu0
        %v4339 = vadd.f32 %v4286, %v4338
        %4340 = vmatprep.mubr.bf16.mxu0 0
        %4341 = vmatmul.mubr.bf16.gmra.mrb[0].mxu0 %v3746
        %v4342 = vpop.f32.mrb[0].mxu0
        %v4343 = vadd.f32 %v4290, %v4342
        %v4344 = vpop.f32.mrb[0].mxu0
        %v4345 = vadd.f32 %v4292, %v4344
        %v4346 = vpop.f32.mrb[0].mxu0
        %v4347 = vadd.f32 %v4294, %v4346
        %v4348 = vpop.f32.mrb[0].mxu0
        %v4349 = vadd.f32 %v4296, %v4348
        %4350 = vdwg.mxu0
        %4351 = vmatprep.subr.bf16.mxu0 0
        %4352 = vmatpush1.bf16.msra.mxu0 %v4103
        %4353 = vmatprep.subr.bf16.mxu0 0
        %4354 = vmatpush1.bf16.msra.mxu0 %v4106
        %4355 = vmatprep.subr.bf16.mxu0 0
        %4356 = vmatpush1.bf16.msra.mxu0 %v4109
        %4357 = vmatprep.subr.bf16.mxu0 0
        %4358 = vmatpush1.bf16.msra.mxu0 %v4112
        %4359 = vmatprep.subr.bf16.mxu0 0
        %4360 = vmatpush1.bf16.msra.mxu0 %v4115
        %4361 = vmatprep.subr.bf16.mxu0 0
        %4362 = vmatpush1.bf16.msra.mxu0 %v4118
        %4363 = vmatprep.subr.bf16.mxu0 0
        %4364 = vmatpush1.bf16.msra.mxu0 %v4121
        %4365 = vmatprep.subr.bf16.mxu0 0
        %4366 = vmatpush1.bf16.msra.mxu0 %v4124
        %4367 = vmatprep.subr.bf16.mxu0 0
        %4368 = vmatpush1.bf16.msra.mxu0 %v4127
        %4369 = vmatprep.subr.bf16.mxu0 0
        %4370 = vmatpush1.bf16.msra.mxu0 %v4130
        %4371 = vmatprep.subr.bf16.mxu0 0
        %4372 = vmatpush1.bf16.msra.mxu0 %v4133
        %4373 = vmatprep.subr.bf16.mxu0 0
        %4374 = vmatpush1.bf16.msra.mxu0 %v4136
        %4375 = vmatprep.subr.bf16.mxu0 0
        %4376 = vmatpush1.bf16.msra.mxu0 %v4139
        %4377 = vmatprep.subr.bf16.mxu0 0
        %4378 = vmatpush1.bf16.msra.mxu0 %v4142
        %4379 = vmatprep.subr.bf16.mxu0 0
        %4380 = vmatpush1.bf16.msra.mxu0 %v4145
        %4381 = vmatprep.subr.bf16.mxu0 0
        %4382 = vmatpush1.bf16.msra.mxu0 %v4148
        %4383 = vmatprep.mubr.bf16.mxu0 %v2959
        %4384 = vmatmul.mubr.bf16.gmra.mrb[0].mxu0 %v2955
        %v4385 = vpop.f32.mrb[0].mxu0
        %v4386 = vadd.f32 %v3857, %v4385
        %v4387 = vpop.f32.mrb[0].mxu0
        %v4388 = vpop.f32.mrb[0].mxu0
        %v4389 = vadd.f32 %v3857, %v4388
        %v4390 = vpop.f32.mrb[0].mxu0
        %4391 = vmatprep.mubr.bf16.mxu0 %v3742
        %4392 = vmatmul.mubr.bf16.gmra.mrb[0].mxu0 %v3738
        %v4393 = vpop.f32.mrb[0].mxu0
        %v4394 = vadd.f32 %v3857, %v4393
        %v4395 = vpop.f32.mrb[0].mxu0
        %v4396 = vpop.f32.mrb[0].mxu0
        %v4397 = vadd.f32 %v3857, %v4396
        %v4398 = vpop.f32.mrb[0].mxu0
        %4399 = vdwg.mxu0
        %4400 = vmatprep.subr.bf16.mxu0 0
        %4401 = vmatpush1.bf16.msra.mxu0 %v4151
        %4402 = vmatprep.subr.bf16.mxu0 0
        %4403 = vmatpush1.bf16.msra.mxu0 %v4154
        %4404 = vmatprep.subr.bf16.mxu0 0
        %4405 = vmatpush1.bf16.msra.mxu0 %v4157
        %4406 = vmatprep.subr.bf16.mxu0 0
        %4407 = vmatpush1.bf16.msra.mxu0 %v4160
        %4408 = vmatprep.subr.bf16.mxu0 0
        %4409 = vmatpush1.bf16.msra.mxu0 %v4163
        %4410 = vmatprep.subr.bf16.mxu0 0
        %4411 = vmatpush1.bf16.msra.mxu0 %v4166
        %4412 = vmatprep.subr.bf16.mxu0 0
        %4413 = vmatpush1.bf16.msra.mxu0 %v4169
        %4414 = vmatprep.subr.bf16.mxu0 0
        %4415 = vmatpush1.bf16.msra.mxu0 %v4172
        %4416 = vmatprep.subr.bf16.mxu0 0
        %4417 = vmatpush1.bf16.msra.mxu0 0
        %4418 = vmatprep.subr.bf16.mxu0 0
        %4419 = vmatpush1.bf16.msra.mxu0 0
        %4420 = vmatprep.subr.bf16.mxu0 0
        %4421 = vmatpush1.bf16.msra.mxu0 0
        %4422 = vmatprep.subr.bf16.mxu0 0
        %4423 = vmatpush1.bf16.msra.mxu0 0
        %4424 = vmatprep.subr.bf16.mxu0 0
        %4425 = vmatpush1.bf16.msra.mxu0 0
        %4426 = vmatprep.subr.bf16.mxu0 0
        %4427 = vmatpush1.bf16.msra.mxu0 0
        %4428 = vmatprep.subr.bf16.mxu0 0
        %4429 = vmatpush1.bf16.msra.mxu0 0
        %4430 = vmatprep.subr.bf16.mxu0 0
        %4431 = vmatpush1.bf16.msra.mxu0 0
        %4432 = vmatprep.mubr.bf16.mxu0 0
        %4433 = vmatmul.mubr.bf16.gmra.mrb[0].mxu0 %v2963
        %v4434 = vpop.f32.mrb[0].mxu0
        %v4435 = vadd.f32 %v4386, %v4434
        %v4436 = vpop.f32.mrb[0].mxu0
        %v4437 = vpop.f32.mrb[0].mxu0
        %v4438 = vadd.f32 %v4389, %v4437
        %v4439 = vpop.f32.mrb[0].mxu0
        %4440 = vmatprep.mubr.bf16.mxu0 0
        %4441 = vmatmul.mubr.bf16.gmra.mrb[0].mxu0 %v3746
        %v4442 = vpop.f32.mrb[0].mxu0
        %v4443 = vadd.f32 %v4394, %v4442
        %v4444 = vpop.f32.mrb[0].mxu0
        %v4445 = vpop.f32.mrb[0].mxu0
        %v4446 = vadd.f32 %v4397, %v4445
        %v4447 = vpop.f32.mrb[0].mxu0
        %4448 = vdwg.mxu0
        %4449 = vst [vmem:[%s245] sm:$0xff] %v4333
        %4450 = vst [vmem:[%s245 + $0x8] sm:$0xff] %v4335
        %4451 = vst [vmem:[%s245 + $0x10] sm:$0xff] %v4435
        %4452 = vst [vmem:[%s245 + $0x18] sm:$0xff] %v4337
        %4453 = vst [vmem:[%s245 + $0x20] sm:$0xff] %v4339
        %4454 = vst [vmem:[%s245 + $0x28] sm:$0xff] %v4438
        %4455 = vst [vmem:[%s245 + $0x30] sm:$0xff] %v4343
        %4456 = vst [vmem:[%s245 + $0x38] sm:$0xff] %v4345
        %4457 = vst [vmem:[%s245 + $0x40] sm:$0xff] %v4443
        %4458 = vst [vmem:[%s245 + $0x48] sm:$0xff] %v4347
        %4459 = vst [vmem:[%s245 + $0x50] sm:$0xff] %v4349
        %4460 = vst [vmem:[%s245 + $0x58] sm:$0xff] %v4446
        %s4461 = sand.u32 %s119, 1
        %s4462 = scalar_lea.sflag [#allocation4], %s4461
        %s4463 = sand.u32 %s119, 1
        %s4464 = smul.addr %s4463, 96
        %s4465 = scalar_lea.vmem [#allocation8], %s4464
        // Predicated region
        $region49: #{tpu_custom_call.1} parent=35 // pred_check
          %p4466 = pneg %p129
        $region50: #{tpu_custom_call.1} parent=35 // pred_check_branch
          %4468 = sbr.rel (%p4466) target = $region52
        $region51: #{tpu_custom_call.1} parent=35 // pred_region
          %s4469 = smul.u32 2, %s22
          %s4471 = ssub.s32 1536, 1536
          %4472 = vsyncadd %s4462, %s4471
          %s4473 = smul.addr %s4469, 6
          %s4474 = smul.addr %s4473, 128
          %s4475 = scalar_lea.hbm %s4, %s4474
          %s4476 = sshll.u32 %s4465, 4
          %s4477 = int_to_ptr.vmem [resolvable:$true] %s4476
          %4482 = dma.vmem_to_hbm [thread:$0]  %s4477, 1536, %s4475, %s4462, 384, 384, 24
        $region52: #{tpu_custom_call.1} parent=35 // pred_fallthru
          _
      $region36: #{tpu_custom_call.1} parent=5 // pred_fallthru
        _
      %p4483 = scmp.le.s32.totalorder 2, %s17
      // Predicated region
      $region53: #{tpu_custom_call.1} parent=5 // pred_check
        %p4484 = pneg %p4483
      $region54: #{tpu_custom_call.1} parent=5 // pred_check_branch
        %4486 = sbr.rel (%p4484) target = $region56
      $region55: #{tpu_custom_call.1} parent=5 // pred_region
        %s4487 = ssub.s32 %s17, 2
        // Predicated region
        $region57: #{tpu_custom_call.1} parent=55 // pred_check
          %p4488 = pneg %p135
        $region58: #{tpu_custom_call.1} parent=55 // pred_check_branch
          %4490 = sbr.rel (%p4488) target = $region60
        $region59: #{tpu_custom_call.1} parent=55 // pred_region
          %s4491 = sand.u32 %s120, 1
          %s4492 = scalar_lea.sflag [#allocation4], %s4491
          %s4493 = sand.u32 %s120, 1
          %s4494 = smul.addr %s4493, 96
          %s4495 = scalar_lea.vmem [#allocation8], %s4494
          %4496 = dma.done %s4492, 1536
        $region60: #{tpu_custom_call.1} parent=55 // pred_fallthru
          _
      $region56: #{tpu_custom_call.1} parent=5 // pred_fallthru
        _
    $region6: #{tpu_custom_call.1} parent=1 // loop_footer
      %s21 = sadd.s32 1, %s17
    $region7: #{tpu_custom_call.1} parent=1 // loop_footer_branch
      %16 = sbr.rel target = $region3
    $region8: #{tpu_custom_call.1} parent=1 // loop_exit
      _
    %4497 = vsyncpa [#allocation3], 1
    %s4498 = scalar_lea.sflag [#allocation3], 1
    %4499 = vsyncpa %s4498, 1
    %4500 = vsyncpa [#allocation6], 1
    %4501 = vsyncpa [#allocation4], 1
    %s4502 = scalar_lea.sflag [#allocation4], 1
    %4503 = vsyncpa %s4502, 1

</llo_original>
